<compile_context>
chip_gen: v7x
topology: tpu7x:2x2x1
jax: 0.10.0
libtpu: 0.0.40
codegen_flags: <defaults>
</compile_context>

<pallas_src>
import functools
import math

import jax
import jax.numpy as jnp
from jax import lax
from jax.experimental import pallas as pl
from jax.experimental.pallas import tpu as pltpu


def _self_attention_kernel(x_ref, wq_ref, wk_ref, wv_ref, wo_ref,
                           bq_ref, bk_ref, bv_ref, bo_ref, o_ref,
                           q_scr, k_scr, v_scr, attn_scr,
                           *, nheads, scale):
    bblk, S, E = x_ref.shape
    dh = E // nheads

    # Flatten batch into M so the projection matmuls run with M = bblk*S.
    x = x_ref[...].reshape(bblk * S, E).astype(jnp.bfloat16)

    # QKV projections: bf16 MXU operands, f32 accumulation.
    q = jnp.dot(x, wq_ref[...], preferred_element_type=jnp.float32) + bq_ref[...]
    k = jnp.dot(x, wk_ref[...], preferred_element_type=jnp.float32) + bk_ref[...]
    v = jnp.dot(x, wv_ref[...], preferred_element_type=jnp.float32) + bv_ref[...]

    # Stage q/k/v in bf16 VMEM scratch (bounds the live vreg set across the
    # unrolled head loop); fold the 1/sqrt(dh) scale into q once, here.
    q_scr[...] = (q * scale).astype(jnp.bfloat16).reshape(bblk, S, E)
    k_scr[...] = k.astype(jnp.bfloat16).reshape(bblk, S, E)
    v_scr[...] = v.astype(jnp.bfloat16).reshape(bblk, S, E)

    for h in range(nheads):                         # static unroll over heads
        lo = h * dh
        qh = q_scr[:, :, lo:lo + dh]                # (bblk, S, dh) bf16
        kh = k_scr[:, :, lo:lo + dh]
        vh = v_scr[:, :, lo:lo + dh]

        # s = q k^T without an explicit transpose: contract the last dims.
        s = lax.dot_general(qh, kh, (((2,), (2,)), ((0,), (0,))),
                            preferred_element_type=jnp.float32)   # (bblk,S,S)

        # Softmax in f32; normalization deferred to after the PV matmul.
        m = jnp.max(s, axis=-1, keepdims=True)
        p = jnp.exp(s - m)
        l = jnp.sum(p, axis=-1, keepdims=True)

        pv = lax.dot_general(p.astype(jnp.bfloat16), vh,
                             (((2,), (1,)), ((0,), (0,))),
                             preferred_element_type=jnp.float32)  # (bblk,S,dh)

        inv_l = pl.reciprocal(l, approx=True)       # EUP slot, ~free
        # Head concatenation via lane-offset stores into VMEM scratch.
        attn_scr[:, :, lo:lo + dh] = (pv * inv_l).astype(jnp.bfloat16)

    # Single output projection over all heads: K = E (full MXU depth).
    attn = attn_scr[...].reshape(bblk * S, E)
    out = jnp.dot(attn, wo_ref[...], preferred_element_type=jnp.float32)
    out = out + bo_ref[...]
    o_ref[...] = out.reshape(bblk, S, E).astype(o_ref.dtype)


def _pick_batch_block(B, S, E, itemsize):
    """v7x has 2 TensorCores -> keep >= 2 parallel grid steps; single-TC
    v5e/v6e fold the whole batch into one step (M = B*S projections)."""
    try:
        kind = jax.devices()[0].device_kind.lower()
    except Exception:
        kind = ""
    want = max(1, B // 2) if "v7" in kind else B
    # Cap the per-step x block at ~4 MiB so grid pipelining stays cheap.
    cap = max(1, (4 << 20) // max(1, S * E * itemsize))
    want = max(1, min(want, cap, B))
    while B % want:
        want -= 1
    return want


def self_attention(x, wq, wk, wv, wo, bq, bk, bv, bo, *, nheads,
                   batch_block=None):
    """x: (B, S, E); w*: (E, E) stored as torch_weight.T; b*: (1, E)."""
    B, S, E = x.shape
    assert E % nheads == 0
    scale = 1.0 / math.sqrt(E // nheads)
    itemsize = jnp.dtype(x.dtype).itemsize

    if batch_block is None:
        batch_block = _pick_batch_block(B, S, E, itemsize)
    assert B % batch_block == 0
    grid = (B // batch_block,)

    # Resident weights in bf16 (single-pass MXU, half the VMEM residency);
    # biases stay f32 (added after f32 accumulation).
    wq, wk, wv, wo = (w.astype(jnp.bfloat16) for w in (wq, wk, wv, wo))
    bq, bk, bv, bo = (b.astype(jnp.float32) for b in (bq, bk, bv, bo))

    kernel = functools.partial(_self_attention_kernel, nheads=nheads,
                               scale=scale)

    x_spec = pl.BlockSpec((batch_block, S, E), lambda b: (b, 0, 0))
    w_spec = pl.BlockSpec((E, E), lambda b: (0, 0))     # VMEM-resident weights
    b_spec = pl.BlockSpec((1, E), lambda b: (0, 0))

    scratch = [pltpu.VMEM((batch_block, S, E), jnp.bfloat16) for _ in range(4)]

    # Size the scoped VMEM request from actual buffer needs (+ headroom)
    # instead of requesting the whole physical VMEM (64 MiB on v7x).
    weight_bytes = 4 * E * E * 2 + 4 * E * 4
    io_bytes = 2 * 2 * batch_block * S * E * itemsize   # x/out, double-buffered
    scratch_bytes = 4 * batch_block * S * E * 2
    vmem_limit = min(int(2 * (weight_bytes + io_bytes + scratch_bytes))
                     + (4 << 20), 32 * 1024 * 1024)

    return pl.pallas_call(
        kernel,
        out_shape=jax.ShapeDtypeStruct((B, S, E), x.dtype),
        grid=grid,
        in_specs=[x_spec,
                  w_spec, w_spec, w_spec, w_spec,
                  b_spec, b_spec, b_spec, b_spec],
        out_specs=pl.BlockSpec((batch_block, S, E), lambda b: (b, 0, 0)),
        scratch_shapes=scratch,
        compiler_params=pltpu.CompilerParams(
            dimension_semantics=("parallel",),
            vmem_limit_bytes=vmem_limit,
        ),
    )(x, wq, wk, wv, wo, bq, bk, bv, bo)


def init_params(key, nembed, dtype=jnp.float32):
    """Synthetic params; shapes correspond to torch in_proj/out_proj (transposed)."""
    ks = jax.random.split(key, 8)
    s = 1.0 / math.sqrt(nembed)
    wq = jax.random.normal(ks[0], (nembed, nembed), dtype) * s
    wk = jax.random.normal(ks[1], (nembed, nembed), dtype) * s
    wv = jax.random.normal(ks[2], (nembed, nembed), dtype) * s
    wo = jax.random.normal(ks[3], (nembed, nembed), dtype) * s
    bq = jax.random.normal(ks[4], (1, nembed), dtype) * 0.02
    bk = jax.random.normal(ks[5], (1, nembed), dtype) * 0.02
    bv = jax.random.normal(ks[6], (1, nembed), dtype) * 0.02
    bo = jax.random.normal(ks[7], (1, nembed), dtype) * 0.02
    return wq, wk, wv, wo, bq, bk, bv, bo


def reference(x, wq, wk, wv, wo, bq, bk, bv, bo, *, nheads):
    B, S, E = x.shape
    dh = E // nheads
    with jax.default_matmul_precision("float32"):
        q = (x @ wq + bq).reshape(B, S, nheads, dh).transpose(0, 2, 1, 3)
        k = (x @ wk + bk).reshape(B, S, nheads, dh).transpose(0, 2, 1, 3)
        v = (x @ wv + bv).reshape(B, S, nheads, dh).transpose(0, 2, 1, 3)
        s = jnp.einsum("bhqd,bhkd->bhqk", q, k) / math.sqrt(dh)
        p = jax.nn.softmax(s, axis=-1)
        o = jnp.einsum("bhqk,bhkd->bhqd", p, v)
        o = o.transpose(0, 2, 1, 3).reshape(B, S, E)
        return o @ wo + bo


if __name__ == "__main__":
    key = jax.random.PRNGKey(0)
    k_in, k_par = jax.random.split(key)

    batch, seq, nembed, nheads = 2, 128, 128, 4   # lane/MXU aligned
    x = jax.random.normal(k_in, (batch, seq, nembed), jnp.float32)
    params = init_params(k_par, nembed)

    out = self_attention(x, *params, nheads=nheads)
    out = jax.block_until_ready(out)

    ref = reference(x, *params, nheads=nheads)
    assert out.shape == (batch, seq, nembed)
    # bf16 matmul operands (f32 accumulation) vs. f32 reference -> looser tol.
    assert jnp.allclose(out, ref, atol=2e-2, rtol=2e-2), "mismatch vs JAX reference"

    print("KERNEL_OK")
</pallas_src>

<mosaic_0001>
module attributes {stable_mosaic.version = 11 : i64} {
  func.func @_self_attention_kernel(%arg0: i32, %arg1: memref<2x128x128xf32, #tpu.memory_space<vmem>>, %arg2: memref<128x128xbf16, #tpu.memory_space<vmem>>, %arg3: memref<128x128xbf16, #tpu.memory_space<vmem>>, %arg4: memref<128x128xbf16, #tpu.memory_space<vmem>>, %arg5: memref<128x128xbf16, #tpu.memory_space<vmem>>, %arg6: memref<1x128xf32, #tpu.memory_space<vmem>>, %arg7: memref<1x128xf32, #tpu.memory_space<vmem>>, %arg8: memref<1x128xf32, #tpu.memory_space<vmem>>, %arg9: memref<1x128xf32, #tpu.memory_space<vmem>>, %arg10: memref<2x128x128xf32, #tpu.memory_space<vmem>>, %arg11: memref<2x128x128xbf16, #tpu.memory_space<vmem>>, %arg12: memref<2x128x128xbf16, #tpu.memory_space<vmem>>, %arg13: memref<2x128x128xbf16, #tpu.memory_space<vmem>>, %arg14: memref<2x128x128xbf16, #tpu.memory_space<vmem>>) attributes {dimension_semantics = [#tpu.dimension_semantics<parallel>], iteration_bounds = array<i64: 1>, scalar_prefetch = 0 : i64, scratch_operands = 4 : i64, tpu.core_type = #tpu.core_type<tc>, window_params = [{transform_indices = @transform_0, window_bounds = array<i64: 2, 128, 128>}, {pipeline_mode = #tpu.pipeline_mode<synchronous>, transform_indices = @transform_1, window_bounds = array<i64: 128, 128>}, {pipeline_mode = #tpu.pipeline_mode<synchronous>, transform_indices = @transform_2, window_bounds = array<i64: 128, 128>}, {pipeline_mode = #tpu.pipeline_mode<synchronous>, transform_indices = @transform_3, window_bounds = array<i64: 128, 128>}, {pipeline_mode = #tpu.pipeline_mode<synchronous>, transform_indices = @transform_4, window_bounds = array<i64: 128, 128>}, {pipeline_mode = #tpu.pipeline_mode<synchronous>, transform_indices = @transform_5, window_bounds = array<i64: 1, 128>}, {pipeline_mode = #tpu.pipeline_mode<synchronous>, transform_indices = @transform_6, window_bounds = array<i64: 1, 128>}, {pipeline_mode = #tpu.pipeline_mode<synchronous>, transform_indices = @transform_7, window_bounds = array<i64: 1, 128>}, {pipeline_mode = #tpu.pipeline_mode<synchronous>, transform_indices = @transform_8, window_bounds = array<i64: 1, 128>}, {transform_indices = @transform_9, window_bounds = array<i64: 2, 128, 128>}]} {
    %c0 = arith.constant 0 : index
    %c0_0 = arith.constant 0 : index
    %c0_1 = arith.constant 0 : index
    %0 = vector.load %arg1[%c0, %c0_0, %c0_1] : memref<2x128x128xf32, #tpu.memory_space<vmem>>, vector<2x128x128xf32>
    %1 = vector.shape_cast %0 : vector<2x128x128xf32> to vector<256x128xf32>
    %2 = arith.truncf %1 : vector<256x128xf32> to vector<256x128xbf16>
    %c0_2 = arith.constant 0 : index
    %c0_3 = arith.constant 0 : index
    %3 = vector.load %arg2[%c0_2, %c0_3] : memref<128x128xbf16, #tpu.memory_space<vmem>>, vector<128x128xbf16>
    %cst = arith.constant dense<0.000000e+00> : vector<256x128xf32>
    %4 = tpu.matmul %2, %3, %cst {dimension_numbers = #tpu.dot_dimension_numbers<[1], [0], [0], [1], [0, 0, 1, 1], [], []>} : vector<256x128xbf16>, vector<128x128xbf16>, vector<256x128xf32> -> vector<256x128xf32>
    %c0_4 = arith.constant 0 : index
    %c0_5 = arith.constant 0 : index
    %5 = vector.load %arg6[%c0_4, %c0_5] : memref<1x128xf32, #tpu.memory_space<vmem>>, vector<1x128xf32>
    %6 = vector.broadcast %5 : vector<1x128xf32> to vector<256x128xf32>
    %7 = arith.addf %4, %6 : vector<256x128xf32>
    %c0_6 = arith.constant 0 : index
    %c0_7 = arith.constant 0 : index
    %8 = vector.load %arg3[%c0_6, %c0_7] : memref<128x128xbf16, #tpu.memory_space<vmem>>, vector<128x128xbf16>
    %cst_8 = arith.constant dense<0.000000e+00> : vector<256x128xf32>
    %9 = tpu.matmul %2, %8, %cst_8 {dimension_numbers = #tpu.dot_dimension_numbers<[1], [0], [0], [1], [0, 0, 1, 1], [], []>} : vector<256x128xbf16>, vector<128x128xbf16>, vector<256x128xf32> -> vector<256x128xf32>
    %c0_9 = arith.constant 0 : index
    %c0_10 = arith.constant 0 : index
    %10 = vector.load %arg7[%c0_9, %c0_10] : memref<1x128xf32, #tpu.memory_space<vmem>>, vector<1x128xf32>
    %11 = vector.broadcast %10 : vector<1x128xf32> to vector<256x128xf32>
    %12 = arith.addf %9, %11 : vector<256x128xf32>
    %c0_11 = arith.constant 0 : index
    %c0_12 = arith.constant 0 : index
    %13 = vector.load %arg4[%c0_11, %c0_12] : memref<128x128xbf16, #tpu.memory_space<vmem>>, vector<128x128xbf16>
    %cst_13 = arith.constant dense<0.000000e+00> : vector<256x128xf32>
    %14 = tpu.matmul %2, %13, %cst_13 {dimension_numbers = #tpu.dot_dimension_numbers<[1], [0], [0], [1], [0, 0, 1, 1], [], []>} : vector<256x128xbf16>, vector<128x128xbf16>, vector<256x128xf32> -> vector<256x128xf32>
    %c0_14 = arith.constant 0 : index
    %c0_15 = arith.constant 0 : index
    %15 = vector.load %arg8[%c0_14, %c0_15] : memref<1x128xf32, #tpu.memory_space<vmem>>, vector<1x128xf32>
    %16 = vector.broadcast %15 : vector<1x128xf32> to vector<256x128xf32>
    %17 = arith.addf %14, %16 : vector<256x128xf32>
    %cst_16 = arith.constant 0.176776692 : f32
    %18 = vector.broadcast %cst_16 : f32 to vector<256x128xf32>
    %19 = arith.mulf %7, %18 : vector<256x128xf32>
    %20 = arith.truncf %19 : vector<256x128xf32> to vector<256x128xbf16>
    %21 = vector.shape_cast %20 : vector<256x128xbf16> to vector<2x128x128xbf16>
    %c0_17 = arith.constant 0 : index
    %c0_18 = arith.constant 0 : index
    %c0_19 = arith.constant 0 : index
    %22 = vector.load %arg11[%c0_17, %c0_18, %c0_19] : memref<2x128x128xbf16, #tpu.memory_space<vmem>>, vector<2x128x128xbf16>
    tpu.vector_store %arg11[%c0_17, %c0_18, %c0_19], %21 {strides = array<i32>} : memref<2x128x128xbf16, #tpu.memory_space<vmem>>, vector<2x128x128xbf16>,
    %23 = arith.truncf %12 : vector<256x128xf32> to vector<256x128xbf16>
    %24 = vector.shape_cast %23 : vector<256x128xbf16> to vector<2x128x128xbf16>
    %c0_20 = arith.constant 0 : index
    %c0_21 = arith.constant 0 : index
    %c0_22 = arith.constant 0 : index
    %25 = vector.load %arg12[%c0_20, %c0_21, %c0_22] : memref<2x128x128xbf16, #tpu.memory_space<vmem>>, vector<2x128x128xbf16>
    tpu.vector_store %arg12[%c0_20, %c0_21, %c0_22], %24 {strides = array<i32>} : memref<2x128x128xbf16, #tpu.memory_space<vmem>>, vector<2x128x128xbf16>,
    %26 = arith.truncf %17 : vector<256x128xf32> to vector<256x128xbf16>
    %27 = vector.shape_cast %26 : vector<256x128xbf16> to vector<2x128x128xbf16>
    %c0_23 = arith.constant 0 : index
    %c0_24 = arith.constant 0 : index
    %c0_25 = arith.constant 0 : index
    %28 = vector.load %arg13[%c0_23, %c0_24, %c0_25] : memref<2x128x128xbf16, #tpu.memory_space<vmem>>, vector<2x128x128xbf16>
    tpu.vector_store %arg13[%c0_23, %c0_24, %c0_25], %27 {strides = array<i32>} : memref<2x128x128xbf16, #tpu.memory_space<vmem>>, vector<2x128x128xbf16>,
    %c0_26 = arith.constant 0 : index
    %c0_27 = arith.constant 0 : index
    %c0_28 = arith.constant 0 : index
    %29 = vector.load %arg11[%c0_26, %c0_27, %c0_28] : memref<2x128x128xbf16, #tpu.memory_space<vmem>>, vector<2x128x32xbf16>
    %c0_29 = arith.constant 0 : index
    %c0_30 = arith.constant 0 : index
    %c0_31 = arith.constant 0 : index
    %30 = vector.load %arg12[%c0_29, %c0_30, %c0_31] : memref<2x128x128xbf16, #tpu.memory_space<vmem>>, vector<2x128x32xbf16>
    %c0_32 = arith.constant 0 : index
    %c0_33 = arith.constant 0 : index
    %c0_34 = arith.constant 0 : index
    %31 = vector.load %arg13[%c0_32, %c0_33, %c0_34] : memref<2x128x128xbf16, #tpu.memory_space<vmem>>, vector<2x128x32xbf16>
    %cst_35 = arith.constant dense<0.000000e+00> : vector<2x128x128xf32>
    %32 = tpu.matmul %29, %30, %cst_35 {dimension_numbers = #tpu.dot_dimension_numbers<[2], [2], [1], [1], [0, 0, 0, 1, 1, 1], [0], [0]>} : vector<2x128x32xbf16>, vector<2x128x32xbf16>, vector<2x128x128xf32> -> vector<2x128x128xf32>
    %cst_36 = arith.constant dense<0xFF800000> : vector<2x128xf32>
    %33 = vector.multi_reduction <maximumf>, %32, %cst_36 [2] : vector<2x128x128xf32> to vector<2x128xf32>
    %34 = vector.shape_cast %33 : vector<2x128xf32> to vector<2x128x1xf32>
    %35 = vector.broadcast %34 : vector<2x128x1xf32> to vector<2x128x128xf32>
    %36 = arith.subf %32, %35 : vector<2x128x128xf32>
    %37 = math.exp %36 : vector<2x128x128xf32>
    %cst_37 = arith.constant dense<0.000000e+00> : vector<2x128xf32>
    %38 = vector.multi_reduction <add>, %37, %cst_37 [2] : vector<2x128x128xf32> to vector<2x128xf32>
    %39 = vector.shape_cast %38 : vector<2x128xf32> to vector<2x128x1xf32>
    %40 = arith.truncf %37 : vector<2x128x128xf32> to vector<2x128x128xbf16>
    %cst_38 = arith.constant dense<0.000000e+00> : vector<2x128x32xf32>
    %41 = tpu.matmul %40, %31, %cst_38 {dimension_numbers = #tpu.dot_dimension_numbers<[2], [1], [1], [2], [0, 0, 0, 1, 1, 2], [0], [0]>} : vector<2x128x128xbf16>, vector<2x128x32xbf16>, vector<2x128x32xf32> -> vector<2x128x32xf32>
    %42 = tpu.reciprocal %39 {approx = true} : vector<2x128x1xf32> -> vector<2x128x1xf32>
    %43 = vector.broadcast %42 : vector<2x128x1xf32> to vector<2x128x32xf32>
    %44 = arith.mulf %41, %43 : vector<2x128x32xf32>
    %45 = arith.truncf %44 : vector<2x128x32xf32> to vector<2x128x32xbf16>
    %c0_39 = arith.constant 0 : index
    %c0_40 = arith.constant 0 : index
    %c0_41 = arith.constant 0 : index
    %46 = vector.load %arg14[%c0_39, %c0_40, %c0_41] : memref<2x128x128xbf16, #tpu.memory_space<vmem>>, vector<2x128x32xbf16>
    tpu.vector_store %arg14[%c0_39, %c0_40, %c0_41], %45 {strides = array<i32>} : memref<2x128x128xbf16, #tpu.memory_space<vmem>>, vector<2x128x32xbf16>,
    %c0_42 = arith.constant 0 : index
    %c0_43 = arith.constant 0 : index
    %c32 = arith.constant 32 : index
    %47 = vector.load %arg11[%c0_42, %c0_43, %c32] : memref<2x128x128xbf16, #tpu.memory_space<vmem>>, vector<2x128x32xbf16>
    %c0_44 = arith.constant 0 : index
    %c0_45 = arith.constant 0 : index
    %c32_46 = arith.constant 32 : index
    %48 = vector.load %arg12[%c0_44, %c0_45, %c32_46] : memref<2x128x128xbf16, #tpu.memory_space<vmem>>, vector<2x128x32xbf16>
    %c0_47 = arith.constant 0 : index
    %c0_48 = arith.constant 0 : index
    %c32_49 = arith.constant 32 : index
    %49 = vector.load %arg13[%c0_47, %c0_48, %c32_49] : memref<2x128x128xbf16, #tpu.memory_space<vmem>>, vector<2x128x32xbf16>
    %cst_50 = arith.constant dense<0.000000e+00> : vector<2x128x128xf32>
    %50 = tpu.matmul %47, %48, %cst_50 {dimension_numbers = #tpu.dot_dimension_numbers<[2], [2], [1], [1], [0, 0, 0, 1, 1, 1], [0], [0]>} : vector<2x128x32xbf16>, vector<2x128x32xbf16>, vector<2x128x128xf32> -> vector<2x128x128xf32>
    %cst_51 = arith.constant dense<0xFF800000> : vector<2x128xf32>
    %51 = vector.multi_reduction <maximumf>, %50, %cst_51 [2] : vector<2x128x128xf32> to vector<2x128xf32>
    %52 = vector.shape_cast %51 : vector<2x128xf32> to vector<2x128x1xf32>
    %53 = vector.broadcast %52 : vector<2x128x1xf32> to vector<2x128x128xf32>
    %54 = arith.subf %50, %53 : vector<2x128x128xf32>
    %55 = math.exp %54 : vector<2x128x128xf32>
    %cst_52 = arith.constant dense<0.000000e+00> : vector<2x128xf32>
    %56 = vector.multi_reduction <add>, %55, %cst_52 [2] : vector<2x128x128xf32> to vector<2x128xf32>
    %57 = vector.shape_cast %56 : vector<2x128xf32> to vector<2x128x1xf32>
    %58 = arith.truncf %55 : vector<2x128x128xf32> to vector<2x128x128xbf16>
    %cst_53 = arith.constant dense<0.000000e+00> : vector<2x128x32xf32>
    %59 = tpu.matmul %58, %49, %cst_53 {dimension_numbers = #tpu.dot_dimension_numbers<[2], [1], [1], [2], [0, 0, 0, 1, 1, 2], [0], [0]>} : vector<2x128x128xbf16>, vector<2x128x32xbf16>, vector<2x128x32xf32> -> vector<2x128x32xf32>
    %60 = tpu.reciprocal %57 {approx = true} : vector<2x128x1xf32> -> vector<2x128x1xf32>
    %61 = vector.broadcast %60 : vector<2x128x1xf32> to vector<2x128x32xf32>
    %62 = arith.mulf %59, %61 : vector<2x128x32xf32>
    %63 = arith.truncf %62 : vector<2x128x32xf32> to vector<2x128x32xbf16>
    %c0_54 = arith.constant 0 : index
    %c0_55 = arith.constant 0 : index
    %c32_56 = arith.constant 32 : index
    %64 = vector.load %arg14[%c0_54, %c0_55, %c32_56] : memref<2x128x128xbf16, #tpu.memory_space<vmem>>, vector<2x128x32xbf16>
    tpu.vector_store %arg14[%c0_54, %c0_55, %c32_56], %63 {strides = array<i32>} : memref<2x128x128xbf16, #tpu.memory_space<vmem>>, vector<2x128x32xbf16>,
    %c0_57 = arith.constant 0 : index
    %c0_58 = arith.constant 0 : index
    %c64 = arith.constant 64 : index
    %65 = vector.load %arg11[%c0_57, %c0_58, %c64] : memref<2x128x128xbf16, #tpu.memory_space<vmem>>, vector<2x128x32xbf16>
    %c0_59 = arith.constant 0 : index
    %c0_60 = arith.constant 0 : index
    %c64_61 = arith.constant 64 : index
    %66 = vector.load %arg12[%c0_59, %c0_60, %c64_61] : memref<2x128x128xbf16, #tpu.memory_space<vmem>>, vector<2x128x32xbf16>
    %c0_62 = arith.constant 0 : index
    %c0_63 = arith.constant 0 : index
    %c64_64 = arith.constant 64 : index
    %67 = vector.load %arg13[%c0_62, %c0_63, %c64_64] : memref<2x128x128xbf16, #tpu.memory_space<vmem>>, vector<2x128x32xbf16>
    %cst_65 = arith.constant dense<0.000000e+00> : vector<2x128x128xf32>
    %68 = tpu.matmul %65, %66, %cst_65 {dimension_numbers = #tpu.dot_dimension_numbers<[2], [2], [1], [1], [0, 0, 0, 1, 1, 1], [0], [0]>} : vector<2x128x32xbf16>, vector<2x128x32xbf16>, vector<2x128x128xf32> -> vector<2x128x128xf32>
    %cst_66 = arith.constant dense<0xFF800000> : vector<2x128xf32>
    %69 = vector.multi_reduction <maximumf>, %68, %cst_66 [2] : vector<2x128x128xf32> to vector<2x128xf32>
    %70 = vector.shape_cast %69 : vector<2x128xf32> to vector<2x128x1xf32>
    %71 = vector.broadcast %70 : vector<2x128x1xf32> to vector<2x128x128xf32>
    %72 = arith.subf %68, %71 : vector<2x128x128xf32>
    %73 = math.exp %72 : vector<2x128x128xf32>
    %cst_67 = arith.constant dense<0.000000e+00> : vector<2x128xf32>
    %74 = vector.multi_reduction <add>, %73, %cst_67 [2] : vector<2x128x128xf32> to vector<2x128xf32>
    %75 = vector.shape_cast %74 : vector<2x128xf32> to vector<2x128x1xf32>
    %76 = arith.truncf %73 : vector<2x128x128xf32> to vector<2x128x128xbf16>
    %cst_68 = arith.constant dense<0.000000e+00> : vector<2x128x32xf32>
    %77 = tpu.matmul %76, %67, %cst_68 {dimension_numbers = #tpu.dot_dimension_numbers<[2], [1], [1], [2], [0, 0, 0, 1, 1, 2], [0], [0]>} : vector<2x128x128xbf16>, vector<2x128x32xbf16>, vector<2x128x32xf32> -> vector<2x128x32xf32>
    %78 = tpu.reciprocal %75 {approx = true} : vector<2x128x1xf32> -> vector<2x128x1xf32>
    %79 = vector.broadcast %78 : vector<2x128x1xf32> to vector<2x128x32xf32>
    %80 = arith.mulf %77, %79 : vector<2x128x32xf32>
    %81 = arith.truncf %80 : vector<2x128x32xf32> to vector<2x128x32xbf16>
    %c0_69 = arith.constant 0 : index
    %c0_70 = arith.constant 0 : index
    %c64_71 = arith.constant 64 : index
    %82 = vector.load %arg14[%c0_69, %c0_70, %c64_71] : memref<2x128x128xbf16, #tpu.memory_space<vmem>>, vector<2x128x32xbf16>
    tpu.vector_store %arg14[%c0_69, %c0_70, %c64_71], %81 {strides = array<i32>} : memref<2x128x128xbf16, #tpu.memory_space<vmem>>, vector<2x128x32xbf16>,
    %c0_72 = arith.constant 0 : index
    %c0_73 = arith.constant 0 : index
    %c96 = arith.constant 96 : index
    %83 = vector.load %arg11[%c0_72, %c0_73, %c96] : memref<2x128x128xbf16, #tpu.memory_space<vmem>>, vector<2x128x32xbf16>
    %c0_74 = arith.constant 0 : index
    %c0_75 = arith.constant 0 : index
    %c96_76 = arith.constant 96 : index
    %84 = vector.load %arg12[%c0_74, %c0_75, %c96_76] : memref<2x128x128xbf16, #tpu.memory_space<vmem>>, vector<2x128x32xbf16>
    %c0_77 = arith.constant 0 : index
    %c0_78 = arith.constant 0 : index
    %c96_79 = arith.constant 96 : index
    %85 = vector.load %arg13[%c0_77, %c0_78, %c96_79] : memref<2x128x128xbf16, #tpu.memory_space<vmem>>, vector<2x128x32xbf16>
    %cst_80 = arith.constant dense<0.000000e+00> : vector<2x128x128xf32>
    %86 = tpu.matmul %83, %84, %cst_80 {dimension_numbers = #tpu.dot_dimension_numbers<[2], [2], [1], [1], [0, 0, 0, 1, 1, 1], [0], [0]>} : vector<2x128x32xbf16>, vector<2x128x32xbf16>, vector<2x128x128xf32> -> vector<2x128x128xf32>
    %cst_81 = arith.constant dense<0xFF800000> : vector<2x128xf32>
    %87 = vector.multi_reduction <maximumf>, %86, %cst_81 [2] : vector<2x128x128xf32> to vector<2x128xf32>
    %88 = vector.shape_cast %87 : vector<2x128xf32> to vector<2x128x1xf32>
    %89 = vector.broadcast %88 : vector<2x128x1xf32> to vector<2x128x128xf32>
    %90 = arith.subf %86, %89 : vector<2x128x128xf32>
    %91 = math.exp %90 : vector<2x128x128xf32>
    %cst_82 = arith.constant dense<0.000000e+00> : vector<2x128xf32>
    %92 = vector.multi_reduction <add>, %91, %cst_82 [2] : vector<2x128x128xf32> to vector<2x128xf32>
    %93 = vector.shape_cast %92 : vector<2x128xf32> to vector<2x128x1xf32>
    %94 = arith.truncf %91 : vector<2x128x128xf32> to vector<2x128x128xbf16>
    %cst_83 = arith.constant dense<0.000000e+00> : vector<2x128x32xf32>
    %95 = tpu.matmul %94, %85, %cst_83 {dimension_numbers = #tpu.dot_dimension_numbers<[2], [1], [1], [2], [0, 0, 0, 1, 1, 2], [0], [0]>} : vector<2x128x128xbf16>, vector<2x128x32xbf16>, vector<2x128x32xf32> -> vector<2x128x32xf32>
    %96 = tpu.reciprocal %93 {approx = true} : vector<2x128x1xf32> -> vector<2x128x1xf32>
    %97 = vector.broadcast %96 : vector<2x128x1xf32> to vector<2x128x32xf32>
    %98 = arith.mulf %95, %97 : vector<2x128x32xf32>
    %99 = arith.truncf %98 : vector<2x128x32xf32> to vector<2x128x32xbf16>
    %c0_84 = arith.constant 0 : index
    %c0_85 = arith.constant 0 : index
    %c96_86 = arith.constant 96 : index
    %100 = vector.load %arg14[%c0_84, %c0_85, %c96_86] : memref<2x128x128xbf16, #tpu.memory_space<vmem>>, vector<2x128x32xbf16>
    tpu.vector_store %arg14[%c0_84, %c0_85, %c96_86], %99 {strides = array<i32>} : memref<2x128x128xbf16, #tpu.memory_space<vmem>>, vector<2x128x32xbf16>,
    %c0_87 = arith.constant 0 : index
    %c0_88 = arith.constant 0 : index
    %c0_89 = arith.constant 0 : index
    %101 = vector.load %arg14[%c0_87, %c0_88, %c0_89] : memref<2x128x128xbf16, #tpu.memory_space<vmem>>, vector<2x128x128xbf16>
    %102 = vector.shape_cast %101 : vector<2x128x128xbf16> to vector<256x128xbf16>
    %c0_90 = arith.constant 0 : index
    %c0_91 = arith.constant 0 : index
    %103 = vector.load %arg5[%c0_90, %c0_91] : memref<128x128xbf16, #tpu.memory_space<vmem>>, vector<128x128xbf16>
    %cst_92 = arith.constant dense<0.000000e+00> : vector<256x128xf32>
    %104 = tpu.matmul %102, %103, %cst_92 {dimension_numbers = #tpu.dot_dimension_numbers<[1], [0], [0], [1], [0, 0, 1, 1], [], []>} : vector<256x128xbf16>, vector<128x128xbf16>, vector<256x128xf32> -> vector<256x128xf32>
    %c0_93 = arith.constant 0 : index
    %c0_94 = arith.constant 0 : index
    %105 = vector.load %arg9[%c0_93, %c0_94] : memref<1x128xf32, #tpu.memory_space<vmem>>, vector<1x128xf32>
    %106 = vector.broadcast %105 : vector<1x128xf32> to vector<256x128xf32>
    %107 = arith.addf %104, %106 : vector<256x128xf32>
    %108 = vector.shape_cast %107 : vector<256x128xf32> to vector<2x128x128xf32>
    %c0_95 = arith.constant 0 : index
    %c0_96 = arith.constant 0 : index
    %c0_97 = arith.constant 0 : index
    %109 = vector.load %arg10[%c0_95, %c0_96, %c0_97] : memref<2x128x128xf32, #tpu.memory_space<vmem>>, vector<2x128x128xf32>
    tpu.vector_store %arg10[%c0_95, %c0_96, %c0_97], %108 {strides = array<i32>} : memref<2x128x128xf32, #tpu.memory_space<vmem>>, vector<2x128x128xf32>,
    return
  }
  func.func @transform_0(%arg0: i32) -> (i32, i32, i32) {
    %c0_i32 = arith.constant 0 : i32
    %c0_i32_0 = arith.constant 0 : i32
    %c0_i32_1 = arith.constant 0 : i32
    return %arg0, %c0_i32, %c0_i32_0 : i32, i32, i32
  }
  func.func @transform_1(%arg0: i32) -> (i32, i32) {
    %c0_i32 = arith.constant 0 : i32
    %c0_i32_0 = arith.constant 0 : i32
    %c0_i32_1 = arith.constant 0 : i32
    return %c0_i32, %c0_i32_0 : i32, i32
  }
  func.func @transform_2(%arg0: i32) -> (i32, i32) {
    %c0_i32 = arith.constant 0 : i32
    %c0_i32_0 = arith.constant 0 : i32
    %c0_i32_1 = arith.constant 0 : i32
    return %c0_i32, %c0_i32_0 : i32, i32
  }
  func.func @transform_3(%arg0: i32) -> (i32, i32) {
    %c0_i32 = arith.constant 0 : i32
    %c0_i32_0 = arith.constant 0 : i32
    %c0_i32_1 = arith.constant 0 : i32
    return %c0_i32, %c0_i32_0 : i32, i32
  }
  func.func @transform_4(%arg0: i32) -> (i32, i32) {
    %c0_i32 = arith.constant 0 : i32
    %c0_i32_0 = arith.constant 0 : i32
    %c0_i32_1 = arith.constant 0 : i32
    return %c0_i32, %c0_i32_0 : i32, i32
  }
  func.func @transform_5(%arg0: i32) -> (i32, i32) {
    %c0_i32 = arith.constant 0 : i32
    %c0_i32_0 = arith.constant 0 : i32
    %c0_i32_1 = arith.constant 0 : i32
    return %c0_i32, %c0_i32_0 : i32, i32
  }
  func.func @transform_6(%arg0: i32) -> (i32, i32) {
    %c0_i32 = arith.constant 0 : i32
    %c0_i32_0 = arith.constant 0 : i32
    %c0_i32_1 = arith.constant 0 : i32
    return %c0_i32, %c0_i32_0 : i32, i32
  }
  func.func @transform_7(%arg0: i32) -> (i32, i32) {
    %c0_i32 = arith.constant 0 : i32
    %c0_i32_0 = arith.constant 0 : i32
    %c0_i32_1 = arith.constant 0 : i32
    return %c0_i32, %c0_i32_0 : i32, i32
  }
  func.func @transform_8(%arg0: i32) -> (i32, i32) {
    %c0_i32 = arith.constant 0 : i32
    %c0_i32_0 = arith.constant 0 : i32
    %c0_i32_1 = arith.constant 0 : i32
    return %c0_i32, %c0_i32_0 : i32, i32
  }
  func.func @transform_9(%arg0: i32) -> (i32, i32, i32) {
    %c0_i32 = arith.constant 0 : i32
    %c0_i32_0 = arith.constant 0 : i32
    %c0_i32_1 = arith.constant 0 : i32
    return %arg0, %c0_i32, %c0_i32_0 : i32, i32, i32
  }
}

</mosaic_0001>

<llo_original>
// kernel: tpu_custom_call.1
$region0: #{tpu_custom_call.1}
  #allocation0 [shape = 'u32[]', space=smem, size = 0x4, offset = 0x4, fixed_abs, tag = 'smem constant byte address 0x4 - core index']
  #allocation1 [shape = 'u32[144,128]{1,0:T(1,128)}', space=vmem, size = 0x12000, scoped, tag = 'internal scratch']
  #allocation2 [shape = 'bf16[2,128,128]{2,1,0:T(16,128)(2,1)}', space=vmem, size = 0x10000, scoped, tag = 'scratch operand']
  #allocation3 [shape = 'bf16[2,128,128]{2,1,0:T(16,128)(2,1)}', space=vmem, size = 0x10000, scoped, tag = 'scratch operand']
  #allocation4 [shape = 'bf16[2,128,128]{2,1,0:T(16,128)(2,1)}', space=vmem, size = 0x10000, scoped, tag = 'scratch operand']
  #allocation5 [shape = 'bf16[2,128,128]{2,1,0:T(16,128)(2,1)}', space=vmem, size = 0x10000, scoped, tag = 'scratch operand']
  %s0 = inlined_call_operand.hbm [shape: f32[2,128,128], index: 0, kind: input, shape index: {}]
  %s1 = inlined_call_operand.hbm [shape: bf16[128,128], index: 1, kind: input, shape index: {}]
  %s2 = inlined_call_operand.hbm [shape: bf16[128,128], index: 2, kind: input, shape index: {}]
  %s3 = inlined_call_operand.hbm [shape: bf16[128,128], index: 3, kind: input, shape index: {}]
  %s4 = inlined_call_operand.hbm [shape: bf16[128,128], index: 4, kind: input, shape index: {}]
  %s5 = inlined_call_operand.vmem [shape: f32[1,128], index: 5, kind: input, shape index: {}]
  %s6 = inlined_call_operand.vmem [shape: f32[1,128], index: 6, kind: input, shape index: {}]
  %s7 = inlined_call_operand.vmem [shape: f32[1,128], index: 7, kind: input, shape index: {}]
  %s8 = inlined_call_operand.vmem [shape: f32[1,128], index: 8, kind: input, shape index: {}]
  %s9 = inlined_call_operand.hbm [shape: f32[2,128,128], index: 9, kind: output, shape index: {}]
  %s10 = sld [smem:[#allocation0]]
  $region66: #{tpu_custom_call.1} parent=0
    _
  %s12 = ssub.s32 1, %s10
  %s13 = scalar_select 0, %s12, %s10
  $region1: #{tpu_custom_call.1} parent=0
    #allocation6 [shape = 'u8[131072]{0}', space=vmem, size = 0x20000, scoped, tag = 'input window, operand 0, single buffered']
    #allocation7 [shape = 's32[1]{0}', space=sflag, size = 0x4, scoped, tag = 'scoped memory for tpu_custom_call.1']
    #allocation8 [shape = 's32[1]{0}', space=sflag, size = 0x4, scoped, tag = 'scoped memory for tpu_custom_call.1']
    #allocation9 [shape = 'u8[32768]{0}', space=vmem, size = 0x8000, scoped, tag = 'input window, operand 1, single buffered']
    #allocation10 [shape = 's32[1]{0}', space=sflag, size = 0x4, scoped, tag = 'scoped memory for tpu_custom_call.1']
    #allocation11 [shape = 'u8[32768]{0}', space=vmem, size = 0x8000, scoped, tag = 'input window, operand 2, single buffered']
    #allocation12 [shape = 'u8[32768]{0}', space=vmem, size = 0x8000, scoped, tag = 'input window, operand 3, single buffered']
    #allocation13 [shape = 's32[1]{0}', space=sflag, size = 0x4, scoped, tag = 'scoped memory for tpu_custom_call.1']
    #allocation14 [shape = 'u8[32768]{0}', space=vmem, size = 0x8000, scoped, tag = 'input window, operand 4, single buffered']
    #allocation15 [shape = 'u8[131072]{0}', space=vmem, size = 0x20000, scoped, tag = 'output window, operand 0, single buffered']
    %14 = vsyncpa [#allocation7], 0
    %15 = vsyncpa [#allocation10], 0
    %16 = vsyncpa [#allocation13], 0
    %17 = vsyncpa [#allocation8], 0
    // Predicated region
    $region2: #{tpu_custom_call.1} parent=1 // pred_check
      _
    $region3: #{tpu_custom_call.1} parent=1 // pred_check_branch
      %19 = sbr.rel (0) target = $region5
    $region4: #{tpu_custom_call.1} parent=1 // pred_region
      %s21 = ssub.s32 4096, 4096
      %22 = vsyncadd [#allocation7], %s21
      %s23 = sshll.u32 [#allocation6], 4
      %s24 = int_to_ptr.vmem [resolvable:$true] %s23
      %29 = dma.hbm_to_vmem [thread:$0]  %s0, 4096, %s24, [#allocation7], 128, 128, 8
    $region5: #{tpu_custom_call.1} parent=1 // pred_fallthru
      _
    // Predicated region
    $region6: #{tpu_custom_call.1} parent=1 // pred_check
      _
    $region7: #{tpu_custom_call.1} parent=1 // pred_check_branch
      %31 = sbr.rel (0) target = $region9
    $region8: #{tpu_custom_call.1} parent=1 // pred_region
      %s33 = ssub.s32 1024, 1024
      %34 = vsyncadd [#allocation10], %s33
      %s35 = sshll.u32 [#allocation9], 4
      %s36 = int_to_ptr.vmem [resolvable:$true] %s35
      %41 = dma.hbm_to_vmem [thread:$0]  %s1, 1024, %s36, [#allocation10], 64, 64, 4
    $region9: #{tpu_custom_call.1} parent=1 // pred_fallthru
      _
    // Predicated region
    $region10: #{tpu_custom_call.1} parent=1 // pred_check
      _
    $region11: #{tpu_custom_call.1} parent=1 // pred_check_branch
      %43 = sbr.rel (0) target = $region13
    $region12: #{tpu_custom_call.1} parent=1 // pred_region
      %s45 = ssub.s32 1024, 1024
      %46 = vsyncadd [#allocation10], %s45
      %s47 = sshll.u32 [#allocation11], 4
      %s48 = int_to_ptr.vmem [resolvable:$true] %s47
      %53 = dma.hbm_to_vmem [thread:$0]  %s2, 1024, %s48, [#allocation10], 64, 64, 4
    $region13: #{tpu_custom_call.1} parent=1 // pred_fallthru
      _
    // Predicated region
    $region14: #{tpu_custom_call.1} parent=1 // pred_check
      _
    $region15: #{tpu_custom_call.1} parent=1 // pred_check_branch
      %55 = sbr.rel (0) target = $region17
    $region16: #{tpu_custom_call.1} parent=1 // pred_region
      %s57 = ssub.s32 1024, 1024
      %58 = vsyncadd [#allocation13], %s57
      %s59 = sshll.u32 [#allocation12], 4
      %s60 = int_to_ptr.vmem [resolvable:$true] %s59
      %65 = dma.hbm_to_vmem [thread:$0]  %s3, 1024, %s60, [#allocation13], 64, 64, 4
    $region17: #{tpu_custom_call.1} parent=1 // pred_fallthru
      _
    // Predicated region
    $region18: #{tpu_custom_call.1} parent=1 // pred_check
      _
    $region19: #{tpu_custom_call.1} parent=1 // pred_check_branch
      %67 = sbr.rel (0) target = $region21
    $region20: #{tpu_custom_call.1} parent=1 // pred_region
      %s69 = ssub.s32 1024, 1024
      %70 = vsyncadd [#allocation13], %s69
      %s71 = sshll.u32 [#allocation14], 4
      %s72 = int_to_ptr.vmem [resolvable:$true] %s71
      %77 = dma.hbm_to_vmem [thread:$0]  %s4, 1024, %s72, [#allocation13], 64, 64, 4
    $region21: #{tpu_custom_call.1} parent=1 // pred_fallthru
      _
    // Predicated region
    $region22: #{tpu_custom_call.1} parent=1 // pred_check
      _
    $region23: #{tpu_custom_call.1} parent=1 // pred_check_branch
      %79 = sbr.rel (0) target = $region25
    $region24: #{tpu_custom_call.1} parent=1 // pred_region
      _
    $region25: #{tpu_custom_call.1} parent=1 // pred_fallthru
      _
    // Predicated region
    $region26: #{tpu_custom_call.1} parent=1 // pred_check
      _
    $region27: #{tpu_custom_call.1} parent=1 // pred_check_branch
      %81 = sbr.rel (0) target = $region29
    $region28: #{tpu_custom_call.1} parent=1 // pred_region
      _
    $region29: #{tpu_custom_call.1} parent=1 // pred_fallthru
      _
    // Predicated region
    $region30: #{tpu_custom_call.1} parent=1 // pred_check
      _
    $region31: #{tpu_custom_call.1} parent=1 // pred_check_branch
      %83 = sbr.rel (0) target = $region33
    $region32: #{tpu_custom_call.1} parent=1 // pred_region
      _
    $region33: #{tpu_custom_call.1} parent=1 // pred_fallthru
      _
    // Predicated region
    $region34: #{tpu_custom_call.1} parent=1 // pred_check
      _
    $region35: #{tpu_custom_call.1} parent=1 // pred_check_branch
      %85 = sbr.rel (0) target = $region37
    $region36: #{tpu_custom_call.1} parent=1 // pred_region
      _
    $region37: #{tpu_custom_call.1} parent=1 // pred_fallthru
      _
    // Predicated region
    $region38: #{tpu_custom_call.1} parent=1 // pred_check
      _
    $region39: #{tpu_custom_call.1} parent=1 // pred_check_branch
      %87 = sbr.rel (0) target = $region41
    $region40: #{tpu_custom_call.1} parent=1 // pred_region
      %88 = dma.done [#allocation7], 4096
    $region41: #{tpu_custom_call.1} parent=1 // pred_fallthru
      _
    // Predicated region
    $region42: #{tpu_custom_call.1} parent=1 // pred_check
      _
    $region43: #{tpu_custom_call.1} parent=1 // pred_check_branch
      %90 = sbr.rel (0) target = $region45
    $region44: #{tpu_custom_call.1} parent=1 // pred_region
      %91 = dma.done [#allocation10], 1024
    $region45: #{tpu_custom_call.1} parent=1 // pred_fallthru
      _
    // Predicated region
    $region46: #{tpu_custom_call.1} parent=1 // pred_check
      _
    $region47: #{tpu_custom_call.1} parent=1 // pred_check_branch
      %93 = sbr.rel (0) target = $region49
    $region48: #{tpu_custom_call.1} parent=1 // pred_region
      %94 = dma.done [#allocation10], 1024
    $region49: #{tpu_custom_call.1} parent=1 // pred_fallthru
      _
    // Predicated region
    $region50: #{tpu_custom_call.1} parent=1 // pred_check
      _
    $region51: #{tpu_custom_call.1} parent=1 // pred_check_branch
      %96 = sbr.rel (0) target = $region53
    $region52: #{tpu_custom_call.1} parent=1 // pred_region
      %97 = dma.done [#allocation13], 1024
    $region53: #{tpu_custom_call.1} parent=1 // pred_fallthru
      _
    // Predicated region
    $region54: #{tpu_custom_call.1} parent=1 // pred_check
      _
    $region55: #{tpu_custom_call.1} parent=1 // pred_check_branch
      %99 = sbr.rel (0) target = $region57
    $region56: #{tpu_custom_call.1} parent=1 // pred_region
      %100 = dma.done [#allocation13], 1024
    $region57: #{tpu_custom_call.1} parent=1 // pred_fallthru
      _
    %v102 = vld [vmem:[#allocation6] sm:$0xff]
    %v103 = vld [vmem:[#allocation6 + $0x8] sm:$0xff]
    %v104 = vld [vmem:[#allocation6 + $0x10] sm:$0xff]
    %v105 = vld [vmem:[#allocation6 + $0x18] sm:$0xff]
    %v106 = vld [vmem:[#allocation6 + $0x20] sm:$0xff]
    %v107 = vld [vmem:[#allocation6 + $0x28] sm:$0xff]
    %v108 = vld [vmem:[#allocation6 + $0x30] sm:$0xff]
    %v109 = vld [vmem:[#allocation6 + $0x38] sm:$0xff]
    %v110 = vld [vmem:[#allocation6 + $0x40] sm:$0xff]
    %v111 = vld [vmem:[#allocation6 + $0x48] sm:$0xff]
    %v112 = vld [vmem:[#allocation6 + $0x50] sm:$0xff]
    %v113 = vld [vmem:[#allocation6 + $0x58] sm:$0xff]
    %v114 = vld [vmem:[#allocation6 + $0x60] sm:$0xff]
    %v115 = vld [vmem:[#allocation6 + $0x68] sm:$0xff]
    %v116 = vld [vmem:[#allocation6 + $0x70] sm:$0xff]
    %v117 = vld [vmem:[#allocation6 + $0x78] sm:$0xff]
    %v118 = vld [vmem:[#allocation6 + $0x80] sm:$0xff]
    %v119 = vld [vmem:[#allocation6 + $0x88] sm:$0xff]
    %v120 = vld [vmem:[#allocation6 + $0x90] sm:$0xff]
    %v121 = vld [vmem:[#allocation6 + $0x98] sm:$0xff]
    %v122 = vld [vmem:[#allocation6 + $0xa0] sm:$0xff]
    %v123 = vld [vmem:[#allocation6 + $0xa8] sm:$0xff]
    %v124 = vld [vmem:[#allocation6 + $0xb0] sm:$0xff]
    %v125 = vld [vmem:[#allocation6 + $0xb8] sm:$0xff]
    %v126 = vld [vmem:[#allocation6 + $0xc0] sm:$0xff]
    %v127 = vld [vmem:[#allocation6 + $0xc8] sm:$0xff]
    %v128 = vld [vmem:[#allocation6 + $0xd0] sm:$0xff]
    %v129 = vld [vmem:[#allocation6 + $0xd8] sm:$0xff]
    %v130 = vld [vmem:[#allocation6 + $0xe0] sm:$0xff]
    %v131 = vld [vmem:[#allocation6 + $0xe8] sm:$0xff]
    %v132 = vld [vmem:[#allocation6 + $0xf0] sm:$0xff]
    %v133 = vld [vmem:[#allocation6 + $0xf8] sm:$0xff]
    %v134 = vpack.c.bf16 %v103, %v102
    %v135 = vpack.c.bf16 %v105, %v104
    %v136 = vpack.c.bf16 %v107, %v106
    %v137 = vpack.c.bf16 %v109, %v108
    %v138 = vpack.c.bf16 %v111, %v110
    %v139 = vpack.c.bf16 %v113, %v112
    %v140 = vpack.c.bf16 %v115, %v114
    %v141 = vpack.c.bf16 %v117, %v116
    %v142 = vpack.c.bf16 %v119, %v118
    %v143 = vpack.c.bf16 %v121, %v120
    %v144 = vpack.c.bf16 %v123, %v122
    %v145 = vpack.c.bf16 %v125, %v124
    %v146 = vpack.c.bf16 %v127, %v126
    %v147 = vpack.c.bf16 %v129, %v128
    %v148 = vpack.c.bf16 %v131, %v130
    %v149 = vpack.c.bf16 %v133, %v132
    %v150 = vld [vmem:[#allocation9] sm:$0xf]
    %v151 = vld [vmem:[#allocation9 + $0x4] sm:$0xf]
    %v152 = vld [vmem:[#allocation9 + $0x8] sm:$0xf]
    %v153 = vld [vmem:[#allocation9 + $0xc] sm:$0xf]
    %v154 = vld [vmem:[#allocation9 + $0x10] sm:$0xf]
    %v155 = vld [vmem:[#allocation9 + $0x14] sm:$0xf]
    %v156 = vld [vmem:[#allocation9 + $0x18] sm:$0xf]
    %v157 = vld [vmem:[#allocation9 + $0x1c] sm:$0xf]
    %v158 = vld [vmem:[#allocation9 + $0x20] sm:$0xf]
    %v159 = vld [vmem:[#allocation9 + $0x24] sm:$0xf]
    %v160 = vld [vmem:[#allocation9 + $0x28] sm:$0xf]
    %v161 = vld [vmem:[#allocation9 + $0x2c] sm:$0xf]
    %v162 = vld [vmem:[#allocation9 + $0x30] sm:$0xf]
    %v163 = vld [vmem:[#allocation9 + $0x34] sm:$0xf]
    %v164 = vld [vmem:[#allocation9 + $0x38] sm:$0xf]
    %v165 = vld [vmem:[#allocation9 + $0x3c] sm:$0xf]
    %v166 = vld [vmem:[%s5] sm:$0x1]
    %v168 = vlaneseq
    %v169 = vshrl.u32 %v168, 7
    %v170 = vsub.s32 0, %v169
    %v171 = vrot.slane %v166, %v170
    %v189 = vunpack.c.l.b16 %v150
    %v190 = vunpack.c.l.b16 %v151
    %v191 = vunpack.c.l.b16 %v152
    %v192 = vunpack.c.l.b16 %v153
    %v193 = vunpack.c.l.b16 %v154
    %v194 = vunpack.c.l.b16 %v155
    %v195 = vunpack.c.l.b16 %v156
    %v196 = vunpack.c.l.b16 %v157
    %v197 = vunpack.c.l.b16 %v158
    %v198 = vunpack.c.l.b16 %v159
    %v199 = vunpack.c.l.b16 %v160
    %v200 = vunpack.c.l.b16 %v161
    %v201 = vunpack.c.l.b16 %v162
    %v202 = vunpack.c.l.b16 %v163
    %v203 = vunpack.c.l.b16 %v164
    %v204 = vunpack.c.l.b16 %v165
    %v205 = vpack.c.b16 %v190, %v189
    %v206 = vpack.c.b16 %v192, %v191
    %v207 = vpack.c.b16 %v194, %v193
    %v208 = vpack.c.b16 %v196, %v195
    %v209 = vpack.c.b16 %v198, %v197
    %v210 = vpack.c.b16 %v200, %v199
    %v211 = vpack.c.b16 %v202, %v201
    %v212 = vpack.c.b16 %v204, %v203
    %221 = vmatprep.subr.bf16.mxu0 0
    %222 = vmatpush1.bf16.msra.mxu0 %v205
    %223 = vmatprep.subr.bf16.mxu0 0
    %224 = vmatpush1.bf16.msra.mxu0 %v206
    %225 = vmatprep.subr.bf16.mxu0 0
    %226 = vmatpush1.bf16.msra.mxu0 %v207
    %227 = vmatprep.subr.bf16.mxu0 0
    %228 = vmatpush1.bf16.msra.mxu0 %v208
    %229 = vmatprep.subr.bf16.mxu0 0
    %230 = vmatpush1.bf16.msra.mxu0 %v209
    %231 = vmatprep.subr.bf16.mxu0 0
    %232 = vmatpush1.bf16.msra.mxu0 %v210
    %233 = vmatprep.subr.bf16.mxu0 0
    %234 = vmatpush1.bf16.msra.mxu0 %v211
    %235 = vmatprep.subr.bf16.mxu0 0
    %236 = vmatpush1.bf16.msra.mxu0 %v212
    %237 = vmatprep.subr.bf16.mxu0 0
    %238 = vmatpush1.bf16.msra.mxu0 0
    %239 = vmatprep.subr.bf16.mxu0 0
    %240 = vmatpush1.bf16.msra.mxu0 0
    %241 = vmatprep.subr.bf16.mxu0 0
    %242 = vmatpush1.bf16.msra.mxu0 0
    %243 = vmatprep.subr.bf16.mxu0 0
    %244 = vmatpush1.bf16.msra.mxu0 0
    %245 = vmatprep.subr.bf16.mxu0 0
    %246 = vmatpush1.bf16.msra.mxu0 0
    %247 = vmatprep.subr.bf16.mxu0 0
    %248 = vmatpush1.bf16.msra.mxu0 0
    %249 = vmatprep.subr.bf16.mxu0 0
    %250 = vmatpush1.bf16.msra.mxu0 0
    %251 = vmatprep.subr.bf16.mxu0 0
    %252 = vmatpush1.bf16.msra.mxu0 0
    %253 = vmatprep.mubr.bf16.mxu0 0
    %254 = vmatmul.mubr.bf16.gmra.mrb[0].mxu0 %v134
    %v255 = vpop.f32.mrb[0].mxu0
    %v256 = vadd.f32 %v171, %v255
    %v257 = vpop.f32.mrb[0].mxu0
    %v258 = vpop.f32.mrb[0].mxu0
    %v259 = vadd.f32 %v171, %v258
    %v260 = vpop.f32.mrb[0].mxu0
    %261 = vmatprep.mubr.bf16.mxu0 0
    %262 = vmatmul.mubr.bf16.gmra.mrb[0].mxu0 %v135
    %v263 = vpop.f32.mrb[0].mxu0
    %v264 = vadd.f32 %v171, %v263
    %v265 = vpop.f32.mrb[0].mxu0
    %v266 = vpop.f32.mrb[0].mxu0
    %v267 = vadd.f32 %v171, %v266
    %v268 = vpop.f32.mrb[0].mxu0
    %269 = vmatprep.mubr.bf16.mxu0 0
    %270 = vmatmul.mubr.bf16.gmra.mrb[0].mxu0 %v136
    %v271 = vpop.f32.mrb[0].mxu0
    %v272 = vadd.f32 %v171, %v271
    %v273 = vpop.f32.mrb[0].mxu0
    %v274 = vpop.f32.mrb[0].mxu0
    %v275 = vadd.f32 %v171, %v274
    %v276 = vpop.f32.mrb[0].mxu0
    %277 = vmatprep.mubr.bf16.mxu0 0
    %278 = vmatmul.mubr.bf16.gmra.mrb[0].mxu0 %v137
    %v279 = vpop.f32.mrb[0].mxu0
    %v280 = vadd.f32 %v171, %v279
    %v281 = vpop.f32.mrb[0].mxu0
    %v282 = vpop.f32.mrb[0].mxu0
    %v283 = vadd.f32 %v171, %v282
    %v284 = vpop.f32.mrb[0].mxu0
    %285 = vmatprep.mubr.bf16.mxu0 0
    %286 = vmatmul.mubr.bf16.gmra.mrb[0].mxu0 %v138
    %v287 = vpop.f32.mrb[0].mxu0
    %v288 = vadd.f32 %v171, %v287
    %v289 = vpop.f32.mrb[0].mxu0
    %v290 = vpop.f32.mrb[0].mxu0
    %v291 = vadd.f32 %v171, %v290
    %v292 = vpop.f32.mrb[0].mxu0
    %293 = vmatprep.mubr.bf16.mxu0 0
    %294 = vmatmul.mubr.bf16.gmra.mrb[0].mxu0 %v139
    %v295 = vpop.f32.mrb[0].mxu0
    %v296 = vadd.f32 %v171, %v295
    %v297 = vpop.f32.mrb[0].mxu0
    %v298 = vpop.f32.mrb[0].mxu0
    %v299 = vadd.f32 %v171, %v298
    %v300 = vpop.f32.mrb[0].mxu0
    %301 = vmatprep.mubr.bf16.mxu0 0
    %302 = vmatmul.mubr.bf16.gmra.mrb[0].mxu0 %v140
    %v303 = vpop.f32.mrb[0].mxu0
    %v304 = vadd.f32 %v171, %v303
    %v305 = vpop.f32.mrb[0].mxu0
    %v306 = vpop.f32.mrb[0].mxu0
    %v307 = vadd.f32 %v171, %v306
    %v308 = vpop.f32.mrb[0].mxu0
    %309 = vmatprep.mubr.bf16.mxu0 0
    %310 = vmatmul.mubr.bf16.gmra.mrb[0].mxu0 %v141
    %v311 = vpop.f32.mrb[0].mxu0
    %v312 = vadd.f32 %v171, %v311
    %v313 = vpop.f32.mrb[0].mxu0
    %v314 = vpop.f32.mrb[0].mxu0
    %v315 = vadd.f32 %v171, %v314
    %v316 = vpop.f32.mrb[0].mxu0
    %317 = vmatprep.mubr.bf16.mxu0 0
    %318 = vmatmul.mubr.bf16.gmra.mrb[0].mxu0 %v142
    %v319 = vpop.f32.mrb[0].mxu0
    %v320 = vadd.f32 %v171, %v319
    %v321 = vpop.f32.mrb[0].mxu0
    %v322 = vpop.f32.mrb[0].mxu0
    %v323 = vadd.f32 %v171, %v322
    %v324 = vpop.f32.mrb[0].mxu0
    %325 = vmatprep.mubr.bf16.mxu0 0
    %326 = vmatmul.mubr.bf16.gmra.mrb[0].mxu0 %v143
    %v327 = vpop.f32.mrb[0].mxu0
    %v328 = vadd.f32 %v171, %v327
    %v329 = vpop.f32.mrb[0].mxu0
    %v330 = vpop.f32.mrb[0].mxu0
    %v331 = vadd.f32 %v171, %v330
    %v332 = vpop.f32.mrb[0].mxu0
    %333 = vmatprep.mubr.bf16.mxu0 0
    %334 = vmatmul.mubr.bf16.gmra.mrb[0].mxu0 %v144
    %v335 = vpop.f32.mrb[0].mxu0
    %v336 = vadd.f32 %v171, %v335
    %v337 = vpop.f32.mrb[0].mxu0
    %v338 = vpop.f32.mrb[0].mxu0
    %v339 = vadd.f32 %v171, %v338
    %v340 = vpop.f32.mrb[0].mxu0
    %341 = vmatprep.mubr.bf16.mxu0 0
    %342 = vmatmul.mubr.bf16.gmra.mrb[0].mxu0 %v145
    %v343 = vpop.f32.mrb[0].mxu0
    %v344 = vadd.f32 %v171, %v343
    %v345 = vpop.f32.mrb[0].mxu0
    %v346 = vpop.f32.mrb[0].mxu0
    %v347 = vadd.f32 %v171, %v346
    %v348 = vpop.f32.mrb[0].mxu0
    %349 = vmatprep.mubr.bf16.mxu0 0
    %350 = vmatmul.mubr.bf16.gmra.mrb[0].mxu0 %v146
    %v351 = vpop.f32.mrb[0].mxu0
    %v352 = vadd.f32 %v171, %v351
    %v353 = vpop.f32.mrb[0].mxu0
    %v354 = vpop.f32.mrb[0].mxu0
    %v355 = vadd.f32 %v171, %v354
    %v356 = vpop.f32.mrb[0].mxu0
    %357 = vmatprep.mubr.bf16.mxu0 0
    %358 = vmatmul.mubr.bf16.gmra.mrb[0].mxu0 %v147
    %v359 = vpop.f32.mrb[0].mxu0
    %v360 = vadd.f32 %v171, %v359
    %v361 = vpop.f32.mrb[0].mxu0
    %v362 = vpop.f32.mrb[0].mxu0
    %v363 = vadd.f32 %v171, %v362
    %v364 = vpop.f32.mrb[0].mxu0
    %365 = vmatprep.mubr.bf16.mxu0 0
    %366 = vmatmul.mubr.bf16.gmra.mrb[0].mxu0 %v148
    %v367 = vpop.f32.mrb[0].mxu0
    %v368 = vadd.f32 %v171, %v367
    %v369 = vpop.f32.mrb[0].mxu0
    %v370 = vpop.f32.mrb[0].mxu0
    %v371 = vadd.f32 %v171, %v370
    %v372 = vpop.f32.mrb[0].mxu0
    %373 = vmatprep.mubr.bf16.mxu0 0
    %374 = vmatmul.mubr.bf16.gmra.mrb[0].mxu0 %v149
    %v375 = vpop.f32.mrb[0].mxu0
    %v376 = vadd.f32 %v171, %v375
    %v377 = vpop.f32.mrb[0].mxu0
    %v378 = vpop.f32.mrb[0].mxu0
    %v379 = vadd.f32 %v171, %v378
    %v380 = vpop.f32.mrb[0].mxu0
    %381 = vdwg.mxu0
    %v382 = vld [vmem:[#allocation11] sm:$0xf]
    %v383 = vld [vmem:[#allocation11 + $0x4] sm:$0xf]
    %v384 = vld [vmem:[#allocation11 + $0x8] sm:$0xf]
    %v385 = vld [vmem:[#allocation11 + $0xc] sm:$0xf]
    %v386 = vld [vmem:[#allocation11 + $0x10] sm:$0xf]
    %v387 = vld [vmem:[#allocation11 + $0x14] sm:$0xf]
    %v388 = vld [vmem:[#allocation11 + $0x18] sm:$0xf]
    %v389 = vld [vmem:[#allocation11 + $0x1c] sm:$0xf]
    %v390 = vld [vmem:[#allocation11 + $0x20] sm:$0xf]
    %v391 = vld [vmem:[#allocation11 + $0x24] sm:$0xf]
    %v392 = vld [vmem:[#allocation11 + $0x28] sm:$0xf]
    %v393 = vld [vmem:[#allocation11 + $0x2c] sm:$0xf]
    %v394 = vld [vmem:[#allocation11 + $0x30] sm:$0xf]
    %v395 = vld [vmem:[#allocation11 + $0x34] sm:$0xf]
    %v396 = vld [vmem:[#allocation11 + $0x38] sm:$0xf]
    %v397 = vld [vmem:[#allocation11 + $0x3c] sm:$0xf]
    %v398 = vld [vmem:[%s6] sm:$0x1]
    %v400 = vlaneseq
    %v401 = vshrl.u32 %v400, 7
    %v402 = vsub.s32 0, %v401
    %v403 = vrot.slane %v398, %v402
    %v421 = vunpack.c.l.b16 %v382
    %v422 = vunpack.c.l.b16 %v383
    %v423 = vunpack.c.l.b16 %v384
    %v424 = vunpack.c.l.b16 %v385
    %v425 = vunpack.c.l.b16 %v386
    %v426 = vunpack.c.l.b16 %v387
    %v427 = vunpack.c.l.b16 %v388
    %v428 = vunpack.c.l.b16 %v389
    %v429 = vunpack.c.l.b16 %v390
    %v430 = vunpack.c.l.b16 %v391
    %v431 = vunpack.c.l.b16 %v392
    %v432 = vunpack.c.l.b16 %v393
    %v433 = vunpack.c.l.b16 %v394
    %v434 = vunpack.c.l.b16 %v395
    %v435 = vunpack.c.l.b16 %v396
    %v436 = vunpack.c.l.b16 %v397
    %v437 = vpack.c.b16 %v422, %v421
    %v438 = vpack.c.b16 %v424, %v423
    %v439 = vpack.c.b16 %v426, %v425
    %v440 = vpack.c.b16 %v428, %v427
    %v441 = vpack.c.b16 %v430, %v429
    %v442 = vpack.c.b16 %v432, %v431
    %v443 = vpack.c.b16 %v434, %v433
    %v444 = vpack.c.b16 %v436, %v435
    %453 = vmatprep.subr.bf16.mxu0 0
    %454 = vmatpush1.bf16.msra.mxu0 %v437
    %455 = vmatprep.subr.bf16.mxu0 0
    %456 = vmatpush1.bf16.msra.mxu0 %v438
    %457 = vmatprep.subr.bf16.mxu0 0
    %458 = vmatpush1.bf16.msra.mxu0 %v439
    %459 = vmatprep.subr.bf16.mxu0 0
    %460 = vmatpush1.bf16.msra.mxu0 %v440
    %461 = vmatprep.subr.bf16.mxu0 0
    %462 = vmatpush1.bf16.msra.mxu0 %v441
    %463 = vmatprep.subr.bf16.mxu0 0
    %464 = vmatpush1.bf16.msra.mxu0 %v442
    %465 = vmatprep.subr.bf16.mxu0 0
    %466 = vmatpush1.bf16.msra.mxu0 %v443
    %467 = vmatprep.subr.bf16.mxu0 0
    %468 = vmatpush1.bf16.msra.mxu0 %v444
    %469 = vmatprep.subr.bf16.mxu0 0
    %470 = vmatpush1.bf16.msra.mxu0 0
    %471 = vmatprep.subr.bf16.mxu0 0
    %472 = vmatpush1.bf16.msra.mxu0 0
    %473 = vmatprep.subr.bf16.mxu0 0
    %474 = vmatpush1.bf16.msra.mxu0 0
    %475 = vmatprep.subr.bf16.mxu0 0
    %476 = vmatpush1.bf16.msra.mxu0 0
    %477 = vmatprep.subr.bf16.mxu0 0
    %478 = vmatpush1.bf16.msra.mxu0 0
    %479 = vmatprep.subr.bf16.mxu0 0
    %480 = vmatpush1.bf16.msra.mxu0 0
    %481 = vmatprep.subr.bf16.mxu0 0
    %482 = vmatpush1.bf16.msra.mxu0 0
    %483 = vmatprep.subr.bf16.mxu0 0
    %484 = vmatpush1.bf16.msra.mxu0 0
    %485 = vmatprep.mubr.bf16.mxu0 0
    %486 = vmatmul.mubr.bf16.gmra.mrb[0].mxu0 %v134
    %v487 = vpop.f32.mrb[0].mxu0
    %v488 = vadd.f32 %v403, %v487
    %v489 = vpop.f32.mrb[0].mxu0
    %v490 = vpop.f32.mrb[0].mxu0
    %v491 = vadd.f32 %v403, %v490
    %v492 = vpop.f32.mrb[0].mxu0
    %493 = vmatprep.mubr.bf16.mxu0 0
    %494 = vmatmul.mubr.bf16.gmra.mrb[0].mxu0 %v135
    %v495 = vpop.f32.mrb[0].mxu0
    %v496 = vadd.f32 %v403, %v495
    %v497 = vpop.f32.mrb[0].mxu0
    %v498 = vpop.f32.mrb[0].mxu0
    %v499 = vadd.f32 %v403, %v498
    %v500 = vpop.f32.mrb[0].mxu0
    %501 = vmatprep.mubr.bf16.mxu0 0
    %502 = vmatmul.mubr.bf16.gmra.mrb[0].mxu0 %v136
    %v503 = vpop.f32.mrb[0].mxu0
    %v504 = vadd.f32 %v403, %v503
    %v505 = vpop.f32.mrb[0].mxu0
    %v506 = vpop.f32.mrb[0].mxu0
    %v507 = vadd.f32 %v403, %v506
    %v508 = vpop.f32.mrb[0].mxu0
    %509 = vmatprep.mubr.bf16.mxu0 0
    %510 = vmatmul.mubr.bf16.gmra.mrb[0].mxu0 %v137
    %v511 = vpop.f32.mrb[0].mxu0
    %v512 = vadd.f32 %v403, %v511
    %v513 = vpop.f32.mrb[0].mxu0
    %v514 = vpop.f32.mrb[0].mxu0
    %v515 = vadd.f32 %v403, %v514
    %v516 = vpop.f32.mrb[0].mxu0
    %517 = vmatprep.mubr.bf16.mxu0 0
    %518 = vmatmul.mubr.bf16.gmra.mrb[0].mxu0 %v138
    %v519 = vpop.f32.mrb[0].mxu0
    %v520 = vadd.f32 %v403, %v519
    %v521 = vpop.f32.mrb[0].mxu0
    %v522 = vpop.f32.mrb[0].mxu0
    %v523 = vadd.f32 %v403, %v522
    %v524 = vpop.f32.mrb[0].mxu0
    %525 = vmatprep.mubr.bf16.mxu0 0
    %526 = vmatmul.mubr.bf16.gmra.mrb[0].mxu0 %v139
    %v527 = vpop.f32.mrb[0].mxu0
    %v528 = vadd.f32 %v403, %v527
    %v529 = vpop.f32.mrb[0].mxu0
    %v530 = vpop.f32.mrb[0].mxu0
    %v531 = vadd.f32 %v403, %v530
    %v532 = vpop.f32.mrb[0].mxu0
    %533 = vmatprep.mubr.bf16.mxu0 0
    %534 = vmatmul.mubr.bf16.gmra.mrb[0].mxu0 %v140
    %v535 = vpop.f32.mrb[0].mxu0
    %v536 = vadd.f32 %v403, %v535
    %v537 = vpop.f32.mrb[0].mxu0
    %v538 = vpop.f32.mrb[0].mxu0
    %v539 = vadd.f32 %v403, %v538
    %v540 = vpop.f32.mrb[0].mxu0
    %541 = vmatprep.mubr.bf16.mxu0 0
    %542 = vmatmul.mubr.bf16.gmra.mrb[0].mxu0 %v141
    %v543 = vpop.f32.mrb[0].mxu0
    %v544 = vadd.f32 %v403, %v543
    %v545 = vpop.f32.mrb[0].mxu0
    %v546 = vpop.f32.mrb[0].mxu0
    %v547 = vadd.f32 %v403, %v546
    %v548 = vpop.f32.mrb[0].mxu0
    %549 = vmatprep.mubr.bf16.mxu0 0
    %550 = vmatmul.mubr.bf16.gmra.mrb[0].mxu0 %v142
    %v551 = vpop.f32.mrb[0].mxu0
    %v552 = vadd.f32 %v403, %v551
    %v553 = vpop.f32.mrb[0].mxu0
    %v554 = vpop.f32.mrb[0].mxu0
    %v555 = vadd.f32 %v403, %v554
    %v556 = vpop.f32.mrb[0].mxu0
    %557 = vmatprep.mubr.bf16.mxu0 0
    %558 = vmatmul.mubr.bf16.gmra.mrb[0].mxu0 %v143
    %v559 = vpop.f32.mrb[0].mxu0
    %v560 = vadd.f32 %v403, %v559
    %v561 = vpop.f32.mrb[0].mxu0
    %v562 = vpop.f32.mrb[0].mxu0
    %v563 = vadd.f32 %v403, %v562
    %v564 = vpop.f32.mrb[0].mxu0
    %565 = vmatprep.mubr.bf16.mxu0 0
    %566 = vmatmul.mubr.bf16.gmra.mrb[0].mxu0 %v144
    %v567 = vpop.f32.mrb[0].mxu0
    %v568 = vadd.f32 %v403, %v567
    %v569 = vpop.f32.mrb[0].mxu0
    %v570 = vpop.f32.mrb[0].mxu0
    %v571 = vadd.f32 %v403, %v570
    %v572 = vpop.f32.mrb[0].mxu0
    %573 = vmatprep.mubr.bf16.mxu0 0
    %574 = vmatmul.mubr.bf16.gmra.mrb[0].mxu0 %v145
    %v575 = vpop.f32.mrb[0].mxu0
    %v576 = vadd.f32 %v403, %v575
    %v577 = vpop.f32.mrb[0].mxu0
    %v578 = vpop.f32.mrb[0].mxu0
    %v579 = vadd.f32 %v403, %v578
    %v580 = vpop.f32.mrb[0].mxu0
    %581 = vmatprep.mubr.bf16.mxu0 0
    %582 = vmatmul.mubr.bf16.gmra.mrb[0].mxu0 %v146
    %v583 = vpop.f32.mrb[0].mxu0
    %v584 = vadd.f32 %v403, %v583
    %v585 = vpop.f32.mrb[0].mxu0
    %v586 = vpop.f32.mrb[0].mxu0
    %v587 = vadd.f32 %v403, %v586
    %v588 = vpop.f32.mrb[0].mxu0
    %589 = vmatprep.mubr.bf16.mxu0 0
    %590 = vmatmul.mubr.bf16.gmra.mrb[0].mxu0 %v147
    %v591 = vpop.f32.mrb[0].mxu0
    %v592 = vadd.f32 %v403, %v591
    %v593 = vpop.f32.mrb[0].mxu0
    %v594 = vpop.f32.mrb[0].mxu0
    %v595 = vadd.f32 %v403, %v594
    %v596 = vpop.f32.mrb[0].mxu0
    %597 = vmatprep.mubr.bf16.mxu0 0
    %598 = vmatmul.mubr.bf16.gmra.mrb[0].mxu0 %v148
    %v599 = vpop.f32.mrb[0].mxu0
    %v600 = vadd.f32 %v403, %v599
    %v601 = vpop.f32.mrb[0].mxu0
    %v602 = vpop.f32.mrb[0].mxu0
    %v603 = vadd.f32 %v403, %v602
    %v604 = vpop.f32.mrb[0].mxu0
    %605 = vmatprep.mubr.bf16.mxu0 0
    %606 = vmatmul.mubr.bf16.gmra.mrb[0].mxu0 %v149
    %v607 = vpop.f32.mrb[0].mxu0
    %v608 = vadd.f32 %v403, %v607
    %v609 = vpop.f32.mrb[0].mxu0
    %v610 = vpop.f32.mrb[0].mxu0
    %v611 = vadd.f32 %v403, %v610
    %v612 = vpop.f32.mrb[0].mxu0
    %613 = vdwg.mxu0
    %v614 = vld [vmem:[#allocation12] sm:$0xf]
    %v615 = vld [vmem:[#allocation12 + $0x4] sm:$0xf]
    %v616 = vld [vmem:[#allocation12 + $0x8] sm:$0xf]
    %v617 = vld [vmem:[#allocation12 + $0xc] sm:$0xf]
    %v618 = vld [vmem:[#allocation12 + $0x10] sm:$0xf]
    %v619 = vld [vmem:[#allocation12 + $0x14] sm:$0xf]
    %v620 = vld [vmem:[#allocation12 + $0x18] sm:$0xf]
    %v621 = vld [vmem:[#allocation12 + $0x1c] sm:$0xf]
    %v622 = vld [vmem:[#allocation12 + $0x20] sm:$0xf]
    %v623 = vld [vmem:[#allocation12 + $0x24] sm:$0xf]
    %v624 = vld [vmem:[#allocation12 + $0x28] sm:$0xf]
    %v625 = vld [vmem:[#allocation12 + $0x2c] sm:$0xf]
    %v626 = vld [vmem:[#allocation12 + $0x30] sm:$0xf]
    %v627 = vld [vmem:[#allocation12 + $0x34] sm:$0xf]
    %v628 = vld [vmem:[#allocation12 + $0x38] sm:$0xf]
    %v629 = vld [vmem:[#allocation12 + $0x3c] sm:$0xf]
    %v630 = vld [vmem:[%s7] sm:$0x1]
    %v632 = vlaneseq
    %v633 = vshrl.u32 %v632, 7
    %v634 = vsub.s32 0, %v633
    %v635 = vrot.slane %v630, %v634
    %v653 = vunpack.c.l.b16 %v614
    %v654 = vunpack.c.l.b16 %v615
    %v655 = vunpack.c.l.b16 %v616
    %v656 = vunpack.c.l.b16 %v617
    %v657 = vunpack.c.l.b16 %v618
    %v658 = vunpack.c.l.b16 %v619
    %v659 = vunpack.c.l.b16 %v620
    %v660 = vunpack.c.l.b16 %v621
    %v661 = vunpack.c.l.b16 %v622
    %v662 = vunpack.c.l.b16 %v623
    %v663 = vunpack.c.l.b16 %v624
    %v664 = vunpack.c.l.b16 %v625
    %v665 = vunpack.c.l.b16 %v626
    %v666 = vunpack.c.l.b16 %v627
    %v667 = vunpack.c.l.b16 %v628
    %v668 = vunpack.c.l.b16 %v629
    %v669 = vpack.c.b16 %v654, %v653
    %v670 = vpack.c.b16 %v656, %v655
    %v671 = vpack.c.b16 %v658, %v657
    %v672 = vpack.c.b16 %v660, %v659
    %v673 = vpack.c.b16 %v662, %v661
    %v674 = vpack.c.b16 %v664, %v663
    %v675 = vpack.c.b16 %v666, %v665
    %v676 = vpack.c.b16 %v668, %v667
    %685 = vmatprep.subr.bf16.mxu0 0
    %686 = vmatpush1.bf16.msra.mxu0 %v669
    %687 = vmatprep.subr.bf16.mxu0 0
    %688 = vmatpush1.bf16.msra.mxu0 %v670
    %689 = vmatprep.subr.bf16.mxu0 0
    %690 = vmatpush1.bf16.msra.mxu0 %v671
    %691 = vmatprep.subr.bf16.mxu0 0
    %692 = vmatpush1.bf16.msra.mxu0 %v672
    %693 = vmatprep.subr.bf16.mxu0 0
    %694 = vmatpush1.bf16.msra.mxu0 %v673
    %695 = vmatprep.subr.bf16.mxu0 0
    %696 = vmatpush1.bf16.msra.mxu0 %v674
    %697 = vmatprep.subr.bf16.mxu0 0
    %698 = vmatpush1.bf16.msra.mxu0 %v675
    %699 = vmatprep.subr.bf16.mxu0 0
    %700 = vmatpush1.bf16.msra.mxu0 %v676
    %701 = vmatprep.subr.bf16.mxu0 0
    %702 = vmatpush1.bf16.msra.mxu0 0
    %703 = vmatprep.subr.bf16.mxu0 0
    %704 = vmatpush1.bf16.msra.mxu0 0
    %705 = vmatprep.subr.bf16.mxu0 0
    %706 = vmatpush1.bf16.msra.mxu0 0
    %707 = vmatprep.subr.bf16.mxu0 0
    %708 = vmatpush1.bf16.msra.mxu0 0
    %709 = vmatprep.subr.bf16.mxu0 0
    %710 = vmatpush1.bf16.msra.mxu0 0
    %711 = vmatprep.subr.bf16.mxu0 0
    %712 = vmatpush1.bf16.msra.mxu0 0
    %713 = vmatprep.subr.bf16.mxu0 0
    %714 = vmatpush1.bf16.msra.mxu0 0
    %715 = vmatprep.subr.bf16.mxu0 0
    %716 = vmatpush1.bf16.msra.mxu0 0
    %717 = vmatprep.mubr.bf16.mxu0 0
    %718 = vmatmul.mubr.bf16.gmra.mrb[0].mxu0 %v134
    %v719 = vpop.f32.mrb[0].mxu0
    %v720 = vadd.f32 %v635, %v719
    %v721 = vpop.f32.mrb[0].mxu0
    %v722 = vpop.f32.mrb[0].mxu0
    %v723 = vadd.f32 %v635, %v722
    %v724 = vpop.f32.mrb[0].mxu0
    %725 = vmatprep.mubr.bf16.mxu0 0
    %726 = vmatmul.mubr.bf16.gmra.mrb[0].mxu0 %v135
    %v727 = vpop.f32.mrb[0].mxu0
    %v728 = vadd.f32 %v635, %v727
    %v729 = vpop.f32.mrb[0].mxu0
    %v730 = vpop.f32.mrb[0].mxu0
    %v731 = vadd.f32 %v635, %v730
    %v732 = vpop.f32.mrb[0].mxu0
    %733 = vmatprep.mubr.bf16.mxu0 0
    %734 = vmatmul.mubr.bf16.gmra.mrb[0].mxu0 %v136
    %v735 = vpop.f32.mrb[0].mxu0
    %v736 = vadd.f32 %v635, %v735
    %v737 = vpop.f32.mrb[0].mxu0
    %v738 = vpop.f32.mrb[0].mxu0
    %v739 = vadd.f32 %v635, %v738
    %v740 = vpop.f32.mrb[0].mxu0
    %741 = vmatprep.mubr.bf16.mxu0 0
    %742 = vmatmul.mubr.bf16.gmra.mrb[0].mxu0 %v137
    %v743 = vpop.f32.mrb[0].mxu0
    %v744 = vadd.f32 %v635, %v743
    %v745 = vpop.f32.mrb[0].mxu0
    %v746 = vpop.f32.mrb[0].mxu0
    %v747 = vadd.f32 %v635, %v746
    %v748 = vpop.f32.mrb[0].mxu0
    %749 = vmatprep.mubr.bf16.mxu0 0
    %750 = vmatmul.mubr.bf16.gmra.mrb[0].mxu0 %v138
    %v751 = vpop.f32.mrb[0].mxu0
    %v752 = vadd.f32 %v635, %v751
    %v753 = vpop.f32.mrb[0].mxu0
    %v754 = vpop.f32.mrb[0].mxu0
    %v755 = vadd.f32 %v635, %v754
    %v756 = vpop.f32.mrb[0].mxu0
    %757 = vmatprep.mubr.bf16.mxu0 0
    %758 = vmatmul.mubr.bf16.gmra.mrb[0].mxu0 %v139
    %v759 = vpop.f32.mrb[0].mxu0
    %v760 = vadd.f32 %v635, %v759
    %v761 = vpop.f32.mrb[0].mxu0
    %v762 = vpop.f32.mrb[0].mxu0
    %v763 = vadd.f32 %v635, %v762
    %v764 = vpop.f32.mrb[0].mxu0
    %765 = vmatprep.mubr.bf16.mxu0 0
    %766 = vmatmul.mubr.bf16.gmra.mrb[0].mxu0 %v140
    %v767 = vpop.f32.mrb[0].mxu0
    %v768 = vadd.f32 %v635, %v767
    %v769 = vpop.f32.mrb[0].mxu0
    %v770 = vpop.f32.mrb[0].mxu0
    %v771 = vadd.f32 %v635, %v770
    %v772 = vpop.f32.mrb[0].mxu0
    %773 = vmatprep.mubr.bf16.mxu0 0
    %774 = vmatmul.mubr.bf16.gmra.mrb[0].mxu0 %v141
    %v775 = vpop.f32.mrb[0].mxu0
    %v776 = vadd.f32 %v635, %v775
    %v777 = vpop.f32.mrb[0].mxu0
    %v778 = vpop.f32.mrb[0].mxu0
    %v779 = vadd.f32 %v635, %v778
    %v780 = vpop.f32.mrb[0].mxu0
    %781 = vmatprep.mubr.bf16.mxu0 0
    %782 = vmatmul.mubr.bf16.gmra.mrb[0].mxu0 %v142
    %v783 = vpop.f32.mrb[0].mxu0
    %v784 = vadd.f32 %v635, %v783
    %v785 = vpop.f32.mrb[0].mxu0
    %v786 = vpop.f32.mrb[0].mxu0
    %v787 = vadd.f32 %v635, %v786
    %v788 = vpop.f32.mrb[0].mxu0
    %789 = vmatprep.mubr.bf16.mxu0 0
    %790 = vmatmul.mubr.bf16.gmra.mrb[0].mxu0 %v143
    %v791 = vpop.f32.mrb[0].mxu0
    %v792 = vadd.f32 %v635, %v791
    %v793 = vpop.f32.mrb[0].mxu0
    %v794 = vpop.f32.mrb[0].mxu0
    %v795 = vadd.f32 %v635, %v794
    %v796 = vpop.f32.mrb[0].mxu0
    %797 = vmatprep.mubr.bf16.mxu0 0
    %798 = vmatmul.mubr.bf16.gmra.mrb[0].mxu0 %v144
    %v799 = vpop.f32.mrb[0].mxu0
    %v800 = vadd.f32 %v635, %v799
    %v801 = vpop.f32.mrb[0].mxu0
    %v802 = vpop.f32.mrb[0].mxu0
    %v803 = vadd.f32 %v635, %v802
    %v804 = vpop.f32.mrb[0].mxu0
    %805 = vmatprep.mubr.bf16.mxu0 0
    %806 = vmatmul.mubr.bf16.gmra.mrb[0].mxu0 %v145
    %v807 = vpop.f32.mrb[0].mxu0
    %v808 = vadd.f32 %v635, %v807
    %v809 = vpop.f32.mrb[0].mxu0
    %v810 = vpop.f32.mrb[0].mxu0
    %v811 = vadd.f32 %v635, %v810
    %v812 = vpop.f32.mrb[0].mxu0
    %813 = vmatprep.mubr.bf16.mxu0 0
    %814 = vmatmul.mubr.bf16.gmra.mrb[0].mxu0 %v146
    %v815 = vpop.f32.mrb[0].mxu0
    %v816 = vadd.f32 %v635, %v815
    %v817 = vpop.f32.mrb[0].mxu0
    %v818 = vpop.f32.mrb[0].mxu0
    %v819 = vadd.f32 %v635, %v818
    %v820 = vpop.f32.mrb[0].mxu0
    %821 = vmatprep.mubr.bf16.mxu0 0
    %822 = vmatmul.mubr.bf16.gmra.mrb[0].mxu0 %v147
    %v823 = vpop.f32.mrb[0].mxu0
    %v824 = vadd.f32 %v635, %v823
    %v825 = vpop.f32.mrb[0].mxu0
    %v826 = vpop.f32.mrb[0].mxu0
    %v827 = vadd.f32 %v635, %v826
    %v828 = vpop.f32.mrb[0].mxu0
    %829 = vmatprep.mubr.bf16.mxu0 0
    %830 = vmatmul.mubr.bf16.gmra.mrb[0].mxu0 %v148
    %v831 = vpop.f32.mrb[0].mxu0
    %v832 = vadd.f32 %v635, %v831
    %v833 = vpop.f32.mrb[0].mxu0
    %v834 = vpop.f32.mrb[0].mxu0
    %v835 = vadd.f32 %v635, %v834
    %v836 = vpop.f32.mrb[0].mxu0
    %837 = vmatprep.mubr.bf16.mxu0 0
    %838 = vmatmul.mubr.bf16.gmra.mrb[0].mxu0 %v149
    %v839 = vpop.f32.mrb[0].mxu0
    %v840 = vadd.f32 %v635, %v839
    %v841 = vpop.f32.mrb[0].mxu0
    %v842 = vpop.f32.mrb[0].mxu0
    %v843 = vadd.f32 %v635, %v842
    %v844 = vpop.f32.mrb[0].mxu0
    %845 = vdwg.mxu0
    %v846 = vmul.f32 %v256, 0.17677669
    %v847 = vmul.f32 %v259, 0.17677669
    %v848 = vmul.f32 %v264, 0.17677669
    %v849 = vmul.f32 %v267, 0.17677669
    %v850 = vmul.f32 %v272, 0.17677669
    %v851 = vmul.f32 %v275, 0.17677669
    %v852 = vmul.f32 %v280, 0.17677669
    %v853 = vmul.f32 %v283, 0.17677669
    %v854 = vmul.f32 %v288, 0.17677669
    %v855 = vmul.f32 %v291, 0.17677669
    %v856 = vmul.f32 %v296, 0.17677669
    %v857 = vmul.f32 %v299, 0.17677669
    %v858 = vmul.f32 %v304, 0.17677669
    %v859 = vmul.f32 %v307, 0.17677669
    %v860 = vmul.f32 %v312, 0.17677669
    %v861 = vmul.f32 %v315, 0.17677669
    %v862 = vmul.f32 %v320, 0.17677669
    %v863 = vmul.f32 %v323, 0.17677669
    %v864 = vmul.f32 %v328, 0.17677669
    %v865 = vmul.f32 %v331, 0.17677669
    %v866 = vmul.f32 %v336, 0.17677669
    %v867 = vmul.f32 %v339, 0.17677669
    %v868 = vmul.f32 %v344, 0.17677669
    %v869 = vmul.f32 %v347, 0.17677669
    %v870 = vmul.f32 %v352, 0.17677669
    %v871 = vmul.f32 %v355, 0.17677669
    %v872 = vmul.f32 %v360, 0.17677669
    %v873 = vmul.f32 %v363, 0.17677669
    %v874 = vmul.f32 %v368, 0.17677669
    %v875 = vmul.f32 %v371, 0.17677669
    %v876 = vmul.f32 %v376, 0.17677669
    %v877 = vmul.f32 %v379, 0.17677669
    %v878 = vpack.c.bf16 %v847, %v846
    %v879 = vpack.c.bf16 %v849, %v848
    %v880 = vpack.c.bf16 %v851, %v850
    %v881 = vpack.c.bf16 %v853, %v852
    %v882 = vpack.c.bf16 %v855, %v854
    %v883 = vpack.c.bf16 %v857, %v856
    %v884 = vpack.c.bf16 %v859, %v858
    %v885 = vpack.c.bf16 %v861, %v860
    %v886 = vpack.c.bf16 %v863, %v862
    %v887 = vpack.c.bf16 %v865, %v864
    %v888 = vpack.c.bf16 %v867, %v866
    %v889 = vpack.c.bf16 %v869, %v868
    %v890 = vpack.c.bf16 %v871, %v870
    %v891 = vpack.c.bf16 %v873, %v872
    %v892 = vpack.c.bf16 %v875, %v874
    %v893 = vpack.c.bf16 %v877, %v876
    %894 = vst [vmem:[#allocation2] sm:$0xff] %v878
    %895 = vst [vmem:[#allocation2 + $0x8] sm:$0xff] %v879
    %896 = vst [vmem:[#allocation2 + $0x10] sm:$0xff] %v880
    %897 = vst [vmem:[#allocation2 + $0x18] sm:$0xff] %v881
    %898 = vst [vmem:[#allocation2 + $0x20] sm:$0xff] %v882
    %899 = vst [vmem:[#allocation2 + $0x28] sm:$0xff] %v883
    %900 = vst [vmem:[#allocation2 + $0x30] sm:$0xff] %v884
    %901 = vst [vmem:[#allocation2 + $0x38] sm:$0xff] %v885
    %902 = vst [vmem:[#allocation2 + $0x40] sm:$0xff] %v886
    %903 = vst [vmem:[#allocation2 + $0x48] sm:$0xff] %v887
    %904 = vst [vmem:[#allocation2 + $0x50] sm:$0xff] %v888
    %905 = vst [vmem:[#allocation2 + $0x58] sm:$0xff] %v889
    %906 = vst [vmem:[#allocation2 + $0x60] sm:$0xff] %v890
    %907 = vst [vmem:[#allocation2 + $0x68] sm:$0xff] %v891
    %908 = vst [vmem:[#allocation2 + $0x70] sm:$0xff] %v892
    %909 = vst [vmem:[#allocation2 + $0x78] sm:$0xff] %v893
    %v910 = vpack.c.bf16 %v491, %v488
    %v911 = vpack.c.bf16 %v499, %v496
    %v912 = vpack.c.bf16 %v507, %v504
    %v913 = vpack.c.bf16 %v515, %v512
    %v914 = vpack.c.bf16 %v523, %v520
    %v915 = vpack.c.bf16 %v531, %v528
    %v916 = vpack.c.bf16 %v539, %v536
    %v917 = vpack.c.bf16 %v547, %v544
    %v918 = vpack.c.bf16 %v555, %v552
    %v919 = vpack.c.bf16 %v563, %v560
    %v920 = vpack.c.bf16 %v571, %v568
    %v921 = vpack.c.bf16 %v579, %v576
    %v922 = vpack.c.bf16 %v587, %v584
    %v923 = vpack.c.bf16 %v595, %v592
    %v924 = vpack.c.bf16 %v603, %v600
    %v925 = vpack.c.bf16 %v611, %v608
    %926 = vst [vmem:[#allocation3] sm:$0xff] %v910
    %927 = vst [vmem:[#allocation3 + $0x8] sm:$0xff] %v911
    %928 = vst [vmem:[#allocation3 + $0x10] sm:$0xff] %v912
    %929 = vst [vmem:[#allocation3 + $0x18] sm:$0xff] %v913
    %930 = vst [vmem:[#allocation3 + $0x20] sm:$0xff] %v914
    %931 = vst [vmem:[#allocation3 + $0x28] sm:$0xff] %v915
    %932 = vst [vmem:[#allocation3 + $0x30] sm:$0xff] %v916
    %933 = vst [vmem:[#allocation3 + $0x38] sm:$0xff] %v917
    %934 = vst [vmem:[#allocation3 + $0x40] sm:$0xff] %v918
    %935 = vst [vmem:[#allocation3 + $0x48] sm:$0xff] %v919
    %936 = vst [vmem:[#allocation3 + $0x50] sm:$0xff] %v920
    %937 = vst [vmem:[#allocation3 + $0x58] sm:$0xff] %v921
    %938 = vst [vmem:[#allocation3 + $0x60] sm:$0xff] %v922
    %939 = vst [vmem:[#allocation3 + $0x68] sm:$0xff] %v923
    %940 = vst [vmem:[#allocation3 + $0x70] sm:$0xff] %v924
    %941 = vst [vmem:[#allocation3 + $0x78] sm:$0xff] %v925
    %v942 = vpack.c.bf16 %v723, %v720
    %v943 = vpack.c.bf16 %v731, %v728
    %v944 = vpack.c.bf16 %v739, %v736
    %v945 = vpack.c.bf16 %v747, %v744
    %v946 = vpack.c.bf16 %v755, %v752
    %v947 = vpack.c.bf16 %v763, %v760
    %v948 = vpack.c.bf16 %v771, %v768
    %v949 = vpack.c.bf16 %v779, %v776
    %v950 = vpack.c.bf16 %v787, %v784
    %v951 = vpack.c.bf16 %v795, %v792
    %v952 = vpack.c.bf16 %v803, %v800
    %v953 = vpack.c.bf16 %v811, %v808
    %v954 = vpack.c.bf16 %v819, %v816
    %v955 = vpack.c.bf16 %v827, %v824
    %v956 = vpack.c.bf16 %v835, %v832
    %v957 = vpack.c.bf16 %v843, %v840
    %958 = vst [vmem:[#allocation4] sm:$0xff] %v942
    %959 = vst [vmem:[#allocation4 + $0x8] sm:$0xff] %v943
    %960 = vst [vmem:[#allocation4 + $0x10] sm:$0xff] %v944
    %961 = vst [vmem:[#allocation4 + $0x18] sm:$0xff] %v945
    %962 = vst [vmem:[#allocation4 + $0x20] sm:$0xff] %v946
    %963 = vst [vmem:[#allocation4 + $0x28] sm:$0xff] %v947
    %964 = vst [vmem:[#allocation4 + $0x30] sm:$0xff] %v948
    %965 = vst [vmem:[#allocation4 + $0x38] sm:$0xff] %v949
    %966 = vst [vmem:[#allocation4 + $0x40] sm:$0xff] %v950
    %967 = vst [vmem:[#allocation4 + $0x48] sm:$0xff] %v951
    %968 = vst [vmem:[#allocation4 + $0x50] sm:$0xff] %v952
    %969 = vst [vmem:[#allocation4 + $0x58] sm:$0xff] %v953
    %970 = vst [vmem:[#allocation4 + $0x60] sm:$0xff] %v954
    %971 = vst [vmem:[#allocation4 + $0x68] sm:$0xff] %v955
    %972 = vst [vmem:[#allocation4 + $0x70] sm:$0xff] %v956
    %973 = vst [vmem:[#allocation4 + $0x78] sm:$0xff] %v957
    %v974 = vld [vmem:[#allocation2] sm:$0xff]
    %v975 = vld [vmem:[#allocation2 + $0x8] sm:$0xff]
    %v976 = vld [vmem:[#allocation2 + $0x10] sm:$0xff]
    %v977 = vld [vmem:[#allocation2 + $0x18] sm:$0xff]
    %v978 = vld [vmem:[#allocation2 + $0x20] sm:$0xff]
    %v979 = vld [vmem:[#allocation2 + $0x28] sm:$0xff]
    %v980 = vld [vmem:[#allocation2 + $0x30] sm:$0xff]
    %v981 = vld [vmem:[#allocation2 + $0x38] sm:$0xff]
    %v982 = vld [vmem:[#allocation2 + $0x40] sm:$0xff]
    %v983 = vld [vmem:[#allocation2 + $0x48] sm:$0xff]
    %v984 = vld [vmem:[#allocation2 + $0x50] sm:$0xff]
    %v985 = vld [vmem:[#allocation2 + $0x58] sm:$0xff]
    %v986 = vld [vmem:[#allocation2 + $0x60] sm:$0xff]
    %v987 = vld [vmem:[#allocation2 + $0x68] sm:$0xff]
    %v988 = vld [vmem:[#allocation2 + $0x70] sm:$0xff]
    %v989 = vld [vmem:[#allocation2 + $0x78] sm:$0xff]
    %v990 = vld [vmem:[#allocation3] sm:$0xff]
    %v991 = vld [vmem:[#allocation3 + $0x8] sm:$0xff]
    %v992 = vld [vmem:[#allocation3 + $0x10] sm:$0xff]
    %v993 = vld [vmem:[#allocation3 + $0x18] sm:$0xff]
    %v994 = vld [vmem:[#allocation3 + $0x20] sm:$0xff]
    %v995 = vld [vmem:[#allocation3 + $0x28] sm:$0xff]
    %v996 = vld [vmem:[#allocation3 + $0x30] sm:$0xff]
    %v997 = vld [vmem:[#allocation3 + $0x38] sm:$0xff]
    %v998 = vld [vmem:[#allocation3 + $0x40] sm:$0xff]
    %v999 = vld [vmem:[#allocation3 + $0x48] sm:$0xff]
    %v1000 = vld [vmem:[#allocation3 + $0x50] sm:$0xff]
    %v1001 = vld [vmem:[#allocation3 + $0x58] sm:$0xff]
    %v1002 = vld [vmem:[#allocation3 + $0x60] sm:$0xff]
    %v1003 = vld [vmem:[#allocation3 + $0x68] sm:$0xff]
    %v1004 = vld [vmem:[#allocation3 + $0x70] sm:$0xff]
    %v1005 = vld [vmem:[#allocation3 + $0x78] sm:$0xff]
    %v1006 = vld [vmem:[#allocation4] sm:$0xff]
    %v1007 = vld [vmem:[#allocation4 + $0x8] sm:$0xff]
    %v1008 = vld [vmem:[#allocation4 + $0x10] sm:$0xff]
    %v1009 = vld [vmem:[#allocation4 + $0x18] sm:$0xff]
    %v1010 = vld [vmem:[#allocation4 + $0x20] sm:$0xff]
    %v1011 = vld [vmem:[#allocation4 + $0x28] sm:$0xff]
    %v1012 = vld [vmem:[#allocation4 + $0x30] sm:$0xff]
    %v1013 = vld [vmem:[#allocation4 + $0x38] sm:$0xff]
    %v1014 = vld [vmem:[#allocation4 + $0x40] sm:$0xff]
    %v1015 = vld [vmem:[#allocation4 + $0x48] sm:$0xff]
    %v1016 = vld [vmem:[#allocation4 + $0x50] sm:$0xff]
    %v1017 = vld [vmem:[#allocation4 + $0x58] sm:$0xff]
    %v1018 = vld [vmem:[#allocation4 + $0x60] sm:$0xff]
    %v1019 = vld [vmem:[#allocation4 + $0x68] sm:$0xff]
    %v1020 = vld [vmem:[#allocation4 + $0x70] sm:$0xff]
    %v1021 = vld [vmem:[#allocation4 + $0x78] sm:$0xff]
    %vm1022 = vcmask 261120
    %v1024 = vsel %vm1022, %v974, 0
    %v1027 = vsel %vm1022, %v975, 0
    %v1030 = vsel %vm1022, %v976, 0
    %v1033 = vsel %vm1022, %v977, 0
    %v1036 = vsel %vm1022, %v978, 0
    %v1039 = vsel %vm1022, %v979, 0
    %v1042 = vsel %vm1022, %v980, 0
    %v1045 = vsel %vm1022, %v981, 0
    %v1048 = vsel %vm1022, %v990, 0
    %v1051 = vsel %vm1022, %v991, 0
    %v1054 = vsel %vm1022, %v992, 0
    %v1057 = vsel %vm1022, %v993, 0
    %v1060 = vsel %vm1022, %v994, 0
    %v1063 = vsel %vm1022, %v995, 0
    %v1066 = vsel %vm1022, %v996, 0
    %v1069 = vsel %vm1022, %v997, 0
    %1071 = vmatprep.subr.bf16.mxu0 0
    %1072 = vmatpush1.bf16.xpose.msra.mxu0 %v1048
    %1073 = vmatprep.subr.bf16.mxu0 0
    %1074 = vmatpush1.bf16.xpose.msra.mxu0 %v1051
    %1075 = vmatprep.subr.bf16.mxu0 0
    %1076 = vmatpush1.bf16.xpose.msra.mxu0 %v1054
    %1077 = vmatprep.subr.bf16.mxu0 0
    %1078 = vmatpush1.bf16.xpose.msra.mxu0 %v1057
    %1079 = vmatprep.subr.bf16.mxu0 0
    %1080 = vmatpush1.bf16.xpose.msra.mxu0 %v1060
    %1081 = vmatprep.subr.bf16.mxu0 0
    %1082 = vmatpush1.bf16.xpose.msra.mxu0 %v1063
    %1083 = vmatprep.subr.bf16.mxu0 0
    %1084 = vmatpush1.bf16.xpose.msra.mxu0 %v1066
    %1085 = vmatprep.subr.bf16.mxu0 0
    %1086 = vmatpush1.bf16.xpose.msra.mxu0 %v1069
    %1087 = vmatprep.subr.bf16.mxu0 0
    %1088 = vmatpush1.bf16.xpose.msra.mxu0 0
    %1089 = vmatprep.subr.bf16.mxu0 0
    %1090 = vmatpush1.bf16.xpose.msra.mxu0 0
    %1091 = vmatprep.subr.bf16.mxu0 0
    %1092 = vmatpush1.bf16.xpose.msra.mxu0 0
    %1093 = vmatprep.subr.bf16.mxu0 0
    %1094 = vmatpush1.bf16.xpose.msra.mxu0 0
    %1095 = vmatprep.subr.bf16.mxu0 0
    %1096 = vmatpush1.bf16.xpose.msra.mxu0 0
    %1097 = vmatprep.subr.bf16.mxu0 0
    %1098 = vmatpush1.bf16.xpose.msra.mxu0 0
    %1099 = vmatprep.subr.bf16.mxu0 0
    %1100 = vmatpush1.bf16.xpose.msra.mxu0 0
    %1101 = vmatprep.subr.bf16.mxu0 0
    %1102 = vmatpush1.bf16.xpose.msra.mxu0 0
    %1103 = vmatprep.mubr.bf16.mxu0 0
    %1104 = vmatmul.mubr.bf16.gmra.mrb[0].mxu0 %v1024
    %v1105 = vpop.f32.mrb[0].mxu0
    %v1106 = vadd.f32 0.0, %v1105
    %v1107 = vpop.f32.mrb[0].mxu0
    %v1108 = vpop.f32.mrb[0].mxu0
    %v1109 = vadd.f32 0.0, %v1108
    %v1110 = vpop.f32.mrb[0].mxu0
    %1111 = vmatprep.mubr.bf16.mxu0 0
    %1112 = vmatmul.mubr.bf16.gmra.mrb[0].mxu0 %v1027
    %v1113 = vpop.f32.mrb[0].mxu0
    %v1114 = vadd.f32 0.0, %v1113
    %v1115 = vpop.f32.mrb[0].mxu0
    %v1116 = vpop.f32.mrb[0].mxu0
    %v1117 = vadd.f32 0.0, %v1116
    %v1118 = vpop.f32.mrb[0].mxu0
    %1119 = vmatprep.mubr.bf16.mxu0 0
    %1120 = vmatmul.mubr.bf16.gmra.mrb[0].mxu0 %v1030
    %v1121 = vpop.f32.mrb[0].mxu0
    %v1122 = vadd.f32 0.0, %v1121
    %v1123 = vpop.f32.mrb[0].mxu0
    %v1124 = vpop.f32.mrb[0].mxu0
    %v1125 = vadd.f32 0.0, %v1124
    %v1126 = vpop.f32.mrb[0].mxu0
    %1127 = vmatprep.mubr.bf16.mxu0 0
    %1128 = vmatmul.mubr.bf16.gmra.mrb[0].mxu0 %v1033
    %v1129 = vpop.f32.mrb[0].mxu0
    %v1130 = vadd.f32 0.0, %v1129
    %v1131 = vpop.f32.mrb[0].mxu0
    %v1132 = vpop.f32.mrb[0].mxu0
    %v1133 = vadd.f32 0.0, %v1132
    %v1134 = vpop.f32.mrb[0].mxu0
    %1135 = vmatprep.mubr.bf16.mxu0 0
    %1136 = vmatmul.mubr.bf16.gmra.mrb[0].mxu0 %v1036
    %v1137 = vpop.f32.mrb[0].mxu0
    %v1138 = vadd.f32 0.0, %v1137
    %v1139 = vpop.f32.mrb[0].mxu0
    %v1140 = vpop.f32.mrb[0].mxu0
    %v1141 = vadd.f32 0.0, %v1140
    %v1142 = vpop.f32.mrb[0].mxu0
    %1143 = vmatprep.mubr.bf16.mxu0 0
    %1144 = vmatmul.mubr.bf16.gmra.mrb[0].mxu0 %v1039
    %v1145 = vpop.f32.mrb[0].mxu0
    %v1146 = vadd.f32 0.0, %v1145
    %v1147 = vpop.f32.mrb[0].mxu0
    %v1148 = vpop.f32.mrb[0].mxu0
    %v1149 = vadd.f32 0.0, %v1148
    %v1150 = vpop.f32.mrb[0].mxu0
    %1151 = vmatprep.mubr.bf16.mxu0 0
    %1152 = vmatmul.mubr.bf16.gmra.mrb[0].mxu0 %v1042
    %v1153 = vpop.f32.mrb[0].mxu0
    %v1154 = vadd.f32 0.0, %v1153
    %v1155 = vpop.f32.mrb[0].mxu0
    %v1156 = vpop.f32.mrb[0].mxu0
    %v1157 = vadd.f32 0.0, %v1156
    %v1158 = vpop.f32.mrb[0].mxu0
    %1159 = vmatprep.mubr.bf16.mxu0 0
    %1160 = vmatmul.mubr.bf16.gmra.mrb[0].mxu0 %v1045
    %v1161 = vpop.f32.mrb[0].mxu0
    %v1162 = vadd.f32 0.0, %v1161
    %v1163 = vpop.f32.mrb[0].mxu0
    %v1164 = vpop.f32.mrb[0].mxu0
    %v1165 = vadd.f32 0.0, %v1164
    %v1166 = vpop.f32.mrb[0].mxu0
    %1167 = vdwg.mxu0
    %v1169 = vsel %vm1022, %v982, 0
    %v1172 = vsel %vm1022, %v983, 0
    %v1175 = vsel %vm1022, %v984, 0
    %v1178 = vsel %vm1022, %v985, 0
    %v1181 = vsel %vm1022, %v986, 0
    %v1184 = vsel %vm1022, %v987, 0
    %v1187 = vsel %vm1022, %v988, 0
    %v1190 = vsel %vm1022, %v989, 0
    %v1193 = vsel %vm1022, %v998, 0
    %v1196 = vsel %vm1022, %v999, 0
    %v1199 = vsel %vm1022, %v1000, 0
    %v1202 = vsel %vm1022, %v1001, 0
    %v1205 = vsel %vm1022, %v1002, 0
    %v1208 = vsel %vm1022, %v1003, 0
    %v1211 = vsel %vm1022, %v1004, 0
    %v1214 = vsel %vm1022, %v1005, 0
    %1216 = vmatprep.subr.bf16.mxu0 0
    %1217 = vmatpush1.bf16.xpose.msra.mxu0 %v1193
    %1218 = vmatprep.subr.bf16.mxu0 0
    %1219 = vmatpush1.bf16.xpose.msra.mxu0 %v1196
    %1220 = vmatprep.subr.bf16.mxu0 0
    %1221 = vmatpush1.bf16.xpose.msra.mxu0 %v1199
    %1222 = vmatprep.subr.bf16.mxu0 0
    %1223 = vmatpush1.bf16.xpose.msra.mxu0 %v1202
    %1224 = vmatprep.subr.bf16.mxu0 0
    %1225 = vmatpush1.bf16.xpose.msra.mxu0 %v1205
    %1226 = vmatprep.subr.bf16.mxu0 0
    %1227 = vmatpush1.bf16.xpose.msra.mxu0 %v1208
    %1228 = vmatprep.subr.bf16.mxu0 0
    %1229 = vmatpush1.bf16.xpose.msra.mxu0 %v1211
    %1230 = vmatprep.subr.bf16.mxu0 0
    %1231 = vmatpush1.bf16.xpose.msra.mxu0 %v1214
    %1232 = vmatprep.subr.bf16.mxu0 0
    %1233 = vmatpush1.bf16.xpose.msra.mxu0 0
    %1234 = vmatprep.subr.bf16.mxu0 0
    %1235 = vmatpush1.bf16.xpose.msra.mxu0 0
    %1236 = vmatprep.subr.bf16.mxu0 0
    %1237 = vmatpush1.bf16.xpose.msra.mxu0 0
    %1238 = vmatprep.subr.bf16.mxu0 0
    %1239 = vmatpush1.bf16.xpose.msra.mxu0 0
    %1240 = vmatprep.subr.bf16.mxu0 0
    %1241 = vmatpush1.bf16.xpose.msra.mxu0 0
    %1242 = vmatprep.subr.bf16.mxu0 0
    %1243 = vmatpush1.bf16.xpose.msra.mxu0 0
    %1244 = vmatprep.subr.bf16.mxu0 0
    %1245 = vmatpush1.bf16.xpose.msra.mxu0 0
    %1246 = vmatprep.subr.bf16.mxu0 0
    %1247 = vmatpush1.bf16.xpose.msra.mxu0 0
    %1248 = vmatprep.mubr.bf16.mxu0 0
    %1249 = vmatmul.mubr.bf16.gmra.mrb[0].mxu0 %v1169
    %v1250 = vpop.f32.mrb[0].mxu0
    %v1251 = vadd.f32 0.0, %v1250
    %v1252 = vpop.f32.mrb[0].mxu0
    %v1253 = vpop.f32.mrb[0].mxu0
    %v1254 = vadd.f32 0.0, %v1253
    %v1255 = vpop.f32.mrb[0].mxu0
    %1256 = vmatprep.mubr.bf16.mxu0 0
    %1257 = vmatmul.mubr.bf16.gmra.mrb[0].mxu0 %v1172
    %v1258 = vpop.f32.mrb[0].mxu0
    %v1259 = vadd.f32 0.0, %v1258
    %v1260 = vpop.f32.mrb[0].mxu0
    %v1261 = vpop.f32.mrb[0].mxu0
    %v1262 = vadd.f32 0.0, %v1261
    %v1263 = vpop.f32.mrb[0].mxu0
    %1264 = vmatprep.mubr.bf16.mxu0 0
    %1265 = vmatmul.mubr.bf16.gmra.mrb[0].mxu0 %v1175
    %v1266 = vpop.f32.mrb[0].mxu0
    %v1267 = vadd.f32 0.0, %v1266
    %v1268 = vpop.f32.mrb[0].mxu0
    %v1269 = vpop.f32.mrb[0].mxu0
    %v1270 = vadd.f32 0.0, %v1269
    %v1271 = vpop.f32.mrb[0].mxu0
    %1272 = vmatprep.mubr.bf16.mxu0 0
    %1273 = vmatmul.mubr.bf16.gmra.mrb[0].mxu0 %v1178
    %v1274 = vpop.f32.mrb[0].mxu0
    %v1275 = vadd.f32 0.0, %v1274
    %v1276 = vpop.f32.mrb[0].mxu0
    %v1277 = vpop.f32.mrb[0].mxu0
    %v1278 = vadd.f32 0.0, %v1277
    %v1279 = vpop.f32.mrb[0].mxu0
    %1280 = vmatprep.mubr.bf16.mxu0 0
    %1281 = vmatmul.mubr.bf16.gmra.mrb[0].mxu0 %v1181
    %v1282 = vpop.f32.mrb[0].mxu0
    %v1283 = vadd.f32 0.0, %v1282
    %v1284 = vpop.f32.mrb[0].mxu0
    %v1285 = vpop.f32.mrb[0].mxu0
    %v1286 = vadd.f32 0.0, %v1285
    %v1287 = vpop.f32.mrb[0].mxu0
    %1288 = vmatprep.mubr.bf16.mxu0 0
    %1289 = vmatmul.mubr.bf16.gmra.mrb[0].mxu0 %v1184
    %v1290 = vpop.f32.mrb[0].mxu0
    %v1291 = vadd.f32 0.0, %v1290
    %v1292 = vpop.f32.mrb[0].mxu0
    %v1293 = vpop.f32.mrb[0].mxu0
    %v1294 = vadd.f32 0.0, %v1293
    %v1295 = vpop.f32.mrb[0].mxu0
    %1296 = vmatprep.mubr.bf16.mxu0 0
    %1297 = vmatmul.mubr.bf16.gmra.mrb[0].mxu0 %v1187
    %v1298 = vpop.f32.mrb[0].mxu0
    %v1299 = vadd.f32 0.0, %v1298
    %v1300 = vpop.f32.mrb[0].mxu0
    %v1301 = vpop.f32.mrb[0].mxu0
    %v1302 = vadd.f32 0.0, %v1301
    %v1303 = vpop.f32.mrb[0].mxu0
    %1304 = vmatprep.mubr.bf16.mxu0 0
    %1305 = vmatmul.mubr.bf16.gmra.mrb[0].mxu0 %v1190
    %v1306 = vpop.f32.mrb[0].mxu0
    %v1307 = vadd.f32 0.0, %v1306
    %v1308 = vpop.f32.mrb[0].mxu0
    %v1309 = vpop.f32.mrb[0].mxu0
    %v1310 = vadd.f32 0.0, %v1309
    %v1311 = vpop.f32.mrb[0].mxu0
    %1312 = vdwg.mxu0
    %1313 = vmax.xlane.f32.xlu0 %v1106
    %v1314 = vpop.xlane.xlu0 %1313
    %1315 = vmax.xlane.f32.xlu0 %v1109
    %v1316 = vpop.xlane.xlu0 %1315
    %1317 = vmax.xlane.f32.xlu0 %v1114
    %v1318 = vpop.xlane.xlu0 %1317
    %1319 = vmax.xlane.f32.xlu0 %v1117
    %v1320 = vpop.xlane.xlu0 %1319
    %1321 = vmax.xlane.f32.xlu0 %v1122
    %v1322 = vpop.xlane.xlu0 %1321
    %1323 = vmax.xlane.f32.xlu0 %v1125
    %v1324 = vpop.xlane.xlu0 %1323
    %1325 = vmax.xlane.f32.xlu0 %v1130
    %v1326 = vpop.xlane.xlu0 %1325
    %1327 = vmax.xlane.f32.xlu0 %v1133
    %v1328 = vpop.xlane.xlu0 %1327
    %1329 = vmax.xlane.f32.xlu0 %v1138
    %v1330 = vpop.xlane.xlu0 %1329
    %1331 = vmax.xlane.f32.xlu0 %v1141
    %v1332 = vpop.xlane.xlu0 %1331
    %1333 = vmax.xlane.f32.xlu0 %v1146
    %v1334 = vpop.xlane.xlu0 %1333
    %1335 = vmax.xlane.f32.xlu0 %v1149
    %v1336 = vpop.xlane.xlu0 %1335
    %1337 = vmax.xlane.f32.xlu0 %v1154
    %v1338 = vpop.xlane.xlu0 %1337
    %1339 = vmax.xlane.f32.xlu0 %v1157
    %v1340 = vpop.xlane.xlu0 %1339
    %1341 = vmax.xlane.f32.xlu0 %v1162
    %v1342 = vpop.xlane.xlu0 %1341
    %1343 = vmax.xlane.f32.xlu0 %v1165
    %v1344 = vpop.xlane.xlu0 %1343
    %1345 = vmax.xlane.f32.xlu0 %v1251
    %v1346 = vpop.xlane.xlu0 %1345
    %1347 = vmax.xlane.f32.xlu0 %v1254
    %v1348 = vpop.xlane.xlu0 %1347
    %1349 = vmax.xlane.f32.xlu0 %v1259
    %v1350 = vpop.xlane.xlu0 %1349
    %1351 = vmax.xlane.f32.xlu0 %v1262
    %v1352 = vpop.xlane.xlu0 %1351
    %1353 = vmax.xlane.f32.xlu0 %v1267
    %v1354 = vpop.xlane.xlu0 %1353
    %1355 = vmax.xlane.f32.xlu0 %v1270
    %v1356 = vpop.xlane.xlu0 %1355
    %1357 = vmax.xlane.f32.xlu0 %v1275
    %v1358 = vpop.xlane.xlu0 %1357
    %1359 = vmax.xlane.f32.xlu0 %v1278
    %v1360 = vpop.xlane.xlu0 %1359
    %1361 = vmax.xlane.f32.xlu0 %v1283
    %v1362 = vpop.xlane.xlu0 %1361
    %1363 = vmax.xlane.f32.xlu0 %v1286
    %v1364 = vpop.xlane.xlu0 %1363
    %1365 = vmax.xlane.f32.xlu0 %v1291
    %v1366 = vpop.xlane.xlu0 %1365
    %1367 = vmax.xlane.f32.xlu0 %v1294
    %v1368 = vpop.xlane.xlu0 %1367
    %1369 = vmax.xlane.f32.xlu0 %v1299
    %v1370 = vpop.xlane.xlu0 %1369
    %1371 = vmax.xlane.f32.xlu0 %v1302
    %v1372 = vpop.xlane.xlu0 %1371
    %1373 = vmax.xlane.f32.xlu0 %v1307
    %v1374 = vpop.xlane.xlu0 %1373
    %1375 = vmax.xlane.f32.xlu0 %v1310
    %v1376 = vpop.xlane.xlu0 %1375
    %v1377 = vsub.f32 %v1106, %v1314
    %v1378 = vsub.f32 %v1109, %v1316
    %v1379 = vsub.f32 %v1114, %v1318
    %v1380 = vsub.f32 %v1117, %v1320
    %v1381 = vsub.f32 %v1122, %v1322
    %v1382 = vsub.f32 %v1125, %v1324
    %v1383 = vsub.f32 %v1130, %v1326
    %v1384 = vsub.f32 %v1133, %v1328
    %v1385 = vsub.f32 %v1138, %v1330
    %v1386 = vsub.f32 %v1141, %v1332
    %v1387 = vsub.f32 %v1146, %v1334
    %v1388 = vsub.f32 %v1149, %v1336
    %v1389 = vsub.f32 %v1154, %v1338
    %v1390 = vsub.f32 %v1157, %v1340
    %v1391 = vsub.f32 %v1162, %v1342
    %v1392 = vsub.f32 %v1165, %v1344
    %v1393 = vsub.f32 %v1251, %v1346
    %v1394 = vsub.f32 %v1254, %v1348
    %v1395 = vsub.f32 %v1259, %v1350
    %v1396 = vsub.f32 %v1262, %v1352
    %v1397 = vsub.f32 %v1267, %v1354
    %v1398 = vsub.f32 %v1270, %v1356
    %v1399 = vsub.f32 %v1275, %v1358
    %v1400 = vsub.f32 %v1278, %v1360
    %v1401 = vsub.f32 %v1283, %v1362
    %v1402 = vsub.f32 %v1286, %v1364
    %v1403 = vsub.f32 %v1291, %v1366
    %v1404 = vsub.f32 %v1294, %v1368
    %v1405 = vsub.f32 %v1299, %v1370
    %v1406 = vsub.f32 %v1302, %v1372
    %v1407 = vsub.f32 %v1307, %v1374
    %v1408 = vsub.f32 %v1310, %v1376
    %v1409 = vmul.f32 %v1377, 1.442695
    %v1410 = vpow.pop %v1409
    %v1411 = vmul.f32 %v1378, 1.442695
    %v1412 = vpow.pop %v1411
    %v1413 = vmul.f32 %v1379, 1.442695
    %v1414 = vpow.pop %v1413
    %v1415 = vmul.f32 %v1380, 1.442695
    %v1416 = vpow.pop %v1415
    %v1417 = vmul.f32 %v1381, 1.442695
    %v1418 = vpow.pop %v1417
    %v1419 = vmul.f32 %v1382, 1.442695
    %v1420 = vpow.pop %v1419
    %v1421 = vmul.f32 %v1383, 1.442695
    %v1422 = vpow.pop %v1421
    %v1423 = vmul.f32 %v1384, 1.442695
    %v1424 = vpow.pop %v1423
    %v1425 = vmul.f32 %v1385, 1.442695
    %v1426 = vpow.pop %v1425
    %v1427 = vmul.f32 %v1386, 1.442695
    %v1428 = vpow.pop %v1427
    %v1429 = vmul.f32 %v1387, 1.442695
    %v1430 = vpow.pop %v1429
    %v1431 = vmul.f32 %v1388, 1.442695
    %v1432 = vpow.pop %v1431
    %v1433 = vmul.f32 %v1389, 1.442695
    %v1434 = vpow.pop %v1433
    %v1435 = vmul.f32 %v1390, 1.442695
    %v1436 = vpow.pop %v1435
    %v1437 = vmul.f32 %v1391, 1.442695
    %v1438 = vpow.pop %v1437
    %v1439 = vmul.f32 %v1392, 1.442695
    %v1440 = vpow.pop %v1439
    %v1441 = vmul.f32 %v1393, 1.442695
    %v1442 = vpow.pop %v1441
    %v1443 = vmul.f32 %v1394, 1.442695
    %v1444 = vpow.pop %v1443
    %v1445 = vmul.f32 %v1395, 1.442695
    %v1446 = vpow.pop %v1445
    %v1447 = vmul.f32 %v1396, 1.442695
    %v1448 = vpow.pop %v1447
    %v1449 = vmul.f32 %v1397, 1.442695
    %v1450 = vpow.pop %v1449
    %v1451 = vmul.f32 %v1398, 1.442695
    %v1452 = vpow.pop %v1451
    %v1453 = vmul.f32 %v1399, 1.442695
    %v1454 = vpow.pop %v1453
    %v1455 = vmul.f32 %v1400, 1.442695
    %v1456 = vpow.pop %v1455
    %v1457 = vmul.f32 %v1401, 1.442695
    %v1458 = vpow.pop %v1457
    %v1459 = vmul.f32 %v1402, 1.442695
    %v1460 = vpow.pop %v1459
    %v1461 = vmul.f32 %v1403, 1.442695
    %v1462 = vpow.pop %v1461
    %v1463 = vmul.f32 %v1404, 1.442695
    %v1464 = vpow.pop %v1463
    %v1465 = vmul.f32 %v1405, 1.442695
    %v1466 = vpow.pop %v1465
    %v1467 = vmul.f32 %v1406, 1.442695
    %v1468 = vpow.pop %v1467
    %v1469 = vmul.f32 %v1407, 1.442695
    %v1470 = vpow.pop %v1469
    %v1471 = vmul.f32 %v1408, 1.442695
    %v1472 = vpow.pop %v1471
    %1473 = vadd.xlane.f32.xlu0 %v1410
    %v1474 = vpop.xlane.xlu0 %1473
    %1475 = vadd.xlane.f32.xlu0 %v1412
    %v1476 = vpop.xlane.xlu0 %1475
    %1477 = vadd.xlane.f32.xlu0 %v1414
    %v1478 = vpop.xlane.xlu0 %1477
    %1479 = vadd.xlane.f32.xlu0 %v1416
    %v1480 = vpop.xlane.xlu0 %1479
    %1481 = vadd.xlane.f32.xlu0 %v1418
    %v1482 = vpop.xlane.xlu0 %1481
    %1483 = vadd.xlane.f32.xlu0 %v1420
    %v1484 = vpop.xlane.xlu0 %1483
    %1485 = vadd.xlane.f32.xlu0 %v1422
    %v1486 = vpop.xlane.xlu0 %1485
    %1487 = vadd.xlane.f32.xlu0 %v1424
    %v1488 = vpop.xlane.xlu0 %1487
    %1489 = vadd.xlane.f32.xlu0 %v1426
    %v1490 = vpop.xlane.xlu0 %1489
    %1491 = vadd.xlane.f32.xlu0 %v1428
    %v1492 = vpop.xlane.xlu0 %1491
    %1493 = vadd.xlane.f32.xlu0 %v1430
    %v1494 = vpop.xlane.xlu0 %1493
    %1495 = vadd.xlane.f32.xlu0 %v1432
    %v1496 = vpop.xlane.xlu0 %1495
    %1497 = vadd.xlane.f32.xlu0 %v1434
    %v1498 = vpop.xlane.xlu0 %1497
    %1499 = vadd.xlane.f32.xlu0 %v1436
    %v1500 = vpop.xlane.xlu0 %1499
    %1501 = vadd.xlane.f32.xlu0 %v1438
    %v1502 = vpop.xlane.xlu0 %1501
    %1503 = vadd.xlane.f32.xlu0 %v1440
    %v1504 = vpop.xlane.xlu0 %1503
    %1505 = vadd.xlane.f32.xlu0 %v1442
    %v1506 = vpop.xlane.xlu0 %1505
    %1507 = vadd.xlane.f32.xlu0 %v1444
    %v1508 = vpop.xlane.xlu0 %1507
    %1509 = vadd.xlane.f32.xlu0 %v1446
    %v1510 = vpop.xlane.xlu0 %1509
    %1511 = vadd.xlane.f32.xlu0 %v1448
    %v1512 = vpop.xlane.xlu0 %1511
    %1513 = vadd.xlane.f32.xlu0 %v1450
    %v1514 = vpop.xlane.xlu0 %1513
    %1515 = vadd.xlane.f32.xlu0 %v1452
    %v1516 = vpop.xlane.xlu0 %1515
    %1517 = vadd.xlane.f32.xlu0 %v1454
    %v1518 = vpop.xlane.xlu0 %1517
    %1519 = vadd.xlane.f32.xlu0 %v1456
    %v1520 = vpop.xlane.xlu0 %1519
    %1521 = vadd.xlane.f32.xlu0 %v1458
    %v1522 = vpop.xlane.xlu0 %1521
    %1523 = vadd.xlane.f32.xlu0 %v1460
    %v1524 = vpop.xlane.xlu0 %1523
    %1525 = vadd.xlane.f32.xlu0 %v1462
    %v1526 = vpop.xlane.xlu0 %1525
    %1527 = vadd.xlane.f32.xlu0 %v1464
    %v1528 = vpop.xlane.xlu0 %1527
    %1529 = vadd.xlane.f32.xlu0 %v1466
    %v1530 = vpop.xlane.xlu0 %1529
    %1531 = vadd.xlane.f32.xlu0 %v1468
    %v1532 = vpop.xlane.xlu0 %1531
    %1533 = vadd.xlane.f32.xlu0 %v1470
    %v1534 = vpop.xlane.xlu0 %1533
    %1535 = vadd.xlane.f32.xlu0 %v1472
    %v1536 = vpop.xlane.xlu0 %1535
    %v1537 = vpack.c.bf16 %v1412, %v1410
    %v1538 = vpack.c.bf16 %v1416, %v1414
    %v1539 = vpack.c.bf16 %v1420, %v1418
    %v1540 = vpack.c.bf16 %v1424, %v1422
    %v1541 = vpack.c.bf16 %v1428, %v1426
    %v1542 = vpack.c.bf16 %v1432, %v1430
    %v1543 = vpack.c.bf16 %v1436, %v1434
    %v1544 = vpack.c.bf16 %v1440, %v1438
    %v1545 = vpack.c.bf16 %v1444, %v1442
    %v1546 = vpack.c.bf16 %v1448, %v1446
    %v1547 = vpack.c.bf16 %v1452, %v1450
    %v1548 = vpack.c.bf16 %v1456, %v1454
    %v1549 = vpack.c.bf16 %v1460, %v1458
    %v1550 = vpack.c.bf16 %v1464, %v1462
    %v1551 = vpack.c.bf16 %v1468, %v1466
    %v1552 = vpack.c.bf16 %v1472, %v1470
    %1553 = vmatprep.subr.bf16.mxu0 0
    %1554 = vmatpush1.bf16.msra.mxu0 %v1006
    %1555 = vmatprep.subr.bf16.mxu0 0
    %1556 = vmatpush1.bf16.msra.mxu0 %v1007
    %1557 = vmatprep.subr.bf16.mxu0 0
    %1558 = vmatpush1.bf16.msra.mxu0 %v1008
    %1559 = vmatprep.subr.bf16.mxu0 0
    %1560 = vmatpush1.bf16.msra.mxu0 %v1009
    %1561 = vmatprep.subr.bf16.mxu0 0
    %1562 = vmatpush1.bf16.msra.mxu0 %v1010
    %1563 = vmatprep.subr.bf16.mxu0 0
    %1564 = vmatpush1.bf16.msra.mxu0 %v1011
    %1565 = vmatprep.subr.bf16.mxu0 0
    %1566 = vmatpush1.bf16.msra.mxu0 %v1012
    %1567 = vmatprep.subr.bf16.mxu0 0
    %1568 = vmatpush1.bf16.msra.mxu0 %v1013
    %1569 = vmatprep.subr.bf16.mxu0 0
    %1570 = vmatpush1.bf16.msra.mxu0 0
    %1571 = vmatprep.subr.bf16.mxu0 0
    %1572 = vmatpush1.bf16.msra.mxu0 0
    %1573 = vmatprep.subr.bf16.mxu0 0
    %1574 = vmatpush1.bf16.msra.mxu0 0
    %1575 = vmatprep.subr.bf16.mxu0 0
    %1576 = vmatpush1.bf16.msra.mxu0 0
    %1577 = vmatprep.subr.bf16.mxu0 0
    %1578 = vmatpush1.bf16.msra.mxu0 0
    %1579 = vmatprep.subr.bf16.mxu0 0
    %1580 = vmatpush1.bf16.msra.mxu0 0
    %1581 = vmatprep.subr.bf16.mxu0 0
    %1582 = vmatpush1.bf16.msra.mxu0 0
    %1583 = vmatprep.subr.bf16.mxu0 0
    %1584 = vmatpush1.bf16.msra.mxu0 0
    %1585 = vmatprep.mubr.bf16.mxu0 0
    %1586 = vmatmul.mubr.bf16.gmra.mrb[0].mxu0 %v1537
    %v1587 = vpop.f32.mrb[0].mxu0
    %v1588 = vadd.f32 0.0, %v1587
    %v1589 = vpop.f32.mrb[0].mxu0
    %v1590 = vpop.f32.mrb[0].mxu0
    %v1591 = vadd.f32 0.0, %v1590
    %v1592 = vpop.f32.mrb[0].mxu0
    %1593 = vmatprep.mubr.bf16.mxu0 0
    %1594 = vmatmul.mubr.bf16.gmra.mrb[0].mxu0 %v1538
    %v1595 = vpop.f32.mrb[0].mxu0
    %v1596 = vadd.f32 0.0, %v1595
    %v1597 = vpop.f32.mrb[0].mxu0
    %v1598 = vpop.f32.mrb[0].mxu0
    %v1599 = vadd.f32 0.0, %v1598
    %v1600 = vpop.f32.mrb[0].mxu0
    %1601 = vmatprep.mubr.bf16.mxu0 0
    %1602 = vmatmul.mubr.bf16.gmra.mrb[0].mxu0 %v1539
    %v1603 = vpop.f32.mrb[0].mxu0
    %v1604 = vadd.f32 0.0, %v1603
    %v1605 = vpop.f32.mrb[0].mxu0
    %v1606 = vpop.f32.mrb[0].mxu0
    %v1607 = vadd.f32 0.0, %v1606
    %v1608 = vpop.f32.mrb[0].mxu0
    %1609 = vmatprep.mubr.bf16.mxu0 0
    %1610 = vmatmul.mubr.bf16.gmra.mrb[0].mxu0 %v1540
    %v1611 = vpop.f32.mrb[0].mxu0
    %v1612 = vadd.f32 0.0, %v1611
    %v1613 = vpop.f32.mrb[0].mxu0
    %v1614 = vpop.f32.mrb[0].mxu0
    %v1615 = vadd.f32 0.0, %v1614
    %v1616 = vpop.f32.mrb[0].mxu0
    %1617 = vmatprep.mubr.bf16.mxu0 0
    %1618 = vmatmul.mubr.bf16.gmra.mrb[0].mxu0 %v1541
    %v1619 = vpop.f32.mrb[0].mxu0
    %v1620 = vadd.f32 0.0, %v1619
    %v1621 = vpop.f32.mrb[0].mxu0
    %v1622 = vpop.f32.mrb[0].mxu0
    %v1623 = vadd.f32 0.0, %v1622
    %v1624 = vpop.f32.mrb[0].mxu0
    %1625 = vmatprep.mubr.bf16.mxu0 0
    %1626 = vmatmul.mubr.bf16.gmra.mrb[0].mxu0 %v1542
    %v1627 = vpop.f32.mrb[0].mxu0
    %v1628 = vadd.f32 0.0, %v1627
    %v1629 = vpop.f32.mrb[0].mxu0
    %v1630 = vpop.f32.mrb[0].mxu0
    %v1631 = vadd.f32 0.0, %v1630
    %v1632 = vpop.f32.mrb[0].mxu0
    %1633 = vmatprep.mubr.bf16.mxu0 0
    %1634 = vmatmul.mubr.bf16.gmra.mrb[0].mxu0 %v1543
    %v1635 = vpop.f32.mrb[0].mxu0
    %v1636 = vadd.f32 0.0, %v1635
    %v1637 = vpop.f32.mrb[0].mxu0
    %v1638 = vpop.f32.mrb[0].mxu0
    %v1639 = vadd.f32 0.0, %v1638
    %v1640 = vpop.f32.mrb[0].mxu0
    %1641 = vmatprep.mubr.bf16.mxu0 0
    %1642 = vmatmul.mubr.bf16.gmra.mrb[0].mxu0 %v1544
    %v1643 = vpop.f32.mrb[0].mxu0
    %v1644 = vadd.f32 0.0, %v1643
    %v1645 = vpop.f32.mrb[0].mxu0
    %v1646 = vpop.f32.mrb[0].mxu0
    %v1647 = vadd.f32 0.0, %v1646
    %v1648 = vpop.f32.mrb[0].mxu0
    %1649 = vdwg.mxu0
    %1650 = vmatprep.subr.bf16.mxu0 0
    %1651 = vmatpush1.bf16.msra.mxu0 %v1014
    %1652 = vmatprep.subr.bf16.mxu0 0
    %1653 = vmatpush1.bf16.msra.mxu0 %v1015
    %1654 = vmatprep.subr.bf16.mxu0 0
    %1655 = vmatpush1.bf16.msra.mxu0 %v1016
    %1656 = vmatprep.subr.bf16.mxu0 0
    %1657 = vmatpush1.bf16.msra.mxu0 %v1017
    %1658 = vmatprep.subr.bf16.mxu0 0
    %1659 = vmatpush1.bf16.msra.mxu0 %v1018
    %1660 = vmatprep.subr.bf16.mxu0 0
    %1661 = vmatpush1.bf16.msra.mxu0 %v1019
    %1662 = vmatprep.subr.bf16.mxu0 0
    %1663 = vmatpush1.bf16.msra.mxu0 %v1020
    %1664 = vmatprep.subr.bf16.mxu0 0
    %1665 = vmatpush1.bf16.msra.mxu0 %v1021
    %1666 = vmatprep.subr.bf16.mxu0 0
    %1667 = vmatpush1.bf16.msra.mxu0 0
    %1668 = vmatprep.subr.bf16.mxu0 0
    %1669 = vmatpush1.bf16.msra.mxu0 0
    %1670 = vmatprep.subr.bf16.mxu0 0
    %1671 = vmatpush1.bf16.msra.mxu0 0
    %1672 = vmatprep.subr.bf16.mxu0 0
    %1673 = vmatpush1.bf16.msra.mxu0 0
    %1674 = vmatprep.subr.bf16.mxu0 0
    %1675 = vmatpush1.bf16.msra.mxu0 0
    %1676 = vmatprep.subr.bf16.mxu0 0
    %1677 = vmatpush1.bf16.msra.mxu0 0
    %1678 = vmatprep.subr.bf16.mxu0 0
    %1679 = vmatpush1.bf16.msra.mxu0 0
    %1680 = vmatprep.subr.bf16.mxu0 0
    %1681 = vmatpush1.bf16.msra.mxu0 0
    %1682 = vmatprep.mubr.bf16.mxu0 0
    %1683 = vmatmul.mubr.bf16.gmra.mrb[0].mxu0 %v1545
    %v1684 = vpop.f32.mrb[0].mxu0
    %v1685 = vadd.f32 0.0, %v1684
    %v1686 = vpop.f32.mrb[0].mxu0
    %v1687 = vpop.f32.mrb[0].mxu0
    %v1688 = vadd.f32 0.0, %v1687
    %v1689 = vpop.f32.mrb[0].mxu0
    %1690 = vmatprep.mubr.bf16.mxu0 0
    %1691 = vmatmul.mubr.bf16.gmra.mrb[0].mxu0 %v1546
    %v1692 = vpop.f32.mrb[0].mxu0
    %v1693 = vadd.f32 0.0, %v1692
    %v1694 = vpop.f32.mrb[0].mxu0
    %v1695 = vpop.f32.mrb[0].mxu0
    %v1696 = vadd.f32 0.0, %v1695
    %v1697 = vpop.f32.mrb[0].mxu0
    %1698 = vmatprep.mubr.bf16.mxu0 0
    %1699 = vmatmul.mubr.bf16.gmra.mrb[0].mxu0 %v1547
    %v1700 = vpop.f32.mrb[0].mxu0
    %v1701 = vadd.f32 0.0, %v1700
    %v1702 = vpop.f32.mrb[0].mxu0
    %v1703 = vpop.f32.mrb[0].mxu0
    %v1704 = vadd.f32 0.0, %v1703
    %v1705 = vpop.f32.mrb[0].mxu0
    %1706 = vmatprep.mubr.bf16.mxu0 0
    %1707 = vmatmul.mubr.bf16.gmra.mrb[0].mxu0 %v1548
    %v1708 = vpop.f32.mrb[0].mxu0
    %v1709 = vadd.f32 0.0, %v1708
    %v1710 = vpop.f32.mrb[0].mxu0
    %v1711 = vpop.f32.mrb[0].mxu0
    %v1712 = vadd.f32 0.0, %v1711
    %v1713 = vpop.f32.mrb[0].mxu0
    %1714 = vmatprep.mubr.bf16.mxu0 0
    %1715 = vmatmul.mubr.bf16.gmra.mrb[0].mxu0 %v1549
    %v1716 = vpop.f32.mrb[0].mxu0
    %v1717 = vadd.f32 0.0, %v1716
    %v1718 = vpop.f32.mrb[0].mxu0
    %v1719 = vpop.f32.mrb[0].mxu0
    %v1720 = vadd.f32 0.0, %v1719
    %v1721 = vpop.f32.mrb[0].mxu0
    %1722 = vmatprep.mubr.bf16.mxu0 0
    %1723 = vmatmul.mubr.bf16.gmra.mrb[0].mxu0 %v1550
    %v1724 = vpop.f32.mrb[0].mxu0
    %v1725 = vadd.f32 0.0, %v1724
    %v1726 = vpop.f32.mrb[0].mxu0
    %v1727 = vpop.f32.mrb[0].mxu0
    %v1728 = vadd.f32 0.0, %v1727
    %v1729 = vpop.f32.mrb[0].mxu0
    %1730 = vmatprep.mubr.bf16.mxu0 0
    %1731 = vmatmul.mubr.bf16.gmra.mrb[0].mxu0 %v1551
    %v1732 = vpop.f32.mrb[0].mxu0
    %v1733 = vadd.f32 0.0, %v1732
    %v1734 = vpop.f32.mrb[0].mxu0
    %v1735 = vpop.f32.mrb[0].mxu0
    %v1736 = vadd.f32 0.0, %v1735
    %v1737 = vpop.f32.mrb[0].mxu0
    %1738 = vmatprep.mubr.bf16.mxu0 0
    %1739 = vmatmul.mubr.bf16.gmra.mrb[0].mxu0 %v1552
    %v1740 = vpop.f32.mrb[0].mxu0
    %v1741 = vadd.f32 0.0, %v1740
    %v1742 = vpop.f32.mrb[0].mxu0
    %v1743 = vpop.f32.mrb[0].mxu0
    %v1744 = vadd.f32 0.0, %v1743
    %v1745 = vpop.f32.mrb[0].mxu0
    %1746 = vdwg.mxu0
    %v1747 = vrcp.pop %v1474
    %v1748 = vrcp.pop %v1476
    %v1749 = vrcp.pop %v1478
    %v1750 = vrcp.pop %v1480
    %v1751 = vrcp.pop %v1482
    %v1752 = vrcp.pop %v1484
    %v1753 = vrcp.pop %v1486
    %v1754 = vrcp.pop %v1488
    %v1755 = vrcp.pop %v1490
    %v1756 = vrcp.pop %v1492
    %v1757 = vrcp.pop %v1494
    %v1758 = vrcp.pop %v1496
    %v1759 = vrcp.pop %v1498
    %v1760 = vrcp.pop %v1500
    %v1761 = vrcp.pop %v1502
    %v1762 = vrcp.pop %v1504
    %v1763 = vrcp.pop %v1506
    %v1764 = vrcp.pop %v1508
    %v1765 = vrcp.pop %v1510
    %v1766 = vrcp.pop %v1512
    %v1767 = vrcp.pop %v1514
    %v1768 = vrcp.pop %v1516
    %v1769 = vrcp.pop %v1518
    %v1770 = vrcp.pop %v1520
    %v1771 = vrcp.pop %v1522
    %v1772 = vrcp.pop %v1524
    %v1773 = vrcp.pop %v1526
    %v1774 = vrcp.pop %v1528
    %v1775 = vrcp.pop %v1530
    %v1776 = vrcp.pop %v1532
    %v1777 = vrcp.pop %v1534
    %v1778 = vrcp.pop %v1536
    %v1779 = vmul.f32 %v1588, %v1747
    %v1780 = vmul.f32 %v1591, %v1748
    %v1781 = vmul.f32 %v1596, %v1749
    %v1782 = vmul.f32 %v1599, %v1750
    %v1783 = vmul.f32 %v1604, %v1751
    %v1784 = vmul.f32 %v1607, %v1752
    %v1785 = vmul.f32 %v1612, %v1753
    %v1786 = vmul.f32 %v1615, %v1754
    %v1787 = vmul.f32 %v1620, %v1755
    %v1788 = vmul.f32 %v1623, %v1756
    %v1789 = vmul.f32 %v1628, %v1757
    %v1790 = vmul.f32 %v1631, %v1758
    %v1791 = vmul.f32 %v1636, %v1759
    %v1792 = vmul.f32 %v1639, %v1760
    %v1793 = vmul.f32 %v1644, %v1761
    %v1794 = vmul.f32 %v1647, %v1762
    %v1795 = vmul.f32 %v1685, %v1763
    %v1796 = vmul.f32 %v1688, %v1764
    %v1797 = vmul.f32 %v1693, %v1765
    %v1798 = vmul.f32 %v1696, %v1766
    %v1799 = vmul.f32 %v1701, %v1767
    %v1800 = vmul.f32 %v1704, %v1768
    %v1801 = vmul.f32 %v1709, %v1769
    %v1802 = vmul.f32 %v1712, %v1770
    %v1803 = vmul.f32 %v1717, %v1771
    %v1804 = vmul.f32 %v1720, %v1772
    %v1805 = vmul.f32 %v1725, %v1773
    %v1806 = vmul.f32 %v1728, %v1774
    %v1807 = vmul.f32 %v1733, %v1775
    %v1808 = vmul.f32 %v1736, %v1776
    %v1809 = vmul.f32 %v1741, %v1777
    %v1810 = vmul.f32 %v1744, %v1778
    %v1811 = vpack.c.bf16 %v1780, %v1779
    %v1812 = vpack.c.bf16 %v1782, %v1781
    %v1813 = vpack.c.bf16 %v1784, %v1783
    %v1814 = vpack.c.bf16 %v1786, %v1785
    %v1815 = vpack.c.bf16 %v1788, %v1787
    %v1816 = vpack.c.bf16 %v1790, %v1789
    %v1817 = vpack.c.bf16 %v1792, %v1791
    %v1818 = vpack.c.bf16 %v1794, %v1793
    %v1819 = vpack.c.bf16 %v1796, %v1795
    %v1820 = vpack.c.bf16 %v1798, %v1797
    %v1821 = vpack.c.bf16 %v1800, %v1799
    %v1822 = vpack.c.bf16 %v1802, %v1801
    %v1823 = vpack.c.bf16 %v1804, %v1803
    %v1824 = vpack.c.bf16 %v1806, %v1805
    %v1825 = vpack.c.bf16 %v1808, %v1807
    %v1826 = vpack.c.bf16 %v1810, %v1809
    %1827 = vst.msk [vmem:[#allocation5] sm:$0xff] %vm1022, %v1811
    %1828 = vst.msk [vmem:[#allocation5 + $0x8] sm:$0xff] %vm1022, %v1812
    %1829 = vst.msk [vmem:[#allocation5 + $0x10] sm:$0xff] %vm1022, %v1813
    %1830 = vst.msk [vmem:[#allocation5 + $0x18] sm:$0xff] %vm1022, %v1814
    %1831 = vst.msk [vmem:[#allocation5 + $0x20] sm:$0xff] %vm1022, %v1815
    %1832 = vst.msk [vmem:[#allocation5 + $0x28] sm:$0xff] %vm1022, %v1816
    %1833 = vst.msk [vmem:[#allocation5 + $0x30] sm:$0xff] %vm1022, %v1817
    %1834 = vst.msk [vmem:[#allocation5 + $0x38] sm:$0xff] %vm1022, %v1818
    %1835 = vst.msk [vmem:[#allocation5 + $0x40] sm:$0xff] %vm1022, %v1819
    %1836 = vst.msk [vmem:[#allocation5 + $0x48] sm:$0xff] %vm1022, %v1820
    %1837 = vst.msk [vmem:[#allocation5 + $0x50] sm:$0xff] %vm1022, %v1821
    %1838 = vst.msk [vmem:[#allocation5 + $0x58] sm:$0xff] %vm1022, %v1822
    %1839 = vst.msk [vmem:[#allocation5 + $0x60] sm:$0xff] %vm1022, %v1823
    %1840 = vst.msk [vmem:[#allocation5 + $0x68] sm:$0xff] %vm1022, %v1824
    %1841 = vst.msk [vmem:[#allocation5 + $0x70] sm:$0xff] %vm1022, %v1825
    %1842 = vst.msk [vmem:[#allocation5 + $0x78] sm:$0xff] %vm1022, %v1826
    %v1843 = vld [vmem:[#allocation2] sm:$0xff]
    %v1844 = vld [vmem:[#allocation2 + $0x8] sm:$0xff]
    %v1845 = vld [vmem:[#allocation2 + $0x10] sm:$0xff]
    %v1846 = vld [vmem:[#allocation2 + $0x18] sm:$0xff]
    %v1847 = vld [vmem:[#allocation2 + $0x20] sm:$0xff]
    %v1848 = vld [vmem:[#allocation2 + $0x28] sm:$0xff]
    %v1849 = vld [vmem:[#allocation2 + $0x30] sm:$0xff]
    %v1850 = vld [vmem:[#allocation2 + $0x38] sm:$0xff]
    %v1851 = vld [vmem:[#allocation2 + $0x40] sm:$0xff]
    %v1852 = vld [vmem:[#allocation2 + $0x48] sm:$0xff]
    %v1853 = vld [vmem:[#allocation2 + $0x50] sm:$0xff]
    %v1854 = vld [vmem:[#allocation2 + $0x58] sm:$0xff]
    %v1855 = vld [vmem:[#allocation2 + $0x60] sm:$0xff]
    %v1856 = vld [vmem:[#allocation2 + $0x68] sm:$0xff]
    %v1857 = vld [vmem:[#allocation2 + $0x70] sm:$0xff]
    %v1858 = vld [vmem:[#allocation2 + $0x78] sm:$0xff]
    %v1859 = vld [vmem:[#allocation3] sm:$0xff]
    %v1860 = vld [vmem:[#allocation3 + $0x8] sm:$0xff]
    %v1861 = vld [vmem:[#allocation3 + $0x10] sm:$0xff]
    %v1862 = vld [vmem:[#allocation3 + $0x18] sm:$0xff]
    %v1863 = vld [vmem:[#allocation3 + $0x20] sm:$0xff]
    %v1864 = vld [vmem:[#allocation3 + $0x28] sm:$0xff]
    %v1865 = vld [vmem:[#allocation3 + $0x30] sm:$0xff]
    %v1866 = vld [vmem:[#allocation3 + $0x38] sm:$0xff]
    %v1867 = vld [vmem:[#allocation3 + $0x40] sm:$0xff]
    %v1868 = vld [vmem:[#allocation3 + $0x48] sm:$0xff]
    %v1869 = vld [vmem:[#allocation3 + $0x50] sm:$0xff]
    %v1870 = vld [vmem:[#allocation3 + $0x58] sm:$0xff]
    %v1871 = vld [vmem:[#allocation3 + $0x60] sm:$0xff]
    %v1872 = vld [vmem:[#allocation3 + $0x68] sm:$0xff]
    %v1873 = vld [vmem:[#allocation3 + $0x70] sm:$0xff]
    %v1874 = vld [vmem:[#allocation3 + $0x78] sm:$0xff]
    %v1875 = vld [vmem:[#allocation4] sm:$0xff]
    %v1876 = vld [vmem:[#allocation4 + $0x8] sm:$0xff]
    %v1877 = vld [vmem:[#allocation4 + $0x10] sm:$0xff]
    %v1878 = vld [vmem:[#allocation4 + $0x18] sm:$0xff]
    %v1879 = vld [vmem:[#allocation4 + $0x20] sm:$0xff]
    %v1880 = vld [vmem:[#allocation4 + $0x28] sm:$0xff]
    %v1881 = vld [vmem:[#allocation4 + $0x30] sm:$0xff]
    %v1882 = vld [vmem:[#allocation4 + $0x38] sm:$0xff]
    %v1883 = vld [vmem:[#allocation4 + $0x40] sm:$0xff]
    %v1884 = vld [vmem:[#allocation4 + $0x48] sm:$0xff]
    %v1885 = vld [vmem:[#allocation4 + $0x50] sm:$0xff]
    %v1886 = vld [vmem:[#allocation4 + $0x58] sm:$0xff]
    %v1887 = vld [vmem:[#allocation4 + $0x60] sm:$0xff]
    %v1888 = vld [vmem:[#allocation4 + $0x68] sm:$0xff]
    %v1889 = vld [vmem:[#allocation4 + $0x70] sm:$0xff]
    %v1890 = vld [vmem:[#allocation4 + $0x78] sm:$0xff]
    %1899 = vrot.lane.b32.xlu0 %v1843, 96
    %v1900 = vpop.permute.xlu0 %1899
    %1901 = vrot.lane.b32.xlu0 %v1844, 96
    %v1902 = vpop.permute.xlu0 %1901
    %1903 = vrot.lane.b32.xlu0 %v1845, 96
    %v1904 = vpop.permute.xlu0 %1903
    %1905 = vrot.lane.b32.xlu0 %v1846, 96
    %v1906 = vpop.permute.xlu0 %1905
    %1907 = vrot.lane.b32.xlu0 %v1847, 96
    %v1908 = vpop.permute.xlu0 %1907
    %1909 = vrot.lane.b32.xlu0 %v1848, 96
    %v1910 = vpop.permute.xlu0 %1909
    %1911 = vrot.lane.b32.xlu0 %v1849, 96
    %v1912 = vpop.permute.xlu0 %1911
    %1913 = vrot.lane.b32.xlu0 %v1850, 96
    %v1914 = vpop.permute.xlu0 %1913
    %1923 = vrot.lane.b32.xlu0 %v1859, 96
    %v1924 = vpop.permute.xlu0 %1923
    %1925 = vrot.lane.b32.xlu0 %v1860, 96
    %v1926 = vpop.permute.xlu0 %1925
    %1927 = vrot.lane.b32.xlu0 %v1861, 96
    %v1928 = vpop.permute.xlu0 %1927
    %1929 = vrot.lane.b32.xlu0 %v1862, 96
    %v1930 = vpop.permute.xlu0 %1929
    %1931 = vrot.lane.b32.xlu0 %v1863, 96
    %v1932 = vpop.permute.xlu0 %1931
    %1933 = vrot.lane.b32.xlu0 %v1864, 96
    %v1934 = vpop.permute.xlu0 %1933
    %1935 = vrot.lane.b32.xlu0 %v1865, 96
    %v1936 = vpop.permute.xlu0 %1935
    %1937 = vrot.lane.b32.xlu0 %v1866, 96
    %v1938 = vpop.permute.xlu0 %1937
    %v1940 = vsel %vm1022, %v1900, 0
    %v1943 = vsel %vm1022, %v1902, 0
    %v1946 = vsel %vm1022, %v1904, 0
    %v1949 = vsel %vm1022, %v1906, 0
    %v1952 = vsel %vm1022, %v1908, 0
    %v1955 = vsel %vm1022, %v1910, 0
    %v1958 = vsel %vm1022, %v1912, 0
    %v1961 = vsel %vm1022, %v1914, 0
    %v1964 = vsel %vm1022, %v1924, 0
    %v1967 = vsel %vm1022, %v1926, 0
    %v1970 = vsel %vm1022, %v1928, 0
    %v1973 = vsel %vm1022, %v1930, 0
    %v1976 = vsel %vm1022, %v1932, 0
    %v1979 = vsel %vm1022, %v1934, 0
    %v1982 = vsel %vm1022, %v1936, 0
    %v1985 = vsel %vm1022, %v1938, 0
    %1987 = vmatprep.subr.bf16.mxu0 0
    %1988 = vmatpush1.bf16.xpose.msra.mxu0 %v1964
    %1989 = vmatprep.subr.bf16.mxu0 0
    %1990 = vmatpush1.bf16.xpose.msra.mxu0 %v1967
    %1991 = vmatprep.subr.bf16.mxu0 0
    %1992 = vmatpush1.bf16.xpose.msra.mxu0 %v1970
    %1993 = vmatprep.subr.bf16.mxu0 0
    %1994 = vmatpush1.bf16.xpose.msra.mxu0 %v1973
    %1995 = vmatprep.subr.bf16.mxu0 0
    %1996 = vmatpush1.bf16.xpose.msra.mxu0 %v1976
    %1997 = vmatprep.subr.bf16.mxu0 0
    %1998 = vmatpush1.bf16.xpose.msra.mxu0 %v1979
    %1999 = vmatprep.subr.bf16.mxu0 0
    %2000 = vmatpush1.bf16.xpose.msra.mxu0 %v1982
    %2001 = vmatprep.subr.bf16.mxu0 0
    %2002 = vmatpush1.bf16.xpose.msra.mxu0 %v1985
    %2003 = vmatprep.subr.bf16.mxu0 0
    %2004 = vmatpush1.bf16.xpose.msra.mxu0 0
    %2005 = vmatprep.subr.bf16.mxu0 0
    %2006 = vmatpush1.bf16.xpose.msra.mxu0 0
    %2007 = vmatprep.subr.bf16.mxu0 0
    %2008 = vmatpush1.bf16.xpose.msra.mxu0 0
    %2009 = vmatprep.subr.bf16.mxu0 0
    %2010 = vmatpush1.bf16.xpose.msra.mxu0 0
    %2011 = vmatprep.subr.bf16.mxu0 0
    %2012 = vmatpush1.bf16.xpose.msra.mxu0 0
    %2013 = vmatprep.subr.bf16.mxu0 0
    %2014 = vmatpush1.bf16.xpose.msra.mxu0 0
    %2015 = vmatprep.subr.bf16.mxu0 0
    %2016 = vmatpush1.bf16.xpose.msra.mxu0 0
    %2017 = vmatprep.subr.bf16.mxu0 0
    %2018 = vmatpush1.bf16.xpose.msra.mxu0 0
    %2019 = vmatprep.mubr.bf16.mxu0 0
    %2020 = vmatmul.mubr.bf16.gmra.mrb[0].mxu0 %v1940
    %v2021 = vpop.f32.mrb[0].mxu0
    %v2022 = vadd.f32 0.0, %v2021
    %v2023 = vpop.f32.mrb[0].mxu0
    %v2024 = vpop.f32.mrb[0].mxu0
    %v2025 = vadd.f32 0.0, %v2024
    %v2026 = vpop.f32.mrb[0].mxu0
    %2027 = vmatprep.mubr.bf16.mxu0 0
    %2028 = vmatmul.mubr.bf16.gmra.mrb[0].mxu0 %v1943
    %v2029 = vpop.f32.mrb[0].mxu0
    %v2030 = vadd.f32 0.0, %v2029
    %v2031 = vpop.f32.mrb[0].mxu0
    %v2032 = vpop.f32.mrb[0].mxu0
    %v2033 = vadd.f32 0.0, %v2032
    %v2034 = vpop.f32.mrb[0].mxu0
    %2035 = vmatprep.mubr.bf16.mxu0 0
    %2036 = vmatmul.mubr.bf16.gmra.mrb[0].mxu0 %v1946
    %v2037 = vpop.f32.mrb[0].mxu0
    %v2038 = vadd.f32 0.0, %v2037
    %v2039 = vpop.f32.mrb[0].mxu0
    %v2040 = vpop.f32.mrb[0].mxu0
    %v2041 = vadd.f32 0.0, %v2040
    %v2042 = vpop.f32.mrb[0].mxu0
    %2043 = vmatprep.mubr.bf16.mxu0 0
    %2044 = vmatmul.mubr.bf16.gmra.mrb[0].mxu0 %v1949
    %v2045 = vpop.f32.mrb[0].mxu0
    %v2046 = vadd.f32 0.0, %v2045
    %v2047 = vpop.f32.mrb[0].mxu0
    %v2048 = vpop.f32.mrb[0].mxu0
    %v2049 = vadd.f32 0.0, %v2048
    %v2050 = vpop.f32.mrb[0].mxu0
    %2051 = vmatprep.mubr.bf16.mxu0 0
    %2052 = vmatmul.mubr.bf16.gmra.mrb[0].mxu0 %v1952
    %v2053 = vpop.f32.mrb[0].mxu0
    %v2054 = vadd.f32 0.0, %v2053
    %v2055 = vpop.f32.mrb[0].mxu0
    %v2056 = vpop.f32.mrb[0].mxu0
    %v2057 = vadd.f32 0.0, %v2056
    %v2058 = vpop.f32.mrb[0].mxu0
    %2059 = vmatprep.mubr.bf16.mxu0 0
    %2060 = vmatmul.mubr.bf16.gmra.mrb[0].mxu0 %v1955
    %v2061 = vpop.f32.mrb[0].mxu0
    %v2062 = vadd.f32 0.0, %v2061
    %v2063 = vpop.f32.mrb[0].mxu0
    %v2064 = vpop.f32.mrb[0].mxu0
    %v2065 = vadd.f32 0.0, %v2064
    %v2066 = vpop.f32.mrb[0].mxu0
    %2067 = vmatprep.mubr.bf16.mxu0 0
    %2068 = vmatmul.mubr.bf16.gmra.mrb[0].mxu0 %v1958
    %v2069 = vpop.f32.mrb[0].mxu0
    %v2070 = vadd.f32 0.0, %v2069
    %v2071 = vpop.f32.mrb[0].mxu0
    %v2072 = vpop.f32.mrb[0].mxu0
    %v2073 = vadd.f32 0.0, %v2072
    %v2074 = vpop.f32.mrb[0].mxu0
    %2075 = vmatprep.mubr.bf16.mxu0 0
    %2076 = vmatmul.mubr.bf16.gmra.mrb[0].mxu0 %v1961
    %v2077 = vpop.f32.mrb[0].mxu0
    %v2078 = vadd.f32 0.0, %v2077
    %v2079 = vpop.f32.mrb[0].mxu0
    %v2080 = vpop.f32.mrb[0].mxu0
    %v2081 = vadd.f32 0.0, %v2080
    %v2082 = vpop.f32.mrb[0].mxu0
    %2083 = vdwg.mxu0
    %2092 = vrot.lane.b32.xlu0 %v1851, 96
    %v2093 = vpop.permute.xlu0 %2092
    %2094 = vrot.lane.b32.xlu0 %v1852, 96
    %v2095 = vpop.permute.xlu0 %2094
    %2096 = vrot.lane.b32.xlu0 %v1853, 96
    %v2097 = vpop.permute.xlu0 %2096
    %2098 = vrot.lane.b32.xlu0 %v1854, 96
    %v2099 = vpop.permute.xlu0 %2098
    %2100 = vrot.lane.b32.xlu0 %v1855, 96
    %v2101 = vpop.permute.xlu0 %2100
    %2102 = vrot.lane.b32.xlu0 %v1856, 96
    %v2103 = vpop.permute.xlu0 %2102
    %2104 = vrot.lane.b32.xlu0 %v1857, 96
    %v2105 = vpop.permute.xlu0 %2104
    %2106 = vrot.lane.b32.xlu0 %v1858, 96
    %v2107 = vpop.permute.xlu0 %2106
    %2116 = vrot.lane.b32.xlu0 %v1867, 96
    %v2117 = vpop.permute.xlu0 %2116
    %2118 = vrot.lane.b32.xlu0 %v1868, 96
    %v2119 = vpop.permute.xlu0 %2118
    %2120 = vrot.lane.b32.xlu0 %v1869, 96
    %v2121 = vpop.permute.xlu0 %2120
    %2122 = vrot.lane.b32.xlu0 %v1870, 96
    %v2123 = vpop.permute.xlu0 %2122
    %2124 = vrot.lane.b32.xlu0 %v1871, 96
    %v2125 = vpop.permute.xlu0 %2124
    %2126 = vrot.lane.b32.xlu0 %v1872, 96
    %v2127 = vpop.permute.xlu0 %2126
    %2128 = vrot.lane.b32.xlu0 %v1873, 96
    %v2129 = vpop.permute.xlu0 %2128
    %2130 = vrot.lane.b32.xlu0 %v1874, 96
    %v2131 = vpop.permute.xlu0 %2130
    %v2133 = vsel %vm1022, %v2093, 0
    %v2136 = vsel %vm1022, %v2095, 0
    %v2139 = vsel %vm1022, %v2097, 0
    %v2142 = vsel %vm1022, %v2099, 0
    %v2145 = vsel %vm1022, %v2101, 0
    %v2148 = vsel %vm1022, %v2103, 0
    %v2151 = vsel %vm1022, %v2105, 0
    %v2154 = vsel %vm1022, %v2107, 0
    %v2157 = vsel %vm1022, %v2117, 0
    %v2160 = vsel %vm1022, %v2119, 0
    %v2163 = vsel %vm1022, %v2121, 0
    %v2166 = vsel %vm1022, %v2123, 0
    %v2169 = vsel %vm1022, %v2125, 0
    %v2172 = vsel %vm1022, %v2127, 0
    %v2175 = vsel %vm1022, %v2129, 0
    %v2178 = vsel %vm1022, %v2131, 0
    %2180 = vmatprep.subr.bf16.mxu0 0
    %2181 = vmatpush1.bf16.xpose.msra.mxu0 %v2157
    %2182 = vmatprep.subr.bf16.mxu0 0
    %2183 = vmatpush1.bf16.xpose.msra.mxu0 %v2160
    %2184 = vmatprep.subr.bf16.mxu0 0
    %2185 = vmatpush1.bf16.xpose.msra.mxu0 %v2163
    %2186 = vmatprep.subr.bf16.mxu0 0
    %2187 = vmatpush1.bf16.xpose.msra.mxu0 %v2166
    %2188 = vmatprep.subr.bf16.mxu0 0
    %2189 = vmatpush1.bf16.xpose.msra.mxu0 %v2169
    %2190 = vmatprep.subr.bf16.mxu0 0
    %2191 = vmatpush1.bf16.xpose.msra.mxu0 %v2172
    %2192 = vmatprep.subr.bf16.mxu0 0
    %2193 = vmatpush1.bf16.xpose.msra.mxu0 %v2175
    %2194 = vmatprep.subr.bf16.mxu0 0
    %2195 = vmatpush1.bf16.xpose.msra.mxu0 %v2178
    %2196 = vmatprep.subr.bf16.mxu0 0
    %2197 = vmatpush1.bf16.xpose.msra.mxu0 0
    %2198 = vmatprep.subr.bf16.mxu0 0
    %2199 = vmatpush1.bf16.xpose.msra.mxu0 0
    %2200 = vmatprep.subr.bf16.mxu0 0
    %2201 = vmatpush1.bf16.xpose.msra.mxu0 0
    %2202 = vmatprep.subr.bf16.mxu0 0
    %2203 = vmatpush1.bf16.xpose.msra.mxu0 0
    %2204 = vmatprep.subr.bf16.mxu0 0
    %2205 = vmatpush1.bf16.xpose.msra.mxu0 0
    %2206 = vmatprep.subr.bf16.mxu0 0
    %2207 = vmatpush1.bf16.xpose.msra.mxu0 0
    %2208 = vmatprep.subr.bf16.mxu0 0
    %2209 = vmatpush1.bf16.xpose.msra.mxu0 0
    %2210 = vmatprep.subr.bf16.mxu0 0
    %2211 = vmatpush1.bf16.xpose.msra.mxu0 0
    %2212 = vmatprep.mubr.bf16.mxu0 0
    %2213 = vmatmul.mubr.bf16.gmra.mrb[0].mxu0 %v2133
    %v2214 = vpop.f32.mrb[0].mxu0
    %v2215 = vadd.f32 0.0, %v2214
    %v2216 = vpop.f32.mrb[0].mxu0
    %v2217 = vpop.f32.mrb[0].mxu0
    %v2218 = vadd.f32 0.0, %v2217
    %v2219 = vpop.f32.mrb[0].mxu0
    %2220 = vmatprep.mubr.bf16.mxu0 0
    %2221 = vmatmul.mubr.bf16.gmra.mrb[0].mxu0 %v2136
    %v2222 = vpop.f32.mrb[0].mxu0
    %v2223 = vadd.f32 0.0, %v2222
    %v2224 = vpop.f32.mrb[0].mxu0
    %v2225 = vpop.f32.mrb[0].mxu0
    %v2226 = vadd.f32 0.0, %v2225
    %v2227 = vpop.f32.mrb[0].mxu0
    %2228 = vmatprep.mubr.bf16.mxu0 0
    %2229 = vmatmul.mubr.bf16.gmra.mrb[0].mxu0 %v2139
    %v2230 = vpop.f32.mrb[0].mxu0
    %v2231 = vadd.f32 0.0, %v2230
    %v2232 = vpop.f32.mrb[0].mxu0
    %v2233 = vpop.f32.mrb[0].mxu0
    %v2234 = vadd.f32 0.0, %v2233
    %v2235 = vpop.f32.mrb[0].mxu0
    %2236 = vmatprep.mubr.bf16.mxu0 0
    %2237 = vmatmul.mubr.bf16.gmra.mrb[0].mxu0 %v2142
    %v2238 = vpop.f32.mrb[0].mxu0
    %v2239 = vadd.f32 0.0, %v2238
    %v2240 = vpop.f32.mrb[0].mxu0
    %v2241 = vpop.f32.mrb[0].mxu0
    %v2242 = vadd.f32 0.0, %v2241
    %v2243 = vpop.f32.mrb[0].mxu0
    %2244 = vmatprep.mubr.bf16.mxu0 0
    %2245 = vmatmul.mubr.bf16.gmra.mrb[0].mxu0 %v2145
    %v2246 = vpop.f32.mrb[0].mxu0
    %v2247 = vadd.f32 0.0, %v2246
    %v2248 = vpop.f32.mrb[0].mxu0
    %v2249 = vpop.f32.mrb[0].mxu0
    %v2250 = vadd.f32 0.0, %v2249
    %v2251 = vpop.f32.mrb[0].mxu0
    %2252 = vmatprep.mubr.bf16.mxu0 0
    %2253 = vmatmul.mubr.bf16.gmra.mrb[0].mxu0 %v2148
    %v2254 = vpop.f32.mrb[0].mxu0
    %v2255 = vadd.f32 0.0, %v2254
    %v2256 = vpop.f32.mrb[0].mxu0
    %v2257 = vpop.f32.mrb[0].mxu0
    %v2258 = vadd.f32 0.0, %v2257
    %v2259 = vpop.f32.mrb[0].mxu0
    %2260 = vmatprep.mubr.bf16.mxu0 0
    %2261 = vmatmul.mubr.bf16.gmra.mrb[0].mxu0 %v2151
    %v2262 = vpop.f32.mrb[0].mxu0
    %v2263 = vadd.f32 0.0, %v2262
    %v2264 = vpop.f32.mrb[0].mxu0
    %v2265 = vpop.f32.mrb[0].mxu0
    %v2266 = vadd.f32 0.0, %v2265
    %v2267 = vpop.f32.mrb[0].mxu0
    %2268 = vmatprep.mubr.bf16.mxu0 0
    %2269 = vmatmul.mubr.bf16.gmra.mrb[0].mxu0 %v2154
    %v2270 = vpop.f32.mrb[0].mxu0
    %v2271 = vadd.f32 0.0, %v2270
    %v2272 = vpop.f32.mrb[0].mxu0
    %v2273 = vpop.f32.mrb[0].mxu0
    %v2274 = vadd.f32 0.0, %v2273
    %v2275 = vpop.f32.mrb[0].mxu0
    %2276 = vdwg.mxu0
    %2277 = vmax.xlane.f32.xlu0 %v2022
    %v2278 = vpop.xlane.xlu0 %2277
    %2279 = vmax.xlane.f32.xlu0 %v2025
    %v2280 = vpop.xlane.xlu0 %2279
    %2281 = vmax.xlane.f32.xlu0 %v2030
    %v2282 = vpop.xlane.xlu0 %2281
    %2283 = vmax.xlane.f32.xlu0 %v2033
    %v2284 = vpop.xlane.xlu0 %2283
    %2285 = vmax.xlane.f32.xlu0 %v2038
    %v2286 = vpop.xlane.xlu0 %2285
    %2287 = vmax.xlane.f32.xlu0 %v2041
    %v2288 = vpop.xlane.xlu0 %2287
    %2289 = vmax.xlane.f32.xlu0 %v2046
    %v2290 = vpop.xlane.xlu0 %2289
    %2291 = vmax.xlane.f32.xlu0 %v2049
    %v2292 = vpop.xlane.xlu0 %2291
    %2293 = vmax.xlane.f32.xlu0 %v2054
    %v2294 = vpop.xlane.xlu0 %2293
    %2295 = vmax.xlane.f32.xlu0 %v2057
    %v2296 = vpop.xlane.xlu0 %2295
    %2297 = vmax.xlane.f32.xlu0 %v2062
    %v2298 = vpop.xlane.xlu0 %2297
    %2299 = vmax.xlane.f32.xlu0 %v2065
    %v2300 = vpop.xlane.xlu0 %2299
    %2301 = vmax.xlane.f32.xlu0 %v2070
    %v2302 = vpop.xlane.xlu0 %2301
    %2303 = vmax.xlane.f32.xlu0 %v2073
    %v2304 = vpop.xlane.xlu0 %2303
    %2305 = vmax.xlane.f32.xlu0 %v2078
    %v2306 = vpop.xlane.xlu0 %2305
    %2307 = vmax.xlane.f32.xlu0 %v2081
    %v2308 = vpop.xlane.xlu0 %2307
    %2309 = vmax.xlane.f32.xlu0 %v2215
    %v2310 = vpop.xlane.xlu0 %2309
    %2311 = vmax.xlane.f32.xlu0 %v2218
    %v2312 = vpop.xlane.xlu0 %2311
    %2313 = vmax.xlane.f32.xlu0 %v2223
    %v2314 = vpop.xlane.xlu0 %2313
    %2315 = vmax.xlane.f32.xlu0 %v2226
    %v2316 = vpop.xlane.xlu0 %2315
    %2317 = vmax.xlane.f32.xlu0 %v2231
    %v2318 = vpop.xlane.xlu0 %2317
    %2319 = vmax.xlane.f32.xlu0 %v2234
    %v2320 = vpop.xlane.xlu0 %2319
    %2321 = vmax.xlane.f32.xlu0 %v2239
    %v2322 = vpop.xlane.xlu0 %2321
    %2323 = vmax.xlane.f32.xlu0 %v2242
    %v2324 = vpop.xlane.xlu0 %2323
    %2325 = vmax.xlane.f32.xlu0 %v2247
    %v2326 = vpop.xlane.xlu0 %2325
    %2327 = vmax.xlane.f32.xlu0 %v2250
    %v2328 = vpop.xlane.xlu0 %2327
    %2329 = vmax.xlane.f32.xlu0 %v2255
    %v2330 = vpop.xlane.xlu0 %2329
    %2331 = vmax.xlane.f32.xlu0 %v2258
    %v2332 = vpop.xlane.xlu0 %2331
    %2333 = vmax.xlane.f32.xlu0 %v2263
    %v2334 = vpop.xlane.xlu0 %2333
    %2335 = vmax.xlane.f32.xlu0 %v2266
    %v2336 = vpop.xlane.xlu0 %2335
    %2337 = vmax.xlane.f32.xlu0 %v2271
    %v2338 = vpop.xlane.xlu0 %2337
    %2339 = vmax.xlane.f32.xlu0 %v2274
    %v2340 = vpop.xlane.xlu0 %2339
    %v2341 = vsub.f32 %v2022, %v2278
    %v2342 = vsub.f32 %v2025, %v2280
    %v2343 = vsub.f32 %v2030, %v2282
    %v2344 = vsub.f32 %v2033, %v2284
    %v2345 = vsub.f32 %v2038, %v2286
    %v2346 = vsub.f32 %v2041, %v2288
    %v2347 = vsub.f32 %v2046, %v2290
    %v2348 = vsub.f32 %v2049, %v2292
    %v2349 = vsub.f32 %v2054, %v2294
    %v2350 = vsub.f32 %v2057, %v2296
    %v2351 = vsub.f32 %v2062, %v2298
    %v2352 = vsub.f32 %v2065, %v2300
    %v2353 = vsub.f32 %v2070, %v2302
    %v2354 = vsub.f32 %v2073, %v2304
    %v2355 = vsub.f32 %v2078, %v2306
    %v2356 = vsub.f32 %v2081, %v2308
    %v2357 = vsub.f32 %v2215, %v2310
    %v2358 = vsub.f32 %v2218, %v2312
    %v2359 = vsub.f32 %v2223, %v2314
    %v2360 = vsub.f32 %v2226, %v2316
    %v2361 = vsub.f32 %v2231, %v2318
    %v2362 = vsub.f32 %v2234, %v2320
    %v2363 = vsub.f32 %v2239, %v2322
    %v2364 = vsub.f32 %v2242, %v2324
    %v2365 = vsub.f32 %v2247, %v2326
    %v2366 = vsub.f32 %v2250, %v2328
    %v2367 = vsub.f32 %v2255, %v2330
    %v2368 = vsub.f32 %v2258, %v2332
    %v2369 = vsub.f32 %v2263, %v2334
    %v2370 = vsub.f32 %v2266, %v2336
    %v2371 = vsub.f32 %v2271, %v2338
    %v2372 = vsub.f32 %v2274, %v2340
    %v2373 = vmul.f32 %v2341, 1.442695
    %v2374 = vpow.pop %v2373
    %v2375 = vmul.f32 %v2342, 1.442695
    %v2376 = vpow.pop %v2375
    %v2377 = vmul.f32 %v2343, 1.442695
    %v2378 = vpow.pop %v2377
    %v2379 = vmul.f32 %v2344, 1.442695
    %v2380 = vpow.pop %v2379
    %v2381 = vmul.f32 %v2345, 1.442695
    %v2382 = vpow.pop %v2381
    %v2383 = vmul.f32 %v2346, 1.442695
    %v2384 = vpow.pop %v2383
    %v2385 = vmul.f32 %v2347, 1.442695
    %v2386 = vpow.pop %v2385
    %v2387 = vmul.f32 %v2348, 1.442695
    %v2388 = vpow.pop %v2387
    %v2389 = vmul.f32 %v2349, 1.442695
    %v2390 = vpow.pop %v2389
    %v2391 = vmul.f32 %v2350, 1.442695
    %v2392 = vpow.pop %v2391
    %v2393 = vmul.f32 %v2351, 1.442695
    %v2394 = vpow.pop %v2393
    %v2395 = vmul.f32 %v2352, 1.442695
    %v2396 = vpow.pop %v2395
    %v2397 = vmul.f32 %v2353, 1.442695
    %v2398 = vpow.pop %v2397
    %v2399 = vmul.f32 %v2354, 1.442695
    %v2400 = vpow.pop %v2399
    %v2401 = vmul.f32 %v2355, 1.442695
    %v2402 = vpow.pop %v2401
    %v2403 = vmul.f32 %v2356, 1.442695
    %v2404 = vpow.pop %v2403
    %v2405 = vmul.f32 %v2357, 1.442695
    %v2406 = vpow.pop %v2405
    %v2407 = vmul.f32 %v2358, 1.442695
    %v2408 = vpow.pop %v2407
    %v2409 = vmul.f32 %v2359, 1.442695
    %v2410 = vpow.pop %v2409
    %v2411 = vmul.f32 %v2360, 1.442695
    %v2412 = vpow.pop %v2411
    %v2413 = vmul.f32 %v2361, 1.442695
    %v2414 = vpow.pop %v2413
    %v2415 = vmul.f32 %v2362, 1.442695
    %v2416 = vpow.pop %v2415
    %v2417 = vmul.f32 %v2363, 1.442695
    %v2418 = vpow.pop %v2417
    %v2419 = vmul.f32 %v2364, 1.442695
    %v2420 = vpow.pop %v2419
    %v2421 = vmul.f32 %v2365, 1.442695
    %v2422 = vpow.pop %v2421
    %v2423 = vmul.f32 %v2366, 1.442695
    %v2424 = vpow.pop %v2423
    %v2425 = vmul.f32 %v2367, 1.442695
    %v2426 = vpow.pop %v2425
    %v2427 = vmul.f32 %v2368, 1.442695
    %v2428 = vpow.pop %v2427
    %v2429 = vmul.f32 %v2369, 1.442695
    %v2430 = vpow.pop %v2429
    %v2431 = vmul.f32 %v2370, 1.442695
    %v2432 = vpow.pop %v2431
    %v2433 = vmul.f32 %v2371, 1.442695
    %v2434 = vpow.pop %v2433
    %v2435 = vmul.f32 %v2372, 1.442695
    %v2436 = vpow.pop %v2435
    %2437 = vadd.xlane.f32.xlu0 %v2374
    %v2438 = vpop.xlane.xlu0 %2437
    %2439 = vadd.xlane.f32.xlu0 %v2376
    %v2440 = vpop.xlane.xlu0 %2439
    %2441 = vadd.xlane.f32.xlu0 %v2378
    %v2442 = vpop.xlane.xlu0 %2441
    %2443 = vadd.xlane.f32.xlu0 %v2380
    %v2444 = vpop.xlane.xlu0 %2443
    %2445 = vadd.xlane.f32.xlu0 %v2382
    %v2446 = vpop.xlane.xlu0 %2445
    %2447 = vadd.xlane.f32.xlu0 %v2384
    %v2448 = vpop.xlane.xlu0 %2447
    %2449 = vadd.xlane.f32.xlu0 %v2386
    %v2450 = vpop.xlane.xlu0 %2449
    %2451 = vadd.xlane.f32.xlu0 %v2388
    %v2452 = vpop.xlane.xlu0 %2451
    %2453 = vadd.xlane.f32.xlu0 %v2390
    %v2454 = vpop.xlane.xlu0 %2453
    %2455 = vadd.xlane.f32.xlu0 %v2392
    %v2456 = vpop.xlane.xlu0 %2455
    %2457 = vadd.xlane.f32.xlu0 %v2394
    %v2458 = vpop.xlane.xlu0 %2457
    %2459 = vadd.xlane.f32.xlu0 %v2396
    %v2460 = vpop.xlane.xlu0 %2459
    %2461 = vadd.xlane.f32.xlu0 %v2398
    %v2462 = vpop.xlane.xlu0 %2461
    %2463 = vadd.xlane.f32.xlu0 %v2400
    %v2464 = vpop.xlane.xlu0 %2463
    %2465 = vadd.xlane.f32.xlu0 %v2402
    %v2466 = vpop.xlane.xlu0 %2465
    %2467 = vadd.xlane.f32.xlu0 %v2404
    %v2468 = vpop.xlane.xlu0 %2467
    %2469 = vadd.xlane.f32.xlu0 %v2406
    %v2470 = vpop.xlane.xlu0 %2469
    %2471 = vadd.xlane.f32.xlu0 %v2408
    %v2472 = vpop.xlane.xlu0 %2471
    %2473 = vadd.xlane.f32.xlu0 %v2410
    %v2474 = vpop.xlane.xlu0 %2473
    %2475 = vadd.xlane.f32.xlu0 %v2412
    %v2476 = vpop.xlane.xlu0 %2475
    %2477 = vadd.xlane.f32.xlu0 %v2414
    %v2478 = vpop.xlane.xlu0 %2477
    %2479 = vadd.xlane.f32.xlu0 %v2416
    %v2480 = vpop.xlane.xlu0 %2479
    %2481 = vadd.xlane.f32.xlu0 %v2418
    %v2482 = vpop.xlane.xlu0 %2481
    %2483 = vadd.xlane.f32.xlu0 %v2420
    %v2484 = vpop.xlane.xlu0 %2483
    %2485 = vadd.xlane.f32.xlu0 %v2422
    %v2486 = vpop.xlane.xlu0 %2485
    %2487 = vadd.xlane.f32.xlu0 %v2424
    %v2488 = vpop.xlane.xlu0 %2487
    %2489 = vadd.xlane.f32.xlu0 %v2426
    %v2490 = vpop.xlane.xlu0 %2489
    %2491 = vadd.xlane.f32.xlu0 %v2428
    %v2492 = vpop.xlane.xlu0 %2491
    %2493 = vadd.xlane.f32.xlu0 %v2430
    %v2494 = vpop.xlane.xlu0 %2493
    %2495 = vadd.xlane.f32.xlu0 %v2432
    %v2496 = vpop.xlane.xlu0 %2495
    %2497 = vadd.xlane.f32.xlu0 %v2434
    %v2498 = vpop.xlane.xlu0 %2497
    %2499 = vadd.xlane.f32.xlu0 %v2436
    %v2500 = vpop.xlane.xlu0 %2499
    %v2501 = vpack.c.bf16 %v2376, %v2374
    %v2502 = vpack.c.bf16 %v2380, %v2378
    %v2503 = vpack.c.bf16 %v2384, %v2382
    %v2504 = vpack.c.bf16 %v2388, %v2386
    %v2505 = vpack.c.bf16 %v2392, %v2390
    %v2506 = vpack.c.bf16 %v2396, %v2394
    %v2507 = vpack.c.bf16 %v2400, %v2398
    %v2508 = vpack.c.bf16 %v2404, %v2402
    %v2509 = vpack.c.bf16 %v2408, %v2406
    %v2510 = vpack.c.bf16 %v2412, %v2410
    %v2511 = vpack.c.bf16 %v2416, %v2414
    %v2512 = vpack.c.bf16 %v2420, %v2418
    %v2513 = vpack.c.bf16 %v2424, %v2422
    %v2514 = vpack.c.bf16 %v2428, %v2426
    %v2515 = vpack.c.bf16 %v2432, %v2430
    %v2516 = vpack.c.bf16 %v2436, %v2434
    %2525 = vrot.lane.b32.xlu0 %v1875, 96
    %v2526 = vpop.permute.xlu0 %2525
    %2527 = vrot.lane.b32.xlu0 %v1876, 96
    %v2528 = vpop.permute.xlu0 %2527
    %2529 = vrot.lane.b32.xlu0 %v1877, 96
    %v2530 = vpop.permute.xlu0 %2529
    %2531 = vrot.lane.b32.xlu0 %v1878, 96
    %v2532 = vpop.permute.xlu0 %2531
    %2533 = vrot.lane.b32.xlu0 %v1879, 96
    %v2534 = vpop.permute.xlu0 %2533
    %2535 = vrot.lane.b32.xlu0 %v1880, 96
    %v2536 = vpop.permute.xlu0 %2535
    %2537 = vrot.lane.b32.xlu0 %v1881, 96
    %v2538 = vpop.permute.xlu0 %2537
    %2539 = vrot.lane.b32.xlu0 %v1882, 96
    %v2540 = vpop.permute.xlu0 %2539
    %2549 = vmatprep.subr.bf16.mxu0 0
    %2550 = vmatpush1.bf16.msra.mxu0 %v2526
    %2551 = vmatprep.subr.bf16.mxu0 0
    %2552 = vmatpush1.bf16.msra.mxu0 %v2528
    %2553 = vmatprep.subr.bf16.mxu0 0
    %2554 = vmatpush1.bf16.msra.mxu0 %v2530
    %2555 = vmatprep.subr.bf16.mxu0 0
    %2556 = vmatpush1.bf16.msra.mxu0 %v2532
    %2557 = vmatprep.subr.bf16.mxu0 0
    %2558 = vmatpush1.bf16.msra.mxu0 %v2534
    %2559 = vmatprep.subr.bf16.mxu0 0
    %2560 = vmatpush1.bf16.msra.mxu0 %v2536
    %2561 = vmatprep.subr.bf16.mxu0 0
    %2562 = vmatpush1.bf16.msra.mxu0 %v2538
    %2563 = vmatprep.subr.bf16.mxu0 0
    %2564 = vmatpush1.bf16.msra.mxu0 %v2540
    %2565 = vmatprep.subr.bf16.mxu0 0
    %2566 = vmatpush1.bf16.msra.mxu0 0
    %2567 = vmatprep.subr.bf16.mxu0 0
    %2568 = vmatpush1.bf16.msra.mxu0 0
    %2569 = vmatprep.subr.bf16.mxu0 0
    %2570 = vmatpush1.bf16.msra.mxu0 0
    %2571 = vmatprep.subr.bf16.mxu0 0
    %2572 = vmatpush1.bf16.msra.mxu0 0
    %2573 = vmatprep.subr.bf16.mxu0 0
    %2574 = vmatpush1.bf16.msra.mxu0 0
    %2575 = vmatprep.subr.bf16.mxu0 0
    %2576 = vmatpush1.bf16.msra.mxu0 0
    %2577 = vmatprep.subr.bf16.mxu0 0
    %2578 = vmatpush1.bf16.msra.mxu0 0
    %2579 = vmatprep.subr.bf16.mxu0 0
    %2580 = vmatpush1.bf16.msra.mxu0 0
    %2581 = vmatprep.mubr.bf16.mxu0 0
    %2582 = vmatmul.mubr.bf16.gmra.mrb[0].mxu0 %v2501
    %v2583 = vpop.f32.mrb[0].mxu0
    %v2584 = vadd.f32 0.0, %v2583
    %v2585 = vpop.f32.mrb[0].mxu0
    %v2586 = vpop.f32.mrb[0].mxu0
    %v2587 = vadd.f32 0.0, %v2586
    %v2588 = vpop.f32.mrb[0].mxu0
    %2589 = vmatprep.mubr.bf16.mxu0 0
    %2590 = vmatmul.mubr.bf16.gmra.mrb[0].mxu0 %v2502
    %v2591 = vpop.f32.mrb[0].mxu0
    %v2592 = vadd.f32 0.0, %v2591
    %v2593 = vpop.f32.mrb[0].mxu0
    %v2594 = vpop.f32.mrb[0].mxu0
    %v2595 = vadd.f32 0.0, %v2594
    %v2596 = vpop.f32.mrb[0].mxu0
    %2597 = vmatprep.mubr.bf16.mxu0 0
    %2598 = vmatmul.mubr.bf16.gmra.mrb[0].mxu0 %v2503
    %v2599 = vpop.f32.mrb[0].mxu0
    %v2600 = vadd.f32 0.0, %v2599
    %v2601 = vpop.f32.mrb[0].mxu0
    %v2602 = vpop.f32.mrb[0].mxu0
    %v2603 = vadd.f32 0.0, %v2602
    %v2604 = vpop.f32.mrb[0].mxu0
    %2605 = vmatprep.mubr.bf16.mxu0 0
    %2606 = vmatmul.mubr.bf16.gmra.mrb[0].mxu0 %v2504
    %v2607 = vpop.f32.mrb[0].mxu0
    %v2608 = vadd.f32 0.0, %v2607
    %v2609 = vpop.f32.mrb[0].mxu0
    %v2610 = vpop.f32.mrb[0].mxu0
    %v2611 = vadd.f32 0.0, %v2610
    %v2612 = vpop.f32.mrb[0].mxu0
    %2613 = vmatprep.mubr.bf16.mxu0 0
    %2614 = vmatmul.mubr.bf16.gmra.mrb[0].mxu0 %v2505
    %v2615 = vpop.f32.mrb[0].mxu0
    %v2616 = vadd.f32 0.0, %v2615
    %v2617 = vpop.f32.mrb[0].mxu0
    %v2618 = vpop.f32.mrb[0].mxu0
    %v2619 = vadd.f32 0.0, %v2618
    %v2620 = vpop.f32.mrb[0].mxu0
    %2621 = vmatprep.mubr.bf16.mxu0 0
    %2622 = vmatmul.mubr.bf16.gmra.mrb[0].mxu0 %v2506
    %v2623 = vpop.f32.mrb[0].mxu0
    %v2624 = vadd.f32 0.0, %v2623
    %v2625 = vpop.f32.mrb[0].mxu0
    %v2626 = vpop.f32.mrb[0].mxu0
    %v2627 = vadd.f32 0.0, %v2626
    %v2628 = vpop.f32.mrb[0].mxu0
    %2629 = vmatprep.mubr.bf16.mxu0 0
    %2630 = vmatmul.mubr.bf16.gmra.mrb[0].mxu0 %v2507
    %v2631 = vpop.f32.mrb[0].mxu0
    %v2632 = vadd.f32 0.0, %v2631
    %v2633 = vpop.f32.mrb[0].mxu0
    %v2634 = vpop.f32.mrb[0].mxu0
    %v2635 = vadd.f32 0.0, %v2634
    %v2636 = vpop.f32.mrb[0].mxu0
    %2637 = vmatprep.mubr.bf16.mxu0 0
    %2638 = vmatmul.mubr.bf16.gmra.mrb[0].mxu0 %v2508
    %v2639 = vpop.f32.mrb[0].mxu0
    %v2640 = vadd.f32 0.0, %v2639
    %v2641 = vpop.f32.mrb[0].mxu0
    %v2642 = vpop.f32.mrb[0].mxu0
    %v2643 = vadd.f32 0.0, %v2642
    %v2644 = vpop.f32.mrb[0].mxu0
    %2645 = vdwg.mxu0
    %2654 = vrot.lane.b32.xlu0 %v1883, 96
    %v2655 = vpop.permute.xlu0 %2654
    %2656 = vrot.lane.b32.xlu0 %v1884, 96
    %v2657 = vpop.permute.xlu0 %2656
    %2658 = vrot.lane.b32.xlu0 %v1885, 96
    %v2659 = vpop.permute.xlu0 %2658
    %2660 = vrot.lane.b32.xlu0 %v1886, 96
    %v2661 = vpop.permute.xlu0 %2660
    %2662 = vrot.lane.b32.xlu0 %v1887, 96
    %v2663 = vpop.permute.xlu0 %2662
    %2664 = vrot.lane.b32.xlu0 %v1888, 96
    %v2665 = vpop.permute.xlu0 %2664
    %2666 = vrot.lane.b32.xlu0 %v1889, 96
    %v2667 = vpop.permute.xlu0 %2666
    %2668 = vrot.lane.b32.xlu0 %v1890, 96
    %v2669 = vpop.permute.xlu0 %2668
    %2678 = vmatprep.subr.bf16.mxu0 0
    %2679 = vmatpush1.bf16.msra.mxu0 %v2655
    %2680 = vmatprep.subr.bf16.mxu0 0
    %2681 = vmatpush1.bf16.msra.mxu0 %v2657
    %2682 = vmatprep.subr.bf16.mxu0 0
    %2683 = vmatpush1.bf16.msra.mxu0 %v2659
    %2684 = vmatprep.subr.bf16.mxu0 0
    %2685 = vmatpush1.bf16.msra.mxu0 %v2661
    %2686 = vmatprep.subr.bf16.mxu0 0
    %2687 = vmatpush1.bf16.msra.mxu0 %v2663
    %2688 = vmatprep.subr.bf16.mxu0 0
    %2689 = vmatpush1.bf16.msra.mxu0 %v2665
    %2690 = vmatprep.subr.bf16.mxu0 0
    %2691 = vmatpush1.bf16.msra.mxu0 %v2667
    %2692 = vmatprep.subr.bf16.mxu0 0
    %2693 = vmatpush1.bf16.msra.mxu0 %v2669
    %2694 = vmatprep.subr.bf16.mxu0 0
    %2695 = vmatpush1.bf16.msra.mxu0 0
    %2696 = vmatprep.subr.bf16.mxu0 0
    %2697 = vmatpush1.bf16.msra.mxu0 0
    %2698 = vmatprep.subr.bf16.mxu0 0
    %2699 = vmatpush1.bf16.msra.mxu0 0
    %2700 = vmatprep.subr.bf16.mxu0 0
    %2701 = vmatpush1.bf16.msra.mxu0 0
    %2702 = vmatprep.subr.bf16.mxu0 0
    %2703 = vmatpush1.bf16.msra.mxu0 0
    %2704 = vmatprep.subr.bf16.mxu0 0
    %2705 = vmatpush1.bf16.msra.mxu0 0
    %2706 = vmatprep.subr.bf16.mxu0 0
    %2707 = vmatpush1.bf16.msra.mxu0 0
    %2708 = vmatprep.subr.bf16.mxu0 0
    %2709 = vmatpush1.bf16.msra.mxu0 0
    %2710 = vmatprep.mubr.bf16.mxu0 0
    %2711 = vmatmul.mubr.bf16.gmra.mrb[0].mxu0 %v2509
    %v2712 = vpop.f32.mrb[0].mxu0
    %v2713 = vadd.f32 0.0, %v2712
    %v2714 = vpop.f32.mrb[0].mxu0
    %v2715 = vpop.f32.mrb[0].mxu0
    %v2716 = vadd.f32 0.0, %v2715
    %v2717 = vpop.f32.mrb[0].mxu0
    %2718 = vmatprep.mubr.bf16.mxu0 0
    %2719 = vmatmul.mubr.bf16.gmra.mrb[0].mxu0 %v2510
    %v2720 = vpop.f32.mrb[0].mxu0
    %v2721 = vadd.f32 0.0, %v2720
    %v2722 = vpop.f32.mrb[0].mxu0
    %v2723 = vpop.f32.mrb[0].mxu0
    %v2724 = vadd.f32 0.0, %v2723
    %v2725 = vpop.f32.mrb[0].mxu0
    %2726 = vmatprep.mubr.bf16.mxu0 0
    %2727 = vmatmul.mubr.bf16.gmra.mrb[0].mxu0 %v2511
    %v2728 = vpop.f32.mrb[0].mxu0
    %v2729 = vadd.f32 0.0, %v2728
    %v2730 = vpop.f32.mrb[0].mxu0
    %v2731 = vpop.f32.mrb[0].mxu0
    %v2732 = vadd.f32 0.0, %v2731
    %v2733 = vpop.f32.mrb[0].mxu0
    %2734 = vmatprep.mubr.bf16.mxu0 0
    %2735 = vmatmul.mubr.bf16.gmra.mrb[0].mxu0 %v2512
    %v2736 = vpop.f32.mrb[0].mxu0
    %v2737 = vadd.f32 0.0, %v2736
    %v2738 = vpop.f32.mrb[0].mxu0
    %v2739 = vpop.f32.mrb[0].mxu0
    %v2740 = vadd.f32 0.0, %v2739
    %v2741 = vpop.f32.mrb[0].mxu0
    %2742 = vmatprep.mubr.bf16.mxu0 0
    %2743 = vmatmul.mubr.bf16.gmra.mrb[0].mxu0 %v2513
    %v2744 = vpop.f32.mrb[0].mxu0
    %v2745 = vadd.f32 0.0, %v2744
    %v2746 = vpop.f32.mrb[0].mxu0
    %v2747 = vpop.f32.mrb[0].mxu0
    %v2748 = vadd.f32 0.0, %v2747
    %v2749 = vpop.f32.mrb[0].mxu0
    %2750 = vmatprep.mubr.bf16.mxu0 0
    %2751 = vmatmul.mubr.bf16.gmra.mrb[0].mxu0 %v2514
    %v2752 = vpop.f32.mrb[0].mxu0
    %v2753 = vadd.f32 0.0, %v2752
    %v2754 = vpop.f32.mrb[0].mxu0
    %v2755 = vpop.f32.mrb[0].mxu0
    %v2756 = vadd.f32 0.0, %v2755
    %v2757 = vpop.f32.mrb[0].mxu0
    %2758 = vmatprep.mubr.bf16.mxu0 0
    %2759 = vmatmul.mubr.bf16.gmra.mrb[0].mxu0 %v2515
    %v2760 = vpop.f32.mrb[0].mxu0
    %v2761 = vadd.f32 0.0, %v2760
    %v2762 = vpop.f32.mrb[0].mxu0
    %v2763 = vpop.f32.mrb[0].mxu0
    %v2764 = vadd.f32 0.0, %v2763
    %v2765 = vpop.f32.mrb[0].mxu0
    %2766 = vmatprep.mubr.bf16.mxu0 0
    %2767 = vmatmul.mubr.bf16.gmra.mrb[0].mxu0 %v2516
    %v2768 = vpop.f32.mrb[0].mxu0
    %v2769 = vadd.f32 0.0, %v2768
    %v2770 = vpop.f32.mrb[0].mxu0
    %v2771 = vpop.f32.mrb[0].mxu0
    %v2772 = vadd.f32 0.0, %v2771
    %v2773 = vpop.f32.mrb[0].mxu0
    %2774 = vdwg.mxu0
    %v2775 = vrcp.pop %v2438
    %v2776 = vrcp.pop %v2440
    %v2777 = vrcp.pop %v2442
    %v2778 = vrcp.pop %v2444
    %v2779 = vrcp.pop %v2446
    %v2780 = vrcp.pop %v2448
    %v2781 = vrcp.pop %v2450
    %v2782 = vrcp.pop %v2452
    %v2783 = vrcp.pop %v2454
    %v2784 = vrcp.pop %v2456
    %v2785 = vrcp.pop %v2458
    %v2786 = vrcp.pop %v2460
    %v2787 = vrcp.pop %v2462
    %v2788 = vrcp.pop %v2464
    %v2789 = vrcp.pop %v2466
    %v2790 = vrcp.pop %v2468
    %v2791 = vrcp.pop %v2470
    %v2792 = vrcp.pop %v2472
    %v2793 = vrcp.pop %v2474
    %v2794 = vrcp.pop %v2476
    %v2795 = vrcp.pop %v2478
    %v2796 = vrcp.pop %v2480
    %v2797 = vrcp.pop %v2482
    %v2798 = vrcp.pop %v2484
    %v2799 = vrcp.pop %v2486
    %v2800 = vrcp.pop %v2488
    %v2801 = vrcp.pop %v2490
    %v2802 = vrcp.pop %v2492
    %v2803 = vrcp.pop %v2494
    %v2804 = vrcp.pop %v2496
    %v2805 = vrcp.pop %v2498
    %v2806 = vrcp.pop %v2500
    %v2807 = vmul.f32 %v2584, %v2775
    %v2808 = vmul.f32 %v2587, %v2776
    %v2809 = vmul.f32 %v2592, %v2777
    %v2810 = vmul.f32 %v2595, %v2778
    %v2811 = vmul.f32 %v2600, %v2779
    %v2812 = vmul.f32 %v2603, %v2780
    %v2813 = vmul.f32 %v2608, %v2781
    %v2814 = vmul.f32 %v2611, %v2782
    %v2815 = vmul.f32 %v2616, %v2783
    %v2816 = vmul.f32 %v2619, %v2784
    %v2817 = vmul.f32 %v2624, %v2785
    %v2818 = vmul.f32 %v2627, %v2786
    %v2819 = vmul.f32 %v2632, %v2787
    %v2820 = vmul.f32 %v2635, %v2788
    %v2821 = vmul.f32 %v2640, %v2789
    %v2822 = vmul.f32 %v2643, %v2790
    %v2823 = vmul.f32 %v2713, %v2791
    %v2824 = vmul.f32 %v2716, %v2792
    %v2825 = vmul.f32 %v2721, %v2793
    %v2826 = vmul.f32 %v2724, %v2794
    %v2827 = vmul.f32 %v2729, %v2795
    %v2828 = vmul.f32 %v2732, %v2796
    %v2829 = vmul.f32 %v2737, %v2797
    %v2830 = vmul.f32 %v2740, %v2798
    %v2831 = vmul.f32 %v2745, %v2799
    %v2832 = vmul.f32 %v2748, %v2800
    %v2833 = vmul.f32 %v2753, %v2801
    %v2834 = vmul.f32 %v2756, %v2802
    %v2835 = vmul.f32 %v2761, %v2803
    %v2836 = vmul.f32 %v2764, %v2804
    %v2837 = vmul.f32 %v2769, %v2805
    %v2838 = vmul.f32 %v2772, %v2806
    %v2839 = vpack.c.bf16 %v2808, %v2807
    %v2840 = vpack.c.bf16 %v2810, %v2809
    %v2841 = vpack.c.bf16 %v2812, %v2811
    %v2842 = vpack.c.bf16 %v2814, %v2813
    %v2843 = vpack.c.bf16 %v2816, %v2815
    %v2844 = vpack.c.bf16 %v2818, %v2817
    %v2845 = vpack.c.bf16 %v2820, %v2819
    %v2846 = vpack.c.bf16 %v2822, %v2821
    %v2847 = vpack.c.bf16 %v2824, %v2823
    %v2848 = vpack.c.bf16 %v2826, %v2825
    %v2849 = vpack.c.bf16 %v2828, %v2827
    %v2850 = vpack.c.bf16 %v2830, %v2829
    %v2851 = vpack.c.bf16 %v2832, %v2831
    %v2852 = vpack.c.bf16 %v2834, %v2833
    %v2853 = vpack.c.bf16 %v2836, %v2835
    %v2854 = vpack.c.bf16 %v2838, %v2837
    %2871 = vrot.lane.b32.xlu0 %v2839, 32
    %v2872 = vpop.permute.xlu0 %2871
    %2873 = vrot.lane.b32.xlu0 %v2840, 32
    %v2874 = vpop.permute.xlu0 %2873
    %2875 = vrot.lane.b32.xlu0 %v2841, 32
    %v2876 = vpop.permute.xlu0 %2875
    %2877 = vrot.lane.b32.xlu0 %v2842, 32
    %v2878 = vpop.permute.xlu0 %2877
    %2879 = vrot.lane.b32.xlu0 %v2843, 32
    %v2880 = vpop.permute.xlu0 %2879
    %2881 = vrot.lane.b32.xlu0 %v2844, 32
    %v2882 = vpop.permute.xlu0 %2881
    %2883 = vrot.lane.b32.xlu0 %v2845, 32
    %v2884 = vpop.permute.xlu0 %2883
    %2885 = vrot.lane.b32.xlu0 %v2846, 32
    %v2886 = vpop.permute.xlu0 %2885
    %2887 = vrot.lane.b32.xlu0 %v2847, 32
    %v2888 = vpop.permute.xlu0 %2887
    %2889 = vrot.lane.b32.xlu0 %v2848, 32
    %v2890 = vpop.permute.xlu0 %2889
    %2891 = vrot.lane.b32.xlu0 %v2849, 32
    %v2892 = vpop.permute.xlu0 %2891
    %2893 = vrot.lane.b32.xlu0 %v2850, 32
    %v2894 = vpop.permute.xlu0 %2893
    %2895 = vrot.lane.b32.xlu0 %v2851, 32
    %v2896 = vpop.permute.xlu0 %2895
    %2897 = vrot.lane.b32.xlu0 %v2852, 32
    %v2898 = vpop.permute.xlu0 %2897
    %2899 = vrot.lane.b32.xlu0 %v2853, 32
    %v2900 = vpop.permute.xlu0 %2899
    %2901 = vrot.lane.b32.xlu0 %v2854, 32
    %v2902 = vpop.permute.xlu0 %2901
    %vm2919 = vcmask 523520
    %2920 = vst.msk [vmem:[#allocation5] sm:$0xff] %vm2919, %v2872
    %2921 = vst.msk [vmem:[#allocation5 + $0x8] sm:$0xff] %vm2919, %v2874
    %2922 = vst.msk [vmem:[#allocation5 + $0x10] sm:$0xff] %vm2919, %v2876
    %2923 = vst.msk [vmem:[#allocation5 + $0x18] sm:$0xff] %vm2919, %v2878
    %2924 = vst.msk [vmem:[#allocation5 + $0x20] sm:$0xff] %vm2919, %v2880
    %2925 = vst.msk [vmem:[#allocation5 + $0x28] sm:$0xff] %vm2919, %v2882
    %2926 = vst.msk [vmem:[#allocation5 + $0x30] sm:$0xff] %vm2919, %v2884
    %2927 = vst.msk [vmem:[#allocation5 + $0x38] sm:$0xff] %vm2919, %v2886
    %2928 = vst.msk [vmem:[#allocation5 + $0x40] sm:$0xff] %vm2919, %v2888
    %2929 = vst.msk [vmem:[#allocation5 + $0x48] sm:$0xff] %vm2919, %v2890
    %2930 = vst.msk [vmem:[#allocation5 + $0x50] sm:$0xff] %vm2919, %v2892
    %2931 = vst.msk [vmem:[#allocation5 + $0x58] sm:$0xff] %vm2919, %v2894
    %2932 = vst.msk [vmem:[#allocation5 + $0x60] sm:$0xff] %vm2919, %v2896
    %2933 = vst.msk [vmem:[#allocation5 + $0x68] sm:$0xff] %vm2919, %v2898
    %2934 = vst.msk [vmem:[#allocation5 + $0x70] sm:$0xff] %vm2919, %v2900
    %2935 = vst.msk [vmem:[#allocation5 + $0x78] sm:$0xff] %vm2919, %v2902
    %v2936 = vld [vmem:[#allocation2] sm:$0xff]
    %v2937 = vld [vmem:[#allocation2 + $0x8] sm:$0xff]
    %v2938 = vld [vmem:[#allocation2 + $0x10] sm:$0xff]
    %v2939 = vld [vmem:[#allocation2 + $0x18] sm:$0xff]
    %v2940 = vld [vmem:[#allocation2 + $0x20] sm:$0xff]
    %v2941 = vld [vmem:[#allocation2 + $0x28] sm:$0xff]
    %v2942 = vld [vmem:[#allocation2 + $0x30] sm:$0xff]
    %v2943 = vld [vmem:[#allocation2 + $0x38] sm:$0xff]
    %v2944 = vld [vmem:[#allocation2 + $0x40] sm:$0xff]
    %v2945 = vld [vmem:[#allocation2 + $0x48] sm:$0xff]
    %v2946 = vld [vmem:[#allocation2 + $0x50] sm:$0xff]
    %v2947 = vld [vmem:[#allocation2 + $0x58] sm:$0xff]
    %v2948 = vld [vmem:[#allocation2 + $0x60] sm:$0xff]
    %v2949 = vld [vmem:[#allocation2 + $0x68] sm:$0xff]
    %v2950 = vld [vmem:[#allocation2 + $0x70] sm:$0xff]
    %v2951 = vld [vmem:[#allocation2 + $0x78] sm:$0xff]
    %v2952 = vld [vmem:[#allocation3] sm:$0xff]
    %v2953 = vld [vmem:[#allocation3 + $0x8] sm:$0xff]
    %v2954 = vld [vmem:[#allocation3 + $0x10] sm:$0xff]
    %v2955 = vld [vmem:[#allocation3 + $0x18] sm:$0xff]
    %v2956 = vld [vmem:[#allocation3 + $0x20] sm:$0xff]
    %v2957 = vld [vmem:[#allocation3 + $0x28] sm:$0xff]
    %v2958 = vld [vmem:[#allocation3 + $0x30] sm:$0xff]
    %v2959 = vld [vmem:[#allocation3 + $0x38] sm:$0xff]
    %v2960 = vld [vmem:[#allocation3 + $0x40] sm:$0xff]
    %v2961 = vld [vmem:[#allocation3 + $0x48] sm:$0xff]
    %v2962 = vld [vmem:[#allocation3 + $0x50] sm:$0xff]
    %v2963 = vld [vmem:[#allocation3 + $0x58] sm:$0xff]
    %v2964 = vld [vmem:[#allocation3 + $0x60] sm:$0xff]
    %v2965 = vld [vmem:[#allocation3 + $0x68] sm:$0xff]
    %v2966 = vld [vmem:[#allocation3 + $0x70] sm:$0xff]
    %v2967 = vld [vmem:[#allocation3 + $0x78] sm:$0xff]
    %v2968 = vld [vmem:[#allocation4] sm:$0xff]
    %v2969 = vld [vmem:[#allocation4 + $0x8] sm:$0xff]
    %v2970 = vld [vmem:[#allocation4 + $0x10] sm:$0xff]
    %v2971 = vld [vmem:[#allocation4 + $0x18] sm:$0xff]
    %v2972 = vld [vmem:[#allocation4 + $0x20] sm:$0xff]
    %v2973 = vld [vmem:[#allocation4 + $0x28] sm:$0xff]
    %v2974 = vld [vmem:[#allocation4 + $0x30] sm:$0xff]
    %v2975 = vld [vmem:[#allocation4 + $0x38] sm:$0xff]
    %v2976 = vld [vmem:[#allocation4 + $0x40] sm:$0xff]
    %v2977 = vld [vmem:[#allocation4 + $0x48] sm:$0xff]
    %v2978 = vld [vmem:[#allocation4 + $0x50] sm:$0xff]
    %v2979 = vld [vmem:[#allocation4 + $0x58] sm:$0xff]
    %v2980 = vld [vmem:[#allocation4 + $0x60] sm:$0xff]
    %v2981 = vld [vmem:[#allocation4 + $0x68] sm:$0xff]
    %v2982 = vld [vmem:[#allocation4 + $0x70] sm:$0xff]
    %v2983 = vld [vmem:[#allocation4 + $0x78] sm:$0xff]
    %2992 = vrot.lane.b32.xlu0 %v2936, 64
    %v2993 = vpop.permute.xlu0 %2992
    %2994 = vrot.lane.b32.xlu0 %v2937, 64
    %v2995 = vpop.permute.xlu0 %2994
    %2996 = vrot.lane.b32.xlu0 %v2938, 64
    %v2997 = vpop.permute.xlu0 %2996
    %2998 = vrot.lane.b32.xlu0 %v2939, 64
    %v2999 = vpop.permute.xlu0 %2998
    %3000 = vrot.lane.b32.xlu0 %v2940, 64
    %v3001 = vpop.permute.xlu0 %3000
    %3002 = vrot.lane.b32.xlu0 %v2941, 64
    %v3003 = vpop.permute.xlu0 %3002
    %3004 = vrot.lane.b32.xlu0 %v2942, 64
    %v3005 = vpop.permute.xlu0 %3004
    %3006 = vrot.lane.b32.xlu0 %v2943, 64
    %v3007 = vpop.permute.xlu0 %3006
    %3016 = vrot.lane.b32.xlu0 %v2952, 64
    %v3017 = vpop.permute.xlu0 %3016
    %3018 = vrot.lane.b32.xlu0 %v2953, 64
    %v3019 = vpop.permute.xlu0 %3018
    %3020 = vrot.lane.b32.xlu0 %v2954, 64
    %v3021 = vpop.permute.xlu0 %3020
    %3022 = vrot.lane.b32.xlu0 %v2955, 64
    %v3023 = vpop.permute.xlu0 %3022
    %3024 = vrot.lane.b32.xlu0 %v2956, 64
    %v3025 = vpop.permute.xlu0 %3024
    %3026 = vrot.lane.b32.xlu0 %v2957, 64
    %v3027 = vpop.permute.xlu0 %3026
    %3028 = vrot.lane.b32.xlu0 %v2958, 64
    %v3029 = vpop.permute.xlu0 %3028
    %3030 = vrot.lane.b32.xlu0 %v2959, 64
    %v3031 = vpop.permute.xlu0 %3030
    %v3033 = vsel %vm1022, %v2993, 0
    %v3036 = vsel %vm1022, %v2995, 0
    %v3039 = vsel %vm1022, %v2997, 0
    %v3042 = vsel %vm1022, %v2999, 0
    %v3045 = vsel %vm1022, %v3001, 0
    %v3048 = vsel %vm1022, %v3003, 0
    %v3051 = vsel %vm1022, %v3005, 0
    %v3054 = vsel %vm1022, %v3007, 0
    %v3057 = vsel %vm1022, %v3017, 0
    %v3060 = vsel %vm1022, %v3019, 0
    %v3063 = vsel %vm1022, %v3021, 0
    %v3066 = vsel %vm1022, %v3023, 0
    %v3069 = vsel %vm1022, %v3025, 0
    %v3072 = vsel %vm1022, %v3027, 0
    %v3075 = vsel %vm1022, %v3029, 0
    %v3078 = vsel %vm1022, %v3031, 0
    %3080 = vmatprep.subr.bf16.mxu0 0
    %3081 = vmatpush1.bf16.xpose.msra.mxu0 %v3057
    %3082 = vmatprep.subr.bf16.mxu0 0
    %3083 = vmatpush1.bf16.xpose.msra.mxu0 %v3060
    %3084 = vmatprep.subr.bf16.mxu0 0
    %3085 = vmatpush1.bf16.xpose.msra.mxu0 %v3063
    %3086 = vmatprep.subr.bf16.mxu0 0
    %3087 = vmatpush1.bf16.xpose.msra.mxu0 %v3066
    %3088 = vmatprep.subr.bf16.mxu0 0
    %3089 = vmatpush1.bf16.xpose.msra.mxu0 %v3069
    %3090 = vmatprep.subr.bf16.mxu0 0
    %3091 = vmatpush1.bf16.xpose.msra.mxu0 %v3072
    %3092 = vmatprep.subr.bf16.mxu0 0
    %3093 = vmatpush1.bf16.xpose.msra.mxu0 %v3075
    %3094 = vmatprep.subr.bf16.mxu0 0
    %3095 = vmatpush1.bf16.xpose.msra.mxu0 %v3078
    %3096 = vmatprep.subr.bf16.mxu0 0
    %3097 = vmatpush1.bf16.xpose.msra.mxu0 0
    %3098 = vmatprep.subr.bf16.mxu0 0
    %3099 = vmatpush1.bf16.xpose.msra.mxu0 0
    %3100 = vmatprep.subr.bf16.mxu0 0
    %3101 = vmatpush1.bf16.xpose.msra.mxu0 0
    %3102 = vmatprep.subr.bf16.mxu0 0
    %3103 = vmatpush1.bf16.xpose.msra.mxu0 0
    %3104 = vmatprep.subr.bf16.mxu0 0
    %3105 = vmatpush1.bf16.xpose.msra.mxu0 0
    %3106 = vmatprep.subr.bf16.mxu0 0
    %3107 = vmatpush1.bf16.xpose.msra.mxu0 0
    %3108 = vmatprep.subr.bf16.mxu0 0
    %3109 = vmatpush1.bf16.xpose.msra.mxu0 0
    %3110 = vmatprep.subr.bf16.mxu0 0
    %3111 = vmatpush1.bf16.xpose.msra.mxu0 0
    %3112 = vmatprep.mubr.bf16.mxu0 0
    %3113 = vmatmul.mubr.bf16.gmra.mrb[0].mxu0 %v3033
    %v3114 = vpop.f32.mrb[0].mxu0
    %v3115 = vadd.f32 0.0, %v3114
    %v3116 = vpop.f32.mrb[0].mxu0
    %v3117 = vpop.f32.mrb[0].mxu0
    %v3118 = vadd.f32 0.0, %v3117
    %v3119 = vpop.f32.mrb[0].mxu0
    %3120 = vmatprep.mubr.bf16.mxu0 0
    %3121 = vmatmul.mubr.bf16.gmra.mrb[0].mxu0 %v3036
    %v3122 = vpop.f32.mrb[0].mxu0
    %v3123 = vadd.f32 0.0, %v3122
    %v3124 = vpop.f32.mrb[0].mxu0
    %v3125 = vpop.f32.mrb[0].mxu0
    %v3126 = vadd.f32 0.0, %v3125
    %v3127 = vpop.f32.mrb[0].mxu0
    %3128 = vmatprep.mubr.bf16.mxu0 0
    %3129 = vmatmul.mubr.bf16.gmra.mrb[0].mxu0 %v3039
    %v3130 = vpop.f32.mrb[0].mxu0
    %v3131 = vadd.f32 0.0, %v3130
    %v3132 = vpop.f32.mrb[0].mxu0
    %v3133 = vpop.f32.mrb[0].mxu0
    %v3134 = vadd.f32 0.0, %v3133
    %v3135 = vpop.f32.mrb[0].mxu0
    %3136 = vmatprep.mubr.bf16.mxu0 0
    %3137 = vmatmul.mubr.bf16.gmra.mrb[0].mxu0 %v3042
    %v3138 = vpop.f32.mrb[0].mxu0
    %v3139 = vadd.f32 0.0, %v3138
    %v3140 = vpop.f32.mrb[0].mxu0
    %v3141 = vpop.f32.mrb[0].mxu0
    %v3142 = vadd.f32 0.0, %v3141
    %v3143 = vpop.f32.mrb[0].mxu0
    %3144 = vmatprep.mubr.bf16.mxu0 0
    %3145 = vmatmul.mubr.bf16.gmra.mrb[0].mxu0 %v3045
    %v3146 = vpop.f32.mrb[0].mxu0
    %v3147 = vadd.f32 0.0, %v3146
    %v3148 = vpop.f32.mrb[0].mxu0
    %v3149 = vpop.f32.mrb[0].mxu0
    %v3150 = vadd.f32 0.0, %v3149
    %v3151 = vpop.f32.mrb[0].mxu0
    %3152 = vmatprep.mubr.bf16.mxu0 0
    %3153 = vmatmul.mubr.bf16.gmra.mrb[0].mxu0 %v3048
    %v3154 = vpop.f32.mrb[0].mxu0
    %v3155 = vadd.f32 0.0, %v3154
    %v3156 = vpop.f32.mrb[0].mxu0
    %v3157 = vpop.f32.mrb[0].mxu0
    %v3158 = vadd.f32 0.0, %v3157
    %v3159 = vpop.f32.mrb[0].mxu0
    %3160 = vmatprep.mubr.bf16.mxu0 0
    %3161 = vmatmul.mubr.bf16.gmra.mrb[0].mxu0 %v3051
    %v3162 = vpop.f32.mrb[0].mxu0
    %v3163 = vadd.f32 0.0, %v3162
    %v3164 = vpop.f32.mrb[0].mxu0
    %v3165 = vpop.f32.mrb[0].mxu0
    %v3166 = vadd.f32 0.0, %v3165
    %v3167 = vpop.f32.mrb[0].mxu0
    %3168 = vmatprep.mubr.bf16.mxu0 0
    %3169 = vmatmul.mubr.bf16.gmra.mrb[0].mxu0 %v3054
    %v3170 = vpop.f32.mrb[0].mxu0
    %v3171 = vadd.f32 0.0, %v3170
    %v3172 = vpop.f32.mrb[0].mxu0
    %v3173 = vpop.f32.mrb[0].mxu0
    %v3174 = vadd.f32 0.0, %v3173
    %v3175 = vpop.f32.mrb[0].mxu0
    %3176 = vdwg.mxu0
    %3185 = vrot.lane.b32.xlu0 %v2944, 64
    %v3186 = vpop.permute.xlu0 %3185
    %3187 = vrot.lane.b32.xlu0 %v2945, 64
    %v3188 = vpop.permute.xlu0 %3187
    %3189 = vrot.lane.b32.xlu0 %v2946, 64
    %v3190 = vpop.permute.xlu0 %3189
    %3191 = vrot.lane.b32.xlu0 %v2947, 64
    %v3192 = vpop.permute.xlu0 %3191
    %3193 = vrot.lane.b32.xlu0 %v2948, 64
    %v3194 = vpop.permute.xlu0 %3193
    %3195 = vrot.lane.b32.xlu0 %v2949, 64
    %v3196 = vpop.permute.xlu0 %3195
    %3197 = vrot.lane.b32.xlu0 %v2950, 64
    %v3198 = vpop.permute.xlu0 %3197
    %3199 = vrot.lane.b32.xlu0 %v2951, 64
    %v3200 = vpop.permute.xlu0 %3199
    %3209 = vrot.lane.b32.xlu0 %v2960, 64
    %v3210 = vpop.permute.xlu0 %3209
    %3211 = vrot.lane.b32.xlu0 %v2961, 64
    %v3212 = vpop.permute.xlu0 %3211
    %3213 = vrot.lane.b32.xlu0 %v2962, 64
    %v3214 = vpop.permute.xlu0 %3213
    %3215 = vrot.lane.b32.xlu0 %v2963, 64
    %v3216 = vpop.permute.xlu0 %3215
    %3217 = vrot.lane.b32.xlu0 %v2964, 64
    %v3218 = vpop.permute.xlu0 %3217
    %3219 = vrot.lane.b32.xlu0 %v2965, 64
    %v3220 = vpop.permute.xlu0 %3219
    %3221 = vrot.lane.b32.xlu0 %v2966, 64
    %v3222 = vpop.permute.xlu0 %3221
    %3223 = vrot.lane.b32.xlu0 %v2967, 64
    %v3224 = vpop.permute.xlu0 %3223
    %v3226 = vsel %vm1022, %v3186, 0
    %v3229 = vsel %vm1022, %v3188, 0
    %v3232 = vsel %vm1022, %v3190, 0
    %v3235 = vsel %vm1022, %v3192, 0
    %v3238 = vsel %vm1022, %v3194, 0
    %v3241 = vsel %vm1022, %v3196, 0
    %v3244 = vsel %vm1022, %v3198, 0
    %v3247 = vsel %vm1022, %v3200, 0
    %v3250 = vsel %vm1022, %v3210, 0
    %v3253 = vsel %vm1022, %v3212, 0
    %v3256 = vsel %vm1022, %v3214, 0
    %v3259 = vsel %vm1022, %v3216, 0
    %v3262 = vsel %vm1022, %v3218, 0
    %v3265 = vsel %vm1022, %v3220, 0
    %v3268 = vsel %vm1022, %v3222, 0
    %v3271 = vsel %vm1022, %v3224, 0
    %3273 = vmatprep.subr.bf16.mxu0 0
    %3274 = vmatpush1.bf16.xpose.msra.mxu0 %v3250
    %3275 = vmatprep.subr.bf16.mxu0 0
    %3276 = vmatpush1.bf16.xpose.msra.mxu0 %v3253
    %3277 = vmatprep.subr.bf16.mxu0 0
    %3278 = vmatpush1.bf16.xpose.msra.mxu0 %v3256
    %3279 = vmatprep.subr.bf16.mxu0 0
    %3280 = vmatpush1.bf16.xpose.msra.mxu0 %v3259
    %3281 = vmatprep.subr.bf16.mxu0 0
    %3282 = vmatpush1.bf16.xpose.msra.mxu0 %v3262
    %3283 = vmatprep.subr.bf16.mxu0 0
    %3284 = vmatpush1.bf16.xpose.msra.mxu0 %v3265
    %3285 = vmatprep.subr.bf16.mxu0 0
    %3286 = vmatpush1.bf16.xpose.msra.mxu0 %v3268
    %3287 = vmatprep.subr.bf16.mxu0 0
    %3288 = vmatpush1.bf16.xpose.msra.mxu0 %v3271
    %3289 = vmatprep.subr.bf16.mxu0 0
    %3290 = vmatpush1.bf16.xpose.msra.mxu0 0
    %3291 = vmatprep.subr.bf16.mxu0 0
    %3292 = vmatpush1.bf16.xpose.msra.mxu0 0
    %3293 = vmatprep.subr.bf16.mxu0 0
    %3294 = vmatpush1.bf16.xpose.msra.mxu0 0
    %3295 = vmatprep.subr.bf16.mxu0 0
    %3296 = vmatpush1.bf16.xpose.msra.mxu0 0
    %3297 = vmatprep.subr.bf16.mxu0 0
    %3298 = vmatpush1.bf16.xpose.msra.mxu0 0
    %3299 = vmatprep.subr.bf16.mxu0 0
    %3300 = vmatpush1.bf16.xpose.msra.mxu0 0
    %3301 = vmatprep.subr.bf16.mxu0 0
    %3302 = vmatpush1.bf16.xpose.msra.mxu0 0
    %3303 = vmatprep.subr.bf16.mxu0 0
    %3304 = vmatpush1.bf16.xpose.msra.mxu0 0
    %3305 = vmatprep.mubr.bf16.mxu0 0
    %3306 = vmatmul.mubr.bf16.gmra.mrb[0].mxu0 %v3226
    %v3307 = vpop.f32.mrb[0].mxu0
    %v3308 = vadd.f32 0.0, %v3307
    %v3309 = vpop.f32.mrb[0].mxu0
    %v3310 = vpop.f32.mrb[0].mxu0
    %v3311 = vadd.f32 0.0, %v3310
    %v3312 = vpop.f32.mrb[0].mxu0
    %3313 = vmatprep.mubr.bf16.mxu0 0
    %3314 = vmatmul.mubr.bf16.gmra.mrb[0].mxu0 %v3229
    %v3315 = vpop.f32.mrb[0].mxu0
    %v3316 = vadd.f32 0.0, %v3315
    %v3317 = vpop.f32.mrb[0].mxu0
    %v3318 = vpop.f32.mrb[0].mxu0
    %v3319 = vadd.f32 0.0, %v3318
    %v3320 = vpop.f32.mrb[0].mxu0
    %3321 = vmatprep.mubr.bf16.mxu0 0
    %3322 = vmatmul.mubr.bf16.gmra.mrb[0].mxu0 %v3232
    %v3323 = vpop.f32.mrb[0].mxu0
    %v3324 = vadd.f32 0.0, %v3323
    %v3325 = vpop.f32.mrb[0].mxu0
    %v3326 = vpop.f32.mrb[0].mxu0
    %v3327 = vadd.f32 0.0, %v3326
    %v3328 = vpop.f32.mrb[0].mxu0
    %3329 = vmatprep.mubr.bf16.mxu0 0
    %3330 = vmatmul.mubr.bf16.gmra.mrb[0].mxu0 %v3235
    %v3331 = vpop.f32.mrb[0].mxu0
    %v3332 = vadd.f32 0.0, %v3331
    %v3333 = vpop.f32.mrb[0].mxu0
    %v3334 = vpop.f32.mrb[0].mxu0
    %v3335 = vadd.f32 0.0, %v3334
    %v3336 = vpop.f32.mrb[0].mxu0
    %3337 = vmatprep.mubr.bf16.mxu0 0
    %3338 = vmatmul.mubr.bf16.gmra.mrb[0].mxu0 %v3238
    %v3339 = vpop.f32.mrb[0].mxu0
    %v3340 = vadd.f32 0.0, %v3339
    %v3341 = vpop.f32.mrb[0].mxu0
    %v3342 = vpop.f32.mrb[0].mxu0
    %v3343 = vadd.f32 0.0, %v3342
    %v3344 = vpop.f32.mrb[0].mxu0
    %3345 = vmatprep.mubr.bf16.mxu0 0
    %3346 = vmatmul.mubr.bf16.gmra.mrb[0].mxu0 %v3241
    %v3347 = vpop.f32.mrb[0].mxu0
    %v3348 = vadd.f32 0.0, %v3347
    %v3349 = vpop.f32.mrb[0].mxu0
    %v3350 = vpop.f32.mrb[0].mxu0
    %v3351 = vadd.f32 0.0, %v3350
    %v3352 = vpop.f32.mrb[0].mxu0
    %3353 = vmatprep.mubr.bf16.mxu0 0
    %3354 = vmatmul.mubr.bf16.gmra.mrb[0].mxu0 %v3244
    %v3355 = vpop.f32.mrb[0].mxu0
    %v3356 = vadd.f32 0.0, %v3355
    %v3357 = vpop.f32.mrb[0].mxu0
    %v3358 = vpop.f32.mrb[0].mxu0
    %v3359 = vadd.f32 0.0, %v3358
    %v3360 = vpop.f32.mrb[0].mxu0
    %3361 = vmatprep.mubr.bf16.mxu0 0
    %3362 = vmatmul.mubr.bf16.gmra.mrb[0].mxu0 %v3247
    %v3363 = vpop.f32.mrb[0].mxu0
    %v3364 = vadd.f32 0.0, %v3363
    %v3365 = vpop.f32.mrb[0].mxu0
    %v3366 = vpop.f32.mrb[0].mxu0
    %v3367 = vadd.f32 0.0, %v3366
    %v3368 = vpop.f32.mrb[0].mxu0
    %3369 = vdwg.mxu0
    %3370 = vmax.xlane.f32.xlu0 %v3115
    %v3371 = vpop.xlane.xlu0 %3370
    %3372 = vmax.xlane.f32.xlu0 %v3118
    %v3373 = vpop.xlane.xlu0 %3372
    %3374 = vmax.xlane.f32.xlu0 %v3123
    %v3375 = vpop.xlane.xlu0 %3374
    %3376 = vmax.xlane.f32.xlu0 %v3126
    %v3377 = vpop.xlane.xlu0 %3376
    %3378 = vmax.xlane.f32.xlu0 %v3131
    %v3379 = vpop.xlane.xlu0 %3378
    %3380 = vmax.xlane.f32.xlu0 %v3134
    %v3381 = vpop.xlane.xlu0 %3380
    %3382 = vmax.xlane.f32.xlu0 %v3139
    %v3383 = vpop.xlane.xlu0 %3382
    %3384 = vmax.xlane.f32.xlu0 %v3142
    %v3385 = vpop.xlane.xlu0 %3384
    %3386 = vmax.xlane.f32.xlu0 %v3147
    %v3387 = vpop.xlane.xlu0 %3386
    %3388 = vmax.xlane.f32.xlu0 %v3150
    %v3389 = vpop.xlane.xlu0 %3388
    %3390 = vmax.xlane.f32.xlu0 %v3155
    %v3391 = vpop.xlane.xlu0 %3390
    %3392 = vmax.xlane.f32.xlu0 %v3158
    %v3393 = vpop.xlane.xlu0 %3392
    %3394 = vmax.xlane.f32.xlu0 %v3163
    %v3395 = vpop.xlane.xlu0 %3394
    %3396 = vmax.xlane.f32.xlu0 %v3166
    %v3397 = vpop.xlane.xlu0 %3396
    %3398 = vmax.xlane.f32.xlu0 %v3171
    %v3399 = vpop.xlane.xlu0 %3398
    %3400 = vmax.xlane.f32.xlu0 %v3174
    %v3401 = vpop.xlane.xlu0 %3400
    %3402 = vmax.xlane.f32.xlu0 %v3308
    %v3403 = vpop.xlane.xlu0 %3402
    %3404 = vmax.xlane.f32.xlu0 %v3311
    %v3405 = vpop.xlane.xlu0 %3404
    %3406 = vmax.xlane.f32.xlu0 %v3316
    %v3407 = vpop.xlane.xlu0 %3406
    %3408 = vmax.xlane.f32.xlu0 %v3319
    %v3409 = vpop.xlane.xlu0 %3408
    %3410 = vmax.xlane.f32.xlu0 %v3324
    %v3411 = vpop.xlane.xlu0 %3410
    %3412 = vmax.xlane.f32.xlu0 %v3327
    %v3413 = vpop.xlane.xlu0 %3412
    %3414 = vmax.xlane.f32.xlu0 %v3332
    %v3415 = vpop.xlane.xlu0 %3414
    %3416 = vmax.xlane.f32.xlu0 %v3335
    %v3417 = vpop.xlane.xlu0 %3416
    %3418 = vmax.xlane.f32.xlu0 %v3340
    %v3419 = vpop.xlane.xlu0 %3418
    %3420 = vmax.xlane.f32.xlu0 %v3343
    %v3421 = vpop.xlane.xlu0 %3420
    %3422 = vmax.xlane.f32.xlu0 %v3348
    %v3423 = vpop.xlane.xlu0 %3422
    %3424 = vmax.xlane.f32.xlu0 %v3351
    %v3425 = vpop.xlane.xlu0 %3424
    %3426 = vmax.xlane.f32.xlu0 %v3356
    %v3427 = vpop.xlane.xlu0 %3426
    %3428 = vmax.xlane.f32.xlu0 %v3359
    %v3429 = vpop.xlane.xlu0 %3428
    %3430 = vmax.xlane.f32.xlu0 %v3364
    %v3431 = vpop.xlane.xlu0 %3430
    %3432 = vmax.xlane.f32.xlu0 %v3367
    %v3433 = vpop.xlane.xlu0 %3432
    %v3434 = vsub.f32 %v3115, %v3371
    %v3435 = vsub.f32 %v3118, %v3373
    %v3436 = vsub.f32 %v3123, %v3375
    %v3437 = vsub.f32 %v3126, %v3377
    %v3438 = vsub.f32 %v3131, %v3379
    %v3439 = vsub.f32 %v3134, %v3381
    %v3440 = vsub.f32 %v3139, %v3383
    %v3441 = vsub.f32 %v3142, %v3385
    %v3442 = vsub.f32 %v3147, %v3387
    %v3443 = vsub.f32 %v3150, %v3389
    %v3444 = vsub.f32 %v3155, %v3391
    %v3445 = vsub.f32 %v3158, %v3393
    %v3446 = vsub.f32 %v3163, %v3395
    %v3447 = vsub.f32 %v3166, %v3397
    %v3448 = vsub.f32 %v3171, %v3399
    %v3449 = vsub.f32 %v3174, %v3401
    %v3450 = vsub.f32 %v3308, %v3403
    %v3451 = vsub.f32 %v3311, %v3405
    %v3452 = vsub.f32 %v3316, %v3407
    %v3453 = vsub.f32 %v3319, %v3409
    %v3454 = vsub.f32 %v3324, %v3411
    %v3455 = vsub.f32 %v3327, %v3413
    %v3456 = vsub.f32 %v3332, %v3415
    %v3457 = vsub.f32 %v3335, %v3417
    %v3458 = vsub.f32 %v3340, %v3419
    %v3459 = vsub.f32 %v3343, %v3421
    %v3460 = vsub.f32 %v3348, %v3423
    %v3461 = vsub.f32 %v3351, %v3425
    %v3462 = vsub.f32 %v3356, %v3427
    %v3463 = vsub.f32 %v3359, %v3429
    %v3464 = vsub.f32 %v3364, %v3431
    %v3465 = vsub.f32 %v3367, %v3433
    %v3466 = vmul.f32 %v3434, 1.442695
    %v3467 = vpow.pop %v3466
    %v3468 = vmul.f32 %v3435, 1.442695
    %v3469 = vpow.pop %v3468
    %v3470 = vmul.f32 %v3436, 1.442695
    %v3471 = vpow.pop %v3470
    %v3472 = vmul.f32 %v3437, 1.442695
    %v3473 = vpow.pop %v3472
    %v3474 = vmul.f32 %v3438, 1.442695
    %v3475 = vpow.pop %v3474
    %v3476 = vmul.f32 %v3439, 1.442695
    %v3477 = vpow.pop %v3476
    %v3478 = vmul.f32 %v3440, 1.442695
    %v3479 = vpow.pop %v3478
    %v3480 = vmul.f32 %v3441, 1.442695
    %v3481 = vpow.pop %v3480
    %v3482 = vmul.f32 %v3442, 1.442695
    %v3483 = vpow.pop %v3482
    %v3484 = vmul.f32 %v3443, 1.442695
    %v3485 = vpow.pop %v3484
    %v3486 = vmul.f32 %v3444, 1.442695
    %v3487 = vpow.pop %v3486
    %v3488 = vmul.f32 %v3445, 1.442695
    %v3489 = vpow.pop %v3488
    %v3490 = vmul.f32 %v3446, 1.442695
    %v3491 = vpow.pop %v3490
    %v3492 = vmul.f32 %v3447, 1.442695
    %v3493 = vpow.pop %v3492
    %v3494 = vmul.f32 %v3448, 1.442695
    %v3495 = vpow.pop %v3494
    %v3496 = vmul.f32 %v3449, 1.442695
    %v3497 = vpow.pop %v3496
    %v3498 = vmul.f32 %v3450, 1.442695
    %v3499 = vpow.pop %v3498
    %v3500 = vmul.f32 %v3451, 1.442695
    %v3501 = vpow.pop %v3500
    %v3502 = vmul.f32 %v3452, 1.442695
    %v3503 = vpow.pop %v3502
    %v3504 = vmul.f32 %v3453, 1.442695
    %v3505 = vpow.pop %v3504
    %v3506 = vmul.f32 %v3454, 1.442695
    %v3507 = vpow.pop %v3506
    %v3508 = vmul.f32 %v3455, 1.442695
    %v3509 = vpow.pop %v3508
    %v3510 = vmul.f32 %v3456, 1.442695
    %v3511 = vpow.pop %v3510
    %v3512 = vmul.f32 %v3457, 1.442695
    %v3513 = vpow.pop %v3512
    %v3514 = vmul.f32 %v3458, 1.442695
    %v3515 = vpow.pop %v3514
    %v3516 = vmul.f32 %v3459, 1.442695
    %v3517 = vpow.pop %v3516
    %v3518 = vmul.f32 %v3460, 1.442695
    %v3519 = vpow.pop %v3518
    %v3520 = vmul.f32 %v3461, 1.442695
    %v3521 = vpow.pop %v3520
    %v3522 = vmul.f32 %v3462, 1.442695
    %v3523 = vpow.pop %v3522
    %v3524 = vmul.f32 %v3463, 1.442695
    %v3525 = vpow.pop %v3524
    %v3526 = vmul.f32 %v3464, 1.442695
    %v3527 = vpow.pop %v3526
    %v3528 = vmul.f32 %v3465, 1.442695
    %v3529 = vpow.pop %v3528
    %3530 = vadd.xlane.f32.xlu0 %v3467
    %v3531 = vpop.xlane.xlu0 %3530
    %3532 = vadd.xlane.f32.xlu0 %v3469
    %v3533 = vpop.xlane.xlu0 %3532
    %3534 = vadd.xlane.f32.xlu0 %v3471
    %v3535 = vpop.xlane.xlu0 %3534
    %3536 = vadd.xlane.f32.xlu0 %v3473
    %v3537 = vpop.xlane.xlu0 %3536
    %3538 = vadd.xlane.f32.xlu0 %v3475
    %v3539 = vpop.xlane.xlu0 %3538
    %3540 = vadd.xlane.f32.xlu0 %v3477
    %v3541 = vpop.xlane.xlu0 %3540
    %3542 = vadd.xlane.f32.xlu0 %v3479
    %v3543 = vpop.xlane.xlu0 %3542
    %3544 = vadd.xlane.f32.xlu0 %v3481
    %v3545 = vpop.xlane.xlu0 %3544
    %3546 = vadd.xlane.f32.xlu0 %v3483
    %v3547 = vpop.xlane.xlu0 %3546
    %3548 = vadd.xlane.f32.xlu0 %v3485
    %v3549 = vpop.xlane.xlu0 %3548
    %3550 = vadd.xlane.f32.xlu0 %v3487
    %v3551 = vpop.xlane.xlu0 %3550
    %3552 = vadd.xlane.f32.xlu0 %v3489
    %v3553 = vpop.xlane.xlu0 %3552
    %3554 = vadd.xlane.f32.xlu0 %v3491
    %v3555 = vpop.xlane.xlu0 %3554
    %3556 = vadd.xlane.f32.xlu0 %v3493
    %v3557 = vpop.xlane.xlu0 %3556
    %3558 = vadd.xlane.f32.xlu0 %v3495
    %v3559 = vpop.xlane.xlu0 %3558
    %3560 = vadd.xlane.f32.xlu0 %v3497
    %v3561 = vpop.xlane.xlu0 %3560
    %3562 = vadd.xlane.f32.xlu0 %v3499
    %v3563 = vpop.xlane.xlu0 %3562
    %3564 = vadd.xlane.f32.xlu0 %v3501
    %v3565 = vpop.xlane.xlu0 %3564
    %3566 = vadd.xlane.f32.xlu0 %v3503
    %v3567 = vpop.xlane.xlu0 %3566
    %3568 = vadd.xlane.f32.xlu0 %v3505
    %v3569 = vpop.xlane.xlu0 %3568
    %3570 = vadd.xlane.f32.xlu0 %v3507
    %v3571 = vpop.xlane.xlu0 %3570
    %3572 = vadd.xlane.f32.xlu0 %v3509
    %v3573 = vpop.xlane.xlu0 %3572
    %3574 = vadd.xlane.f32.xlu0 %v3511
    %v3575 = vpop.xlane.xlu0 %3574
    %3576 = vadd.xlane.f32.xlu0 %v3513
    %v3577 = vpop.xlane.xlu0 %3576
    %3578 = vadd.xlane.f32.xlu0 %v3515
    %v3579 = vpop.xlane.xlu0 %3578
    %3580 = vadd.xlane.f32.xlu0 %v3517
    %v3581 = vpop.xlane.xlu0 %3580
    %3582 = vadd.xlane.f32.xlu0 %v3519
    %v3583 = vpop.xlane.xlu0 %3582
    %3584 = vadd.xlane.f32.xlu0 %v3521
    %v3585 = vpop.xlane.xlu0 %3584
    %3586 = vadd.xlane.f32.xlu0 %v3523
    %v3587 = vpop.xlane.xlu0 %3586
    %3588 = vadd.xlane.f32.xlu0 %v3525
    %v3589 = vpop.xlane.xlu0 %3588
    %3590 = vadd.xlane.f32.xlu0 %v3527
    %v3591 = vpop.xlane.xlu0 %3590
    %3592 = vadd.xlane.f32.xlu0 %v3529
    %v3593 = vpop.xlane.xlu0 %3592
    %v3594 = vpack.c.bf16 %v3469, %v3467
    %v3595 = vpack.c.bf16 %v3473, %v3471
    %v3596 = vpack.c.bf16 %v3477, %v3475
    %v3597 = vpack.c.bf16 %v3481, %v3479
    %v3598 = vpack.c.bf16 %v3485, %v3483
    %v3599 = vpack.c.bf16 %v3489, %v3487
    %v3600 = vpack.c.bf16 %v3493, %v3491
    %v3601 = vpack.c.bf16 %v3497, %v3495
    %v3602 = vpack.c.bf16 %v3501, %v3499
    %v3603 = vpack.c.bf16 %v3505, %v3503
    %v3604 = vpack.c.bf16 %v3509, %v3507
    %v3605 = vpack.c.bf16 %v3513, %v3511
    %v3606 = vpack.c.bf16 %v3517, %v3515
    %v3607 = vpack.c.bf16 %v3521, %v3519
    %v3608 = vpack.c.bf16 %v3525, %v3523
    %v3609 = vpack.c.bf16 %v3529, %v3527
    %3618 = vrot.lane.b32.xlu0 %v2968, 64
    %v3619 = vpop.permute.xlu0 %3618
    %3620 = vrot.lane.b32.xlu0 %v2969, 64
    %v3621 = vpop.permute.xlu0 %3620
    %3622 = vrot.lane.b32.xlu0 %v2970, 64
    %v3623 = vpop.permute.xlu0 %3622
    %3624 = vrot.lane.b32.xlu0 %v2971, 64
    %v3625 = vpop.permute.xlu0 %3624
    %3626 = vrot.lane.b32.xlu0 %v2972, 64
    %v3627 = vpop.permute.xlu0 %3626
    %3628 = vrot.lane.b32.xlu0 %v2973, 64
    %v3629 = vpop.permute.xlu0 %3628
    %3630 = vrot.lane.b32.xlu0 %v2974, 64
    %v3631 = vpop.permute.xlu0 %3630
    %3632 = vrot.lane.b32.xlu0 %v2975, 64
    %v3633 = vpop.permute.xlu0 %3632
    %3642 = vmatprep.subr.bf16.mxu0 0
    %3643 = vmatpush1.bf16.msra.mxu0 %v3619
    %3644 = vmatprep.subr.bf16.mxu0 0
    %3645 = vmatpush1.bf16.msra.mxu0 %v3621
    %3646 = vmatprep.subr.bf16.mxu0 0
    %3647 = vmatpush1.bf16.msra.mxu0 %v3623
    %3648 = vmatprep.subr.bf16.mxu0 0
    %3649 = vmatpush1.bf16.msra.mxu0 %v3625
    %3650 = vmatprep.subr.bf16.mxu0 0
    %3651 = vmatpush1.bf16.msra.mxu0 %v3627
    %3652 = vmatprep.subr.bf16.mxu0 0
    %3653 = vmatpush1.bf16.msra.mxu0 %v3629
    %3654 = vmatprep.subr.bf16.mxu0 0
    %3655 = vmatpush1.bf16.msra.mxu0 %v3631
    %3656 = vmatprep.subr.bf16.mxu0 0
    %3657 = vmatpush1.bf16.msra.mxu0 %v3633
    %3658 = vmatprep.subr.bf16.mxu0 0
    %3659 = vmatpush1.bf16.msra.mxu0 0
    %3660 = vmatprep.subr.bf16.mxu0 0
    %3661 = vmatpush1.bf16.msra.mxu0 0
    %3662 = vmatprep.subr.bf16.mxu0 0
    %3663 = vmatpush1.bf16.msra.mxu0 0
    %3664 = vmatprep.subr.bf16.mxu0 0
    %3665 = vmatpush1.bf16.msra.mxu0 0
    %3666 = vmatprep.subr.bf16.mxu0 0
    %3667 = vmatpush1.bf16.msra.mxu0 0
    %3668 = vmatprep.subr.bf16.mxu0 0
    %3669 = vmatpush1.bf16.msra.mxu0 0
    %3670 = vmatprep.subr.bf16.mxu0 0
    %3671 = vmatpush1.bf16.msra.mxu0 0
    %3672 = vmatprep.subr.bf16.mxu0 0
    %3673 = vmatpush1.bf16.msra.mxu0 0
    %3674 = vmatprep.mubr.bf16.mxu0 0
    %3675 = vmatmul.mubr.bf16.gmra.mrb[0].mxu0 %v3594
    %v3676 = vpop.f32.mrb[0].mxu0
    %v3677 = vadd.f32 0.0, %v3676
    %v3678 = vpop.f32.mrb[0].mxu0
    %v3679 = vpop.f32.mrb[0].mxu0
    %v3680 = vadd.f32 0.0, %v3679
    %v3681 = vpop.f32.mrb[0].mxu0
    %3682 = vmatprep.mubr.bf16.mxu0 0
    %3683 = vmatmul.mubr.bf16.gmra.mrb[0].mxu0 %v3595
    %v3684 = vpop.f32.mrb[0].mxu0
    %v3685 = vadd.f32 0.0, %v3684
    %v3686 = vpop.f32.mrb[0].mxu0
    %v3687 = vpop.f32.mrb[0].mxu0
    %v3688 = vadd.f32 0.0, %v3687
    %v3689 = vpop.f32.mrb[0].mxu0
    %3690 = vmatprep.mubr.bf16.mxu0 0
    %3691 = vmatmul.mubr.bf16.gmra.mrb[0].mxu0 %v3596
    %v3692 = vpop.f32.mrb[0].mxu0
    %v3693 = vadd.f32 0.0, %v3692
    %v3694 = vpop.f32.mrb[0].mxu0
    %v3695 = vpop.f32.mrb[0].mxu0
    %v3696 = vadd.f32 0.0, %v3695
    %v3697 = vpop.f32.mrb[0].mxu0
    %3698 = vmatprep.mubr.bf16.mxu0 0
    %3699 = vmatmul.mubr.bf16.gmra.mrb[0].mxu0 %v3597
    %v3700 = vpop.f32.mrb[0].mxu0
    %v3701 = vadd.f32 0.0, %v3700
    %v3702 = vpop.f32.mrb[0].mxu0
    %v3703 = vpop.f32.mrb[0].mxu0
    %v3704 = vadd.f32 0.0, %v3703
    %v3705 = vpop.f32.mrb[0].mxu0
    %3706 = vmatprep.mubr.bf16.mxu0 0
    %3707 = vmatmul.mubr.bf16.gmra.mrb[0].mxu0 %v3598
    %v3708 = vpop.f32.mrb[0].mxu0
    %v3709 = vadd.f32 0.0, %v3708
    %v3710 = vpop.f32.mrb[0].mxu0
    %v3711 = vpop.f32.mrb[0].mxu0
    %v3712 = vadd.f32 0.0, %v3711
    %v3713 = vpop.f32.mrb[0].mxu0
    %3714 = vmatprep.mubr.bf16.mxu0 0
    %3715 = vmatmul.mubr.bf16.gmra.mrb[0].mxu0 %v3599
    %v3716 = vpop.f32.mrb[0].mxu0
    %v3717 = vadd.f32 0.0, %v3716
    %v3718 = vpop.f32.mrb[0].mxu0
    %v3719 = vpop.f32.mrb[0].mxu0
    %v3720 = vadd.f32 0.0, %v3719
    %v3721 = vpop.f32.mrb[0].mxu0
    %3722 = vmatprep.mubr.bf16.mxu0 0
    %3723 = vmatmul.mubr.bf16.gmra.mrb[0].mxu0 %v3600
    %v3724 = vpop.f32.mrb[0].mxu0
    %v3725 = vadd.f32 0.0, %v3724
    %v3726 = vpop.f32.mrb[0].mxu0
    %v3727 = vpop.f32.mrb[0].mxu0
    %v3728 = vadd.f32 0.0, %v3727
    %v3729 = vpop.f32.mrb[0].mxu0
    %3730 = vmatprep.mubr.bf16.mxu0 0
    %3731 = vmatmul.mubr.bf16.gmra.mrb[0].mxu0 %v3601
    %v3732 = vpop.f32.mrb[0].mxu0
    %v3733 = vadd.f32 0.0, %v3732
    %v3734 = vpop.f32.mrb[0].mxu0
    %v3735 = vpop.f32.mrb[0].mxu0
    %v3736 = vadd.f32 0.0, %v3735
    %v3737 = vpop.f32.mrb[0].mxu0
    %3738 = vdwg.mxu0
    %3747 = vrot.lane.b32.xlu0 %v2976, 64
    %v3748 = vpop.permute.xlu0 %3747
    %3749 = vrot.lane.b32.xlu0 %v2977, 64
    %v3750 = vpop.permute.xlu0 %3749
    %3751 = vrot.lane.b32.xlu0 %v2978, 64
    %v3752 = vpop.permute.xlu0 %3751
    %3753 = vrot.lane.b32.xlu0 %v2979, 64
    %v3754 = vpop.permute.xlu0 %3753
    %3755 = vrot.lane.b32.xlu0 %v2980, 64
    %v3756 = vpop.permute.xlu0 %3755
    %3757 = vrot.lane.b32.xlu0 %v2981, 64
    %v3758 = vpop.permute.xlu0 %3757
    %3759 = vrot.lane.b32.xlu0 %v2982, 64
    %v3760 = vpop.permute.xlu0 %3759
    %3761 = vrot.lane.b32.xlu0 %v2983, 64
    %v3762 = vpop.permute.xlu0 %3761
    %3771 = vmatprep.subr.bf16.mxu0 0
    %3772 = vmatpush1.bf16.msra.mxu0 %v3748
    %3773 = vmatprep.subr.bf16.mxu0 0
    %3774 = vmatpush1.bf16.msra.mxu0 %v3750
    %3775 = vmatprep.subr.bf16.mxu0 0
    %3776 = vmatpush1.bf16.msra.mxu0 %v3752
    %3777 = vmatprep.subr.bf16.mxu0 0
    %3778 = vmatpush1.bf16.msra.mxu0 %v3754
    %3779 = vmatprep.subr.bf16.mxu0 0
    %3780 = vmatpush1.bf16.msra.mxu0 %v3756
    %3781 = vmatprep.subr.bf16.mxu0 0
    %3782 = vmatpush1.bf16.msra.mxu0 %v3758
    %3783 = vmatprep.subr.bf16.mxu0 0
    %3784 = vmatpush1.bf16.msra.mxu0 %v3760
    %3785 = vmatprep.subr.bf16.mxu0 0
    %3786 = vmatpush1.bf16.msra.mxu0 %v3762
    %3787 = vmatprep.subr.bf16.mxu0 0
    %3788 = vmatpush1.bf16.msra.mxu0 0
    %3789 = vmatprep.subr.bf16.mxu0 0
    %3790 = vmatpush1.bf16.msra.mxu0 0
    %3791 = vmatprep.subr.bf16.mxu0 0
    %3792 = vmatpush1.bf16.msra.mxu0 0
    %3793 = vmatprep.subr.bf16.mxu0 0
    %3794 = vmatpush1.bf16.msra.mxu0 0
    %3795 = vmatprep.subr.bf16.mxu0 0
    %3796 = vmatpush1.bf16.msra.mxu0 0
    %3797 = vmatprep.subr.bf16.mxu0 0
    %3798 = vmatpush1.bf16.msra.mxu0 0
    %3799 = vmatprep.subr.bf16.mxu0 0
    %3800 = vmatpush1.bf16.msra.mxu0 0
    %3801 = vmatprep.subr.bf16.mxu0 0
    %3802 = vmatpush1.bf16.msra.mxu0 0
    %3803 = vmatprep.mubr.bf16.mxu0 0
    %3804 = vmatmul.mubr.bf16.gmra.mrb[0].mxu0 %v3602
    %v3805 = vpop.f32.mrb[0].mxu0
    %v3806 = vadd.f32 0.0, %v3805
    %v3807 = vpop.f32.mrb[0].mxu0
    %v3808 = vpop.f32.mrb[0].mxu0
    %v3809 = vadd.f32 0.0, %v3808
    %v3810 = vpop.f32.mrb[0].mxu0
    %3811 = vmatprep.mubr.bf16.mxu0 0
    %3812 = vmatmul.mubr.bf16.gmra.mrb[0].mxu0 %v3603
    %v3813 = vpop.f32.mrb[0].mxu0
    %v3814 = vadd.f32 0.0, %v3813
    %v3815 = vpop.f32.mrb[0].mxu0
    %v3816 = vpop.f32.mrb[0].mxu0
    %v3817 = vadd.f32 0.0, %v3816
    %v3818 = vpop.f32.mrb[0].mxu0
    %3819 = vmatprep.mubr.bf16.mxu0 0
    %3820 = vmatmul.mubr.bf16.gmra.mrb[0].mxu0 %v3604
    %v3821 = vpop.f32.mrb[0].mxu0
    %v3822 = vadd.f32 0.0, %v3821
    %v3823 = vpop.f32.mrb[0].mxu0
    %v3824 = vpop.f32.mrb[0].mxu0
    %v3825 = vadd.f32 0.0, %v3824
    %v3826 = vpop.f32.mrb[0].mxu0
    %3827 = vmatprep.mubr.bf16.mxu0 0
    %3828 = vmatmul.mubr.bf16.gmra.mrb[0].mxu0 %v3605
    %v3829 = vpop.f32.mrb[0].mxu0
    %v3830 = vadd.f32 0.0, %v3829
    %v3831 = vpop.f32.mrb[0].mxu0
    %v3832 = vpop.f32.mrb[0].mxu0
    %v3833 = vadd.f32 0.0, %v3832
    %v3834 = vpop.f32.mrb[0].mxu0
    %3835 = vmatprep.mubr.bf16.mxu0 0
    %3836 = vmatmul.mubr.bf16.gmra.mrb[0].mxu0 %v3606
    %v3837 = vpop.f32.mrb[0].mxu0
    %v3838 = vadd.f32 0.0, %v3837
    %v3839 = vpop.f32.mrb[0].mxu0
    %v3840 = vpop.f32.mrb[0].mxu0
    %v3841 = vadd.f32 0.0, %v3840
    %v3842 = vpop.f32.mrb[0].mxu0
    %3843 = vmatprep.mubr.bf16.mxu0 0
    %3844 = vmatmul.mubr.bf16.gmra.mrb[0].mxu0 %v3607
    %v3845 = vpop.f32.mrb[0].mxu0
    %v3846 = vadd.f32 0.0, %v3845
    %v3847 = vpop.f32.mrb[0].mxu0
    %v3848 = vpop.f32.mrb[0].mxu0
    %v3849 = vadd.f32 0.0, %v3848
    %v3850 = vpop.f32.mrb[0].mxu0
    %3851 = vmatprep.mubr.bf16.mxu0 0
    %3852 = vmatmul.mubr.bf16.gmra.mrb[0].mxu0 %v3608
    %v3853 = vpop.f32.mrb[0].mxu0
    %v3854 = vadd.f32 0.0, %v3853
    %v3855 = vpop.f32.mrb[0].mxu0
    %v3856 = vpop.f32.mrb[0].mxu0
    %v3857 = vadd.f32 0.0, %v3856
    %v3858 = vpop.f32.mrb[0].mxu0
    %3859 = vmatprep.mubr.bf16.mxu0 0
    %3860 = vmatmul.mubr.bf16.gmra.mrb[0].mxu0 %v3609
    %v3861 = vpop.f32.mrb[0].mxu0
    %v3862 = vadd.f32 0.0, %v3861
    %v3863 = vpop.f32.mrb[0].mxu0
    %v3864 = vpop.f32.mrb[0].mxu0
    %v3865 = vadd.f32 0.0, %v3864
    %v3866 = vpop.f32.mrb[0].mxu0
    %3867 = vdwg.mxu0
    %v3868 = vrcp.pop %v3531
    %v3869 = vrcp.pop %v3533
    %v3870 = vrcp.pop %v3535
    %v3871 = vrcp.pop %v3537
    %v3872 = vrcp.pop %v3539
    %v3873 = vrcp.pop %v3541
    %v3874 = vrcp.pop %v3543
    %v3875 = vrcp.pop %v3545
    %v3876 = vrcp.pop %v3547
    %v3877 = vrcp.pop %v3549
    %v3878 = vrcp.pop %v3551
    %v3879 = vrcp.pop %v3553
    %v3880 = vrcp.pop %v3555
    %v3881 = vrcp.pop %v3557
    %v3882 = vrcp.pop %v3559
    %v3883 = vrcp.pop %v3561
    %v3884 = vrcp.pop %v3563
    %v3885 = vrcp.pop %v3565
    %v3886 = vrcp.pop %v3567
    %v3887 = vrcp.pop %v3569
    %v3888 = vrcp.pop %v3571
    %v3889 = vrcp.pop %v3573
    %v3890 = vrcp.pop %v3575
    %v3891 = vrcp.pop %v3577
    %v3892 = vrcp.pop %v3579
    %v3893 = vrcp.pop %v3581
    %v3894 = vrcp.pop %v3583
    %v3895 = vrcp.pop %v3585
    %v3896 = vrcp.pop %v3587
    %v3897 = vrcp.pop %v3589
    %v3898 = vrcp.pop %v3591
    %v3899 = vrcp.pop %v3593
    %v3900 = vmul.f32 %v3677, %v3868
    %v3901 = vmul.f32 %v3680, %v3869
    %v3902 = vmul.f32 %v3685, %v3870
    %v3903 = vmul.f32 %v3688, %v3871
    %v3904 = vmul.f32 %v3693, %v3872
    %v3905 = vmul.f32 %v3696, %v3873
    %v3906 = vmul.f32 %v3701, %v3874
    %v3907 = vmul.f32 %v3704, %v3875
    %v3908 = vmul.f32 %v3709, %v3876
    %v3909 = vmul.f32 %v3712, %v3877
    %v3910 = vmul.f32 %v3717, %v3878
    %v3911 = vmul.f32 %v3720, %v3879
    %v3912 = vmul.f32 %v3725, %v3880
    %v3913 = vmul.f32 %v3728, %v3881
    %v3914 = vmul.f32 %v3733, %v3882
    %v3915 = vmul.f32 %v3736, %v3883
    %v3916 = vmul.f32 %v3806, %v3884
    %v3917 = vmul.f32 %v3809, %v3885
    %v3918 = vmul.f32 %v3814, %v3886
    %v3919 = vmul.f32 %v3817, %v3887
    %v3920 = vmul.f32 %v3822, %v3888
    %v3921 = vmul.f32 %v3825, %v3889
    %v3922 = vmul.f32 %v3830, %v3890
    %v3923 = vmul.f32 %v3833, %v3891
    %v3924 = vmul.f32 %v3838, %v3892
    %v3925 = vmul.f32 %v3841, %v3893
    %v3926 = vmul.f32 %v3846, %v3894
    %v3927 = vmul.f32 %v3849, %v3895
    %v3928 = vmul.f32 %v3854, %v3896
    %v3929 = vmul.f32 %v3857, %v3897
    %v3930 = vmul.f32 %v3862, %v3898
    %v3931 = vmul.f32 %v3865, %v3899
    %v3932 = vpack.c.bf16 %v3901, %v3900
    %v3933 = vpack.c.bf16 %v3903, %v3902
    %v3934 = vpack.c.bf16 %v3905, %v3904
    %v3935 = vpack.c.bf16 %v3907, %v3906
    %v3936 = vpack.c.bf16 %v3909, %v3908
    %v3937 = vpack.c.bf16 %v3911, %v3910
    %v3938 = vpack.c.bf16 %v3913, %v3912
    %v3939 = vpack.c.bf16 %v3915, %v3914
    %v3940 = vpack.c.bf16 %v3917, %v3916
    %v3941 = vpack.c.bf16 %v3919, %v3918
    %v3942 = vpack.c.bf16 %v3921, %v3920
    %v3943 = vpack.c.bf16 %v3923, %v3922
    %v3944 = vpack.c.bf16 %v3925, %v3924
    %v3945 = vpack.c.bf16 %v3927, %v3926
    %v3946 = vpack.c.bf16 %v3929, %v3928
    %v3947 = vpack.c.bf16 %v3931, %v3930
    %3964 = vrot.lane.b32.xlu0 %v3932, 64
    %v3965 = vpop.permute.xlu0 %3964
    %3966 = vrot.lane.b32.xlu0 %v3933, 64
    %v3967 = vpop.permute.xlu0 %3966
    %3968 = vrot.lane.b32.xlu0 %v3934, 64
    %v3969 = vpop.permute.xlu0 %3968
    %3970 = vrot.lane.b32.xlu0 %v3935, 64
    %v3971 = vpop.permute.xlu0 %3970
    %3972 = vrot.lane.b32.xlu0 %v3936, 64
    %v3973 = vpop.permute.xlu0 %3972
    %3974 = vrot.lane.b32.xlu0 %v3937, 64
    %v3975 = vpop.permute.xlu0 %3974
    %3976 = vrot.lane.b32.xlu0 %v3938, 64
    %v3977 = vpop.permute.xlu0 %3976
    %3978 = vrot.lane.b32.xlu0 %v3939, 64
    %v3979 = vpop.permute.xlu0 %3978
    %3980 = vrot.lane.b32.xlu0 %v3940, 64
    %v3981 = vpop.permute.xlu0 %3980
    %3982 = vrot.lane.b32.xlu0 %v3941, 64
    %v3983 = vpop.permute.xlu0 %3982
    %3984 = vrot.lane.b32.xlu0 %v3942, 64
    %v3985 = vpop.permute.xlu0 %3984
    %3986 = vrot.lane.b32.xlu0 %v3943, 64
    %v3987 = vpop.permute.xlu0 %3986
    %3988 = vrot.lane.b32.xlu0 %v3944, 64
    %v3989 = vpop.permute.xlu0 %3988
    %3990 = vrot.lane.b32.xlu0 %v3945, 64
    %v3991 = vpop.permute.xlu0 %3990
    %3992 = vrot.lane.b32.xlu0 %v3946, 64
    %v3993 = vpop.permute.xlu0 %3992
    %3994 = vrot.lane.b32.xlu0 %v3947, 64
    %v3995 = vpop.permute.xlu0 %3994
    %vm4012 = vcmask 785920
    %4013 = vst.msk [vmem:[#allocation5] sm:$0xff] %vm4012, %v3965
    %4014 = vst.msk [vmem:[#allocation5 + $0x8] sm:$0xff] %vm4012, %v3967
    %4015 = vst.msk [vmem:[#allocation5 + $0x10] sm:$0xff] %vm4012, %v3969
    %4016 = vst.msk [vmem:[#allocation5 + $0x18] sm:$0xff] %vm4012, %v3971
    %4017 = vst.msk [vmem:[#allocation5 + $0x20] sm:$0xff] %vm4012, %v3973
    %4018 = vst.msk [vmem:[#allocation5 + $0x28] sm:$0xff] %vm4012, %v3975
    %4019 = vst.msk [vmem:[#allocation5 + $0x30] sm:$0xff] %vm4012, %v3977
    %4020 = vst.msk [vmem:[#allocation5 + $0x38] sm:$0xff] %vm4012, %v3979
    %4021 = vst.msk [vmem:[#allocation5 + $0x40] sm:$0xff] %vm4012, %v3981
    %4022 = vst.msk [vmem:[#allocation5 + $0x48] sm:$0xff] %vm4012, %v3983
    %4023 = vst.msk [vmem:[#allocation5 + $0x50] sm:$0xff] %vm4012, %v3985
    %4024 = vst.msk [vmem:[#allocation5 + $0x58] sm:$0xff] %vm4012, %v3987
    %4025 = vst.msk [vmem:[#allocation5 + $0x60] sm:$0xff] %vm4012, %v3989
    %4026 = vst.msk [vmem:[#allocation5 + $0x68] sm:$0xff] %vm4012, %v3991
    %4027 = vst.msk [vmem:[#allocation5 + $0x70] sm:$0xff] %vm4012, %v3993
    %4028 = vst.msk [vmem:[#allocation5 + $0x78] sm:$0xff] %vm4012, %v3995
    %v4029 = vld [vmem:[#allocation2] sm:$0xff]
    %v4030 = vld [vmem:[#allocation2 + $0x8] sm:$0xff]
    %v4031 = vld [vmem:[#allocation2 + $0x10] sm:$0xff]
    %v4032 = vld [vmem:[#allocation2 + $0x18] sm:$0xff]
    %v4033 = vld [vmem:[#allocation2 + $0x20] sm:$0xff]
    %v4034 = vld [vmem:[#allocation2 + $0x28] sm:$0xff]
    %v4035 = vld [vmem:[#allocation2 + $0x30] sm:$0xff]
    %v4036 = vld [vmem:[#allocation2 + $0x38] sm:$0xff]
    %v4037 = vld [vmem:[#allocation2 + $0x40] sm:$0xff]
    %v4038 = vld [vmem:[#allocation2 + $0x48] sm:$0xff]
    %v4039 = vld [vmem:[#allocation2 + $0x50] sm:$0xff]
    %v4040 = vld [vmem:[#allocation2 + $0x58] sm:$0xff]
    %v4041 = vld [vmem:[#allocation2 + $0x60] sm:$0xff]
    %v4042 = vld [vmem:[#allocation2 + $0x68] sm:$0xff]
    %v4043 = vld [vmem:[#allocation2 + $0x70] sm:$0xff]
    %v4044 = vld [vmem:[#allocation2 + $0x78] sm:$0xff]
    %v4045 = vld [vmem:[#allocation3] sm:$0xff]
    %v4046 = vld [vmem:[#allocation3 + $0x8] sm:$0xff]
    %v4047 = vld [vmem:[#allocation3 + $0x10] sm:$0xff]
    %v4048 = vld [vmem:[#allocation3 + $0x18] sm:$0xff]
    %v4049 = vld [vmem:[#allocation3 + $0x20] sm:$0xff]
    %v4050 = vld [vmem:[#allocation3 + $0x28] sm:$0xff]
    %v4051 = vld [vmem:[#allocation3 + $0x30] sm:$0xff]
    %v4052 = vld [vmem:[#allocation3 + $0x38] sm:$0xff]
    %v4053 = vld [vmem:[#allocation3 + $0x40] sm:$0xff]
    %v4054 = vld [vmem:[#allocation3 + $0x48] sm:$0xff]
    %v4055 = vld [vmem:[#allocation3 + $0x50] sm:$0xff]
    %v4056 = vld [vmem:[#allocation3 + $0x58] sm:$0xff]
    %v4057 = vld [vmem:[#allocation3 + $0x60] sm:$0xff]
    %v4058 = vld [vmem:[#allocation3 + $0x68] sm:$0xff]
    %v4059 = vld [vmem:[#allocation3 + $0x70] sm:$0xff]
    %v4060 = vld [vmem:[#allocation3 + $0x78] sm:$0xff]
    %v4061 = vld [vmem:[#allocation4] sm:$0xff]
    %v4062 = vld [vmem:[#allocation4 + $0x8] sm:$0xff]
    %v4063 = vld [vmem:[#allocation4 + $0x10] sm:$0xff]
    %v4064 = vld [vmem:[#allocation4 + $0x18] sm:$0xff]
    %v4065 = vld [vmem:[#allocation4 + $0x20] sm:$0xff]
    %v4066 = vld [vmem:[#allocation4 + $0x28] sm:$0xff]
    %v4067 = vld [vmem:[#allocation4 + $0x30] sm:$0xff]
    %v4068 = vld [vmem:[#allocation4 + $0x38] sm:$0xff]
    %v4069 = vld [vmem:[#allocation4 + $0x40] sm:$0xff]
    %v4070 = vld [vmem:[#allocation4 + $0x48] sm:$0xff]
    %v4071 = vld [vmem:[#allocation4 + $0x50] sm:$0xff]
    %v4072 = vld [vmem:[#allocation4 + $0x58] sm:$0xff]
    %v4073 = vld [vmem:[#allocation4 + $0x60] sm:$0xff]
    %v4074 = vld [vmem:[#allocation4 + $0x68] sm:$0xff]
    %v4075 = vld [vmem:[#allocation4 + $0x70] sm:$0xff]
    %v4076 = vld [vmem:[#allocation4 + $0x78] sm:$0xff]
    %4085 = vrot.lane.b32.xlu0 %v4029, 32
    %v4086 = vpop.permute.xlu0 %4085
    %4087 = vrot.lane.b32.xlu0 %v4030, 32
    %v4088 = vpop.permute.xlu0 %4087
    %4089 = vrot.lane.b32.xlu0 %v4031, 32
    %v4090 = vpop.permute.xlu0 %4089
    %4091 = vrot.lane.b32.xlu0 %v4032, 32
    %v4092 = vpop.permute.xlu0 %4091
    %4093 = vrot.lane.b32.xlu0 %v4033, 32
    %v4094 = vpop.permute.xlu0 %4093
    %4095 = vrot.lane.b32.xlu0 %v4034, 32
    %v4096 = vpop.permute.xlu0 %4095
    %4097 = vrot.lane.b32.xlu0 %v4035, 32
    %v4098 = vpop.permute.xlu0 %4097
    %4099 = vrot.lane.b32.xlu0 %v4036, 32
    %v4100 = vpop.permute.xlu0 %4099
    %4109 = vrot.lane.b32.xlu0 %v4045, 32
    %v4110 = vpop.permute.xlu0 %4109
    %4111 = vrot.lane.b32.xlu0 %v4046, 32
    %v4112 = vpop.permute.xlu0 %4111
    %4113 = vrot.lane.b32.xlu0 %v4047, 32
    %v4114 = vpop.permute.xlu0 %4113
    %4115 = vrot.lane.b32.xlu0 %v4048, 32
    %v4116 = vpop.permute.xlu0 %4115
    %4117 = vrot.lane.b32.xlu0 %v4049, 32
    %v4118 = vpop.permute.xlu0 %4117
    %4119 = vrot.lane.b32.xlu0 %v4050, 32
    %v4120 = vpop.permute.xlu0 %4119
    %4121 = vrot.lane.b32.xlu0 %v4051, 32
    %v4122 = vpop.permute.xlu0 %4121
    %4123 = vrot.lane.b32.xlu0 %v4052, 32
    %v4124 = vpop.permute.xlu0 %4123
    %v4126 = vsel %vm1022, %v4086, 0
    %v4129 = vsel %vm1022, %v4088, 0
    %v4132 = vsel %vm1022, %v4090, 0
    %v4135 = vsel %vm1022, %v4092, 0
    %v4138 = vsel %vm1022, %v4094, 0
    %v4141 = vsel %vm1022, %v4096, 0
    %v4144 = vsel %vm1022, %v4098, 0
    %v4147 = vsel %vm1022, %v4100, 0
    %v4150 = vsel %vm1022, %v4110, 0
    %v4153 = vsel %vm1022, %v4112, 0
    %v4156 = vsel %vm1022, %v4114, 0
    %v4159 = vsel %vm1022, %v4116, 0
    %v4162 = vsel %vm1022, %v4118, 0
    %v4165 = vsel %vm1022, %v4120, 0
    %v4168 = vsel %vm1022, %v4122, 0
    %v4171 = vsel %vm1022, %v4124, 0
    %4173 = vmatprep.subr.bf16.mxu0 0
    %4174 = vmatpush1.bf16.xpose.msra.mxu0 %v4150
    %4175 = vmatprep.subr.bf16.mxu0 0
    %4176 = vmatpush1.bf16.xpose.msra.mxu0 %v4153
    %4177 = vmatprep.subr.bf16.mxu0 0
    %4178 = vmatpush1.bf16.xpose.msra.mxu0 %v4156
    %4179 = vmatprep.subr.bf16.mxu0 0
    %4180 = vmatpush1.bf16.xpose.msra.mxu0 %v4159
    %4181 = vmatprep.subr.bf16.mxu0 0
    %4182 = vmatpush1.bf16.xpose.msra.mxu0 %v4162
    %4183 = vmatprep.subr.bf16.mxu0 0
    %4184 = vmatpush1.bf16.xpose.msra.mxu0 %v4165
    %4185 = vmatprep.subr.bf16.mxu0 0
    %4186 = vmatpush1.bf16.xpose.msra.mxu0 %v4168
    %4187 = vmatprep.subr.bf16.mxu0 0
    %4188 = vmatpush1.bf16.xpose.msra.mxu0 %v4171
    %4189 = vmatprep.subr.bf16.mxu0 0
    %4190 = vmatpush1.bf16.xpose.msra.mxu0 0
    %4191 = vmatprep.subr.bf16.mxu0 0
    %4192 = vmatpush1.bf16.xpose.msra.mxu0 0
    %4193 = vmatprep.subr.bf16.mxu0 0
    %4194 = vmatpush1.bf16.xpose.msra.mxu0 0
    %4195 = vmatprep.subr.bf16.mxu0 0
    %4196 = vmatpush1.bf16.xpose.msra.mxu0 0
    %4197 = vmatprep.subr.bf16.mxu0 0
    %4198 = vmatpush1.bf16.xpose.msra.mxu0 0
    %4199 = vmatprep.subr.bf16.mxu0 0
    %4200 = vmatpush1.bf16.xpose.msra.mxu0 0
    %4201 = vmatprep.subr.bf16.mxu0 0
    %4202 = vmatpush1.bf16.xpose.msra.mxu0 0
    %4203 = vmatprep.subr.bf16.mxu0 0
    %4204 = vmatpush1.bf16.xpose.msra.mxu0 0
    %4205 = vmatprep.mubr.bf16.mxu0 0
    %4206 = vmatmul.mubr.bf16.gmra.mrb[0].mxu0 %v4126
    %v4207 = vpop.f32.mrb[0].mxu0
    %v4208 = vadd.f32 0.0, %v4207
    %v4209 = vpop.f32.mrb[0].mxu0
    %v4210 = vpop.f32.mrb[0].mxu0
    %v4211 = vadd.f32 0.0, %v4210
    %v4212 = vpop.f32.mrb[0].mxu0
    %4213 = vmatprep.mubr.bf16.mxu0 0
    %4214 = vmatmul.mubr.bf16.gmra.mrb[0].mxu0 %v4129
    %v4215 = vpop.f32.mrb[0].mxu0
    %v4216 = vadd.f32 0.0, %v4215
    %v4217 = vpop.f32.mrb[0].mxu0
    %v4218 = vpop.f32.mrb[0].mxu0
    %v4219 = vadd.f32 0.0, %v4218
    %v4220 = vpop.f32.mrb[0].mxu0
    %4221 = vmatprep.mubr.bf16.mxu0 0
    %4222 = vmatmul.mubr.bf16.gmra.mrb[0].mxu0 %v4132
    %v4223 = vpop.f32.mrb[0].mxu0
    %v4224 = vadd.f32 0.0, %v4223
    %v4225 = vpop.f32.mrb[0].mxu0
    %v4226 = vpop.f32.mrb[0].mxu0
    %v4227 = vadd.f32 0.0, %v4226
    %v4228 = vpop.f32.mrb[0].mxu0
    %4229 = vmatprep.mubr.bf16.mxu0 0
    %4230 = vmatmul.mubr.bf16.gmra.mrb[0].mxu0 %v4135
    %v4231 = vpop.f32.mrb[0].mxu0
    %v4232 = vadd.f32 0.0, %v4231
    %v4233 = vpop.f32.mrb[0].mxu0
    %v4234 = vpop.f32.mrb[0].mxu0
    %v4235 = vadd.f32 0.0, %v4234
    %v4236 = vpop.f32.mrb[0].mxu0
    %4237 = vmatprep.mubr.bf16.mxu0 0
    %4238 = vmatmul.mubr.bf16.gmra.mrb[0].mxu0 %v4138
    %v4239 = vpop.f32.mrb[0].mxu0
    %v4240 = vadd.f32 0.0, %v4239
    %v4241 = vpop.f32.mrb[0].mxu0
    %v4242 = vpop.f32.mrb[0].mxu0
    %v4243 = vadd.f32 0.0, %v4242
    %v4244 = vpop.f32.mrb[0].mxu0
    %4245 = vmatprep.mubr.bf16.mxu0 0
    %4246 = vmatmul.mubr.bf16.gmra.mrb[0].mxu0 %v4141
    %v4247 = vpop.f32.mrb[0].mxu0
    %v4248 = vadd.f32 0.0, %v4247
    %v4249 = vpop.f32.mrb[0].mxu0
    %v4250 = vpop.f32.mrb[0].mxu0
    %v4251 = vadd.f32 0.0, %v4250
    %v4252 = vpop.f32.mrb[0].mxu0
    %4253 = vmatprep.mubr.bf16.mxu0 0
    %4254 = vmatmul.mubr.bf16.gmra.mrb[0].mxu0 %v4144
    %v4255 = vpop.f32.mrb[0].mxu0
    %v4256 = vadd.f32 0.0, %v4255
    %v4257 = vpop.f32.mrb[0].mxu0
    %v4258 = vpop.f32.mrb[0].mxu0
    %v4259 = vadd.f32 0.0, %v4258
    %v4260 = vpop.f32.mrb[0].mxu0
    %4261 = vmatprep.mubr.bf16.mxu0 0
    %4262 = vmatmul.mubr.bf16.gmra.mrb[0].mxu0 %v4147
    %v4263 = vpop.f32.mrb[0].mxu0
    %v4264 = vadd.f32 0.0, %v4263
    %v4265 = vpop.f32.mrb[0].mxu0
    %v4266 = vpop.f32.mrb[0].mxu0
    %v4267 = vadd.f32 0.0, %v4266
    %v4268 = vpop.f32.mrb[0].mxu0
    %4269 = vdwg.mxu0
    %4278 = vrot.lane.b32.xlu0 %v4037, 32
    %v4279 = vpop.permute.xlu0 %4278
    %4280 = vrot.lane.b32.xlu0 %v4038, 32
    %v4281 = vpop.permute.xlu0 %4280
    %4282 = vrot.lane.b32.xlu0 %v4039, 32
    %v4283 = vpop.permute.xlu0 %4282
    %4284 = vrot.lane.b32.xlu0 %v4040, 32
    %v4285 = vpop.permute.xlu0 %4284
    %4286 = vrot.lane.b32.xlu0 %v4041, 32
    %v4287 = vpop.permute.xlu0 %4286
    %4288 = vrot.lane.b32.xlu0 %v4042, 32
    %v4289 = vpop.permute.xlu0 %4288
    %4290 = vrot.lane.b32.xlu0 %v4043, 32
    %v4291 = vpop.permute.xlu0 %4290
    %4292 = vrot.lane.b32.xlu0 %v4044, 32
    %v4293 = vpop.permute.xlu0 %4292
    %4302 = vrot.lane.b32.xlu0 %v4053, 32
    %v4303 = vpop.permute.xlu0 %4302
    %4304 = vrot.lane.b32.xlu0 %v4054, 32
    %v4305 = vpop.permute.xlu0 %4304
    %4306 = vrot.lane.b32.xlu0 %v4055, 32
    %v4307 = vpop.permute.xlu0 %4306
    %4308 = vrot.lane.b32.xlu0 %v4056, 32
    %v4309 = vpop.permute.xlu0 %4308
    %4310 = vrot.lane.b32.xlu0 %v4057, 32
    %v4311 = vpop.permute.xlu0 %4310
    %4312 = vrot.lane.b32.xlu0 %v4058, 32
    %v4313 = vpop.permute.xlu0 %4312
    %4314 = vrot.lane.b32.xlu0 %v4059, 32
    %v4315 = vpop.permute.xlu0 %4314
    %4316 = vrot.lane.b32.xlu0 %v4060, 32
    %v4317 = vpop.permute.xlu0 %4316
    %v4319 = vsel %vm1022, %v4279, 0
    %v4322 = vsel %vm1022, %v4281, 0
    %v4325 = vsel %vm1022, %v4283, 0
    %v4328 = vsel %vm1022, %v4285, 0
    %v4331 = vsel %vm1022, %v4287, 0
    %v4334 = vsel %vm1022, %v4289, 0
    %v4337 = vsel %vm1022, %v4291, 0
    %v4340 = vsel %vm1022, %v4293, 0
    %v4343 = vsel %vm1022, %v4303, 0
    %v4346 = vsel %vm1022, %v4305, 0
    %v4349 = vsel %vm1022, %v4307, 0
    %v4352 = vsel %vm1022, %v4309, 0
    %v4355 = vsel %vm1022, %v4311, 0
    %v4358 = vsel %vm1022, %v4313, 0
    %v4361 = vsel %vm1022, %v4315, 0
    %v4364 = vsel %vm1022, %v4317, 0
    %4366 = vmatprep.subr.bf16.mxu0 0
    %4367 = vmatpush1.bf16.xpose.msra.mxu0 %v4343
    %4368 = vmatprep.subr.bf16.mxu0 0
    %4369 = vmatpush1.bf16.xpose.msra.mxu0 %v4346
    %4370 = vmatprep.subr.bf16.mxu0 0
    %4371 = vmatpush1.bf16.xpose.msra.mxu0 %v4349
    %4372 = vmatprep.subr.bf16.mxu0 0
    %4373 = vmatpush1.bf16.xpose.msra.mxu0 %v4352
    %4374 = vmatprep.subr.bf16.mxu0 0
    %4375 = vmatpush1.bf16.xpose.msra.mxu0 %v4355
    %4376 = vmatprep.subr.bf16.mxu0 0
    %4377 = vmatpush1.bf16.xpose.msra.mxu0 %v4358
    %4378 = vmatprep.subr.bf16.mxu0 0
    %4379 = vmatpush1.bf16.xpose.msra.mxu0 %v4361
    %4380 = vmatprep.subr.bf16.mxu0 0
    %4381 = vmatpush1.bf16.xpose.msra.mxu0 %v4364
    %4382 = vmatprep.subr.bf16.mxu0 0
    %4383 = vmatpush1.bf16.xpose.msra.mxu0 0
    %4384 = vmatprep.subr.bf16.mxu0 0
    %4385 = vmatpush1.bf16.xpose.msra.mxu0 0
    %4386 = vmatprep.subr.bf16.mxu0 0
    %4387 = vmatpush1.bf16.xpose.msra.mxu0 0
    %4388 = vmatprep.subr.bf16.mxu0 0
    %4389 = vmatpush1.bf16.xpose.msra.mxu0 0
    %4390 = vmatprep.subr.bf16.mxu0 0
    %4391 = vmatpush1.bf16.xpose.msra.mxu0 0
    %4392 = vmatprep.subr.bf16.mxu0 0
    %4393 = vmatpush1.bf16.xpose.msra.mxu0 0
    %4394 = vmatprep.subr.bf16.mxu0 0
    %4395 = vmatpush1.bf16.xpose.msra.mxu0 0
    %4396 = vmatprep.subr.bf16.mxu0 0
    %4397 = vmatpush1.bf16.xpose.msra.mxu0 0
    %4398 = vmatprep.mubr.bf16.mxu0 0
    %4399 = vmatmul.mubr.bf16.gmra.mrb[0].mxu0 %v4319
    %v4400 = vpop.f32.mrb[0].mxu0
    %v4401 = vadd.f32 0.0, %v4400
    %v4402 = vpop.f32.mrb[0].mxu0
    %v4403 = vpop.f32.mrb[0].mxu0
    %v4404 = vadd.f32 0.0, %v4403
    %v4405 = vpop.f32.mrb[0].mxu0
    %4406 = vmatprep.mubr.bf16.mxu0 0
    %4407 = vmatmul.mubr.bf16.gmra.mrb[0].mxu0 %v4322
    %v4408 = vpop.f32.mrb[0].mxu0
    %v4409 = vadd.f32 0.0, %v4408
    %v4410 = vpop.f32.mrb[0].mxu0
    %v4411 = vpop.f32.mrb[0].mxu0
    %v4412 = vadd.f32 0.0, %v4411
    %v4413 = vpop.f32.mrb[0].mxu0
    %4414 = vmatprep.mubr.bf16.mxu0 0
    %4415 = vmatmul.mubr.bf16.gmra.mrb[0].mxu0 %v4325
    %v4416 = vpop.f32.mrb[0].mxu0
    %v4417 = vadd.f32 0.0, %v4416
    %v4418 = vpop.f32.mrb[0].mxu0
    %v4419 = vpop.f32.mrb[0].mxu0
    %v4420 = vadd.f32 0.0, %v4419
    %v4421 = vpop.f32.mrb[0].mxu0
    %4422 = vmatprep.mubr.bf16.mxu0 0
    %4423 = vmatmul.mubr.bf16.gmra.mrb[0].mxu0 %v4328
    %v4424 = vpop.f32.mrb[0].mxu0
    %v4425 = vadd.f32 0.0, %v4424
    %v4426 = vpop.f32.mrb[0].mxu0
    %v4427 = vpop.f32.mrb[0].mxu0
    %v4428 = vadd.f32 0.0, %v4427
    %v4429 = vpop.f32.mrb[0].mxu0
    %4430 = vmatprep.mubr.bf16.mxu0 0
    %4431 = vmatmul.mubr.bf16.gmra.mrb[0].mxu0 %v4331
    %v4432 = vpop.f32.mrb[0].mxu0
    %v4433 = vadd.f32 0.0, %v4432
    %v4434 = vpop.f32.mrb[0].mxu0
    %v4435 = vpop.f32.mrb[0].mxu0
    %v4436 = vadd.f32 0.0, %v4435
    %v4437 = vpop.f32.mrb[0].mxu0
    %4438 = vmatprep.mubr.bf16.mxu0 0
    %4439 = vmatmul.mubr.bf16.gmra.mrb[0].mxu0 %v4334
    %v4440 = vpop.f32.mrb[0].mxu0
    %v4441 = vadd.f32 0.0, %v4440
    %v4442 = vpop.f32.mrb[0].mxu0
    %v4443 = vpop.f32.mrb[0].mxu0
    %v4444 = vadd.f32 0.0, %v4443
    %v4445 = vpop.f32.mrb[0].mxu0
    %4446 = vmatprep.mubr.bf16.mxu0 0
    %4447 = vmatmul.mubr.bf16.gmra.mrb[0].mxu0 %v4337
    %v4448 = vpop.f32.mrb[0].mxu0
    %v4449 = vadd.f32 0.0, %v4448
    %v4450 = vpop.f32.mrb[0].mxu0
    %v4451 = vpop.f32.mrb[0].mxu0
    %v4452 = vadd.f32 0.0, %v4451
    %v4453 = vpop.f32.mrb[0].mxu0
    %4454 = vmatprep.mubr.bf16.mxu0 0
    %4455 = vmatmul.mubr.bf16.gmra.mrb[0].mxu0 %v4340
    %v4456 = vpop.f32.mrb[0].mxu0
    %v4457 = vadd.f32 0.0, %v4456
    %v4458 = vpop.f32.mrb[0].mxu0
    %v4459 = vpop.f32.mrb[0].mxu0
    %v4460 = vadd.f32 0.0, %v4459
    %v4461 = vpop.f32.mrb[0].mxu0
    %4462 = vdwg.mxu0
    %4463 = vmax.xlane.f32.xlu0 %v4208
    %v4464 = vpop.xlane.xlu0 %4463
    %4465 = vmax.xlane.f32.xlu0 %v4211
    %v4466 = vpop.xlane.xlu0 %4465
    %4467 = vmax.xlane.f32.xlu0 %v4216
    %v4468 = vpop.xlane.xlu0 %4467
    %4469 = vmax.xlane.f32.xlu0 %v4219
    %v4470 = vpop.xlane.xlu0 %4469
    %4471 = vmax.xlane.f32.xlu0 %v4224
    %v4472 = vpop.xlane.xlu0 %4471
    %4473 = vmax.xlane.f32.xlu0 %v4227
    %v4474 = vpop.xlane.xlu0 %4473
    %4475 = vmax.xlane.f32.xlu0 %v4232
    %v4476 = vpop.xlane.xlu0 %4475
    %4477 = vmax.xlane.f32.xlu0 %v4235
    %v4478 = vpop.xlane.xlu0 %4477
    %4479 = vmax.xlane.f32.xlu0 %v4240
    %v4480 = vpop.xlane.xlu0 %4479
    %4481 = vmax.xlane.f32.xlu0 %v4243
    %v4482 = vpop.xlane.xlu0 %4481
    %4483 = vmax.xlane.f32.xlu0 %v4248
    %v4484 = vpop.xlane.xlu0 %4483
    %4485 = vmax.xlane.f32.xlu0 %v4251
    %v4486 = vpop.xlane.xlu0 %4485
    %4487 = vmax.xlane.f32.xlu0 %v4256
    %v4488 = vpop.xlane.xlu0 %4487
    %4489 = vmax.xlane.f32.xlu0 %v4259
    %v4490 = vpop.xlane.xlu0 %4489
    %4491 = vmax.xlane.f32.xlu0 %v4264
    %v4492 = vpop.xlane.xlu0 %4491
    %4493 = vmax.xlane.f32.xlu0 %v4267
    %v4494 = vpop.xlane.xlu0 %4493
    %4495 = vmax.xlane.f32.xlu0 %v4401
    %v4496 = vpop.xlane.xlu0 %4495
    %4497 = vmax.xlane.f32.xlu0 %v4404
    %v4498 = vpop.xlane.xlu0 %4497
    %4499 = vmax.xlane.f32.xlu0 %v4409
    %v4500 = vpop.xlane.xlu0 %4499
    %4501 = vmax.xlane.f32.xlu0 %v4412
    %v4502 = vpop.xlane.xlu0 %4501
    %4503 = vmax.xlane.f32.xlu0 %v4417
    %v4504 = vpop.xlane.xlu0 %4503
    %4505 = vmax.xlane.f32.xlu0 %v4420
    %v4506 = vpop.xlane.xlu0 %4505
    %4507 = vmax.xlane.f32.xlu0 %v4425
    %v4508 = vpop.xlane.xlu0 %4507
    %4509 = vmax.xlane.f32.xlu0 %v4428
    %v4510 = vpop.xlane.xlu0 %4509
    %4511 = vmax.xlane.f32.xlu0 %v4433
    %v4512 = vpop.xlane.xlu0 %4511
    %4513 = vmax.xlane.f32.xlu0 %v4436
    %v4514 = vpop.xlane.xlu0 %4513
    %4515 = vmax.xlane.f32.xlu0 %v4441
    %v4516 = vpop.xlane.xlu0 %4515
    %4517 = vmax.xlane.f32.xlu0 %v4444
    %v4518 = vpop.xlane.xlu0 %4517
    %4519 = vmax.xlane.f32.xlu0 %v4449
    %v4520 = vpop.xlane.xlu0 %4519
    %4521 = vmax.xlane.f32.xlu0 %v4452
    %v4522 = vpop.xlane.xlu0 %4521
    %4523 = vmax.xlane.f32.xlu0 %v4457
    %v4524 = vpop.xlane.xlu0 %4523
    %4525 = vmax.xlane.f32.xlu0 %v4460
    %v4526 = vpop.xlane.xlu0 %4525
    %v4527 = vsub.f32 %v4208, %v4464
    %v4528 = vsub.f32 %v4211, %v4466
    %v4529 = vsub.f32 %v4216, %v4468
    %v4530 = vsub.f32 %v4219, %v4470
    %v4531 = vsub.f32 %v4224, %v4472
    %v4532 = vsub.f32 %v4227, %v4474
    %v4533 = vsub.f32 %v4232, %v4476
    %v4534 = vsub.f32 %v4235, %v4478
    %v4535 = vsub.f32 %v4240, %v4480
    %v4536 = vsub.f32 %v4243, %v4482
    %v4537 = vsub.f32 %v4248, %v4484
    %v4538 = vsub.f32 %v4251, %v4486
    %v4539 = vsub.f32 %v4256, %v4488
    %v4540 = vsub.f32 %v4259, %v4490
    %v4541 = vsub.f32 %v4264, %v4492
    %v4542 = vsub.f32 %v4267, %v4494
    %v4543 = vsub.f32 %v4401, %v4496
    %v4544 = vsub.f32 %v4404, %v4498
    %v4545 = vsub.f32 %v4409, %v4500
    %v4546 = vsub.f32 %v4412, %v4502
    %v4547 = vsub.f32 %v4417, %v4504
    %v4548 = vsub.f32 %v4420, %v4506
    %v4549 = vsub.f32 %v4425, %v4508
    %v4550 = vsub.f32 %v4428, %v4510
    %v4551 = vsub.f32 %v4433, %v4512
    %v4552 = vsub.f32 %v4436, %v4514
    %v4553 = vsub.f32 %v4441, %v4516
    %v4554 = vsub.f32 %v4444, %v4518
    %v4555 = vsub.f32 %v4449, %v4520
    %v4556 = vsub.f32 %v4452, %v4522
    %v4557 = vsub.f32 %v4457, %v4524
    %v4558 = vsub.f32 %v4460, %v4526
    %v4559 = vmul.f32 %v4527, 1.442695
    %v4560 = vpow.pop %v4559
    %v4561 = vmul.f32 %v4528, 1.442695
    %v4562 = vpow.pop %v4561
    %v4563 = vmul.f32 %v4529, 1.442695
    %v4564 = vpow.pop %v4563
    %v4565 = vmul.f32 %v4530, 1.442695
    %v4566 = vpow.pop %v4565
    %v4567 = vmul.f32 %v4531, 1.442695
    %v4568 = vpow.pop %v4567
    %v4569 = vmul.f32 %v4532, 1.442695
    %v4570 = vpow.pop %v4569
    %v4571 = vmul.f32 %v4533, 1.442695
    %v4572 = vpow.pop %v4571
    %v4573 = vmul.f32 %v4534, 1.442695
    %v4574 = vpow.pop %v4573
    %v4575 = vmul.f32 %v4535, 1.442695
    %v4576 = vpow.pop %v4575
    %v4577 = vmul.f32 %v4536, 1.442695
    %v4578 = vpow.pop %v4577
    %v4579 = vmul.f32 %v4537, 1.442695
    %v4580 = vpow.pop %v4579
    %v4581 = vmul.f32 %v4538, 1.442695
    %v4582 = vpow.pop %v4581
    %v4583 = vmul.f32 %v4539, 1.442695
    %v4584 = vpow.pop %v4583
    %v4585 = vmul.f32 %v4540, 1.442695
    %v4586 = vpow.pop %v4585
    %v4587 = vmul.f32 %v4541, 1.442695
    %v4588 = vpow.pop %v4587
    %v4589 = vmul.f32 %v4542, 1.442695
    %v4590 = vpow.pop %v4589
    %v4591 = vmul.f32 %v4543, 1.442695
    %v4592 = vpow.pop %v4591
    %v4593 = vmul.f32 %v4544, 1.442695
    %v4594 = vpow.pop %v4593
    %v4595 = vmul.f32 %v4545, 1.442695
    %v4596 = vpow.pop %v4595
    %v4597 = vmul.f32 %v4546, 1.442695
    %v4598 = vpow.pop %v4597
    %v4599 = vmul.f32 %v4547, 1.442695
    %v4600 = vpow.pop %v4599
    %v4601 = vmul.f32 %v4548, 1.442695
    %v4602 = vpow.pop %v4601
    %v4603 = vmul.f32 %v4549, 1.442695
    %v4604 = vpow.pop %v4603
    %v4605 = vmul.f32 %v4550, 1.442695
    %v4606 = vpow.pop %v4605
    %v4607 = vmul.f32 %v4551, 1.442695
    %v4608 = vpow.pop %v4607
    %v4609 = vmul.f32 %v4552, 1.442695
    %v4610 = vpow.pop %v4609
    %v4611 = vmul.f32 %v4553, 1.442695
    %v4612 = vpow.pop %v4611
    %v4613 = vmul.f32 %v4554, 1.442695
    %v4614 = vpow.pop %v4613
    %v4615 = vmul.f32 %v4555, 1.442695
    %v4616 = vpow.pop %v4615
    %v4617 = vmul.f32 %v4556, 1.442695
    %v4618 = vpow.pop %v4617
    %v4619 = vmul.f32 %v4557, 1.442695
    %v4620 = vpow.pop %v4619
    %v4621 = vmul.f32 %v4558, 1.442695
    %v4622 = vpow.pop %v4621
    %4623 = vadd.xlane.f32.xlu0 %v4560
    %v4624 = vpop.xlane.xlu0 %4623
    %4625 = vadd.xlane.f32.xlu0 %v4562
    %v4626 = vpop.xlane.xlu0 %4625
    %4627 = vadd.xlane.f32.xlu0 %v4564
    %v4628 = vpop.xlane.xlu0 %4627
    %4629 = vadd.xlane.f32.xlu0 %v4566
    %v4630 = vpop.xlane.xlu0 %4629
    %4631 = vadd.xlane.f32.xlu0 %v4568
    %v4632 = vpop.xlane.xlu0 %4631
    %4633 = vadd.xlane.f32.xlu0 %v4570
    %v4634 = vpop.xlane.xlu0 %4633
    %4635 = vadd.xlane.f32.xlu0 %v4572
    %v4636 = vpop.xlane.xlu0 %4635
    %4637 = vadd.xlane.f32.xlu0 %v4574
    %v4638 = vpop.xlane.xlu0 %4637
    %4639 = vadd.xlane.f32.xlu0 %v4576
    %v4640 = vpop.xlane.xlu0 %4639
    %4641 = vadd.xlane.f32.xlu0 %v4578
    %v4642 = vpop.xlane.xlu0 %4641
    %4643 = vadd.xlane.f32.xlu0 %v4580
    %v4644 = vpop.xlane.xlu0 %4643
    %4645 = vadd.xlane.f32.xlu0 %v4582
    %v4646 = vpop.xlane.xlu0 %4645
    %4647 = vadd.xlane.f32.xlu0 %v4584
    %v4648 = vpop.xlane.xlu0 %4647
    %4649 = vadd.xlane.f32.xlu0 %v4586
    %v4650 = vpop.xlane.xlu0 %4649
    %4651 = vadd.xlane.f32.xlu0 %v4588
    %v4652 = vpop.xlane.xlu0 %4651
    %4653 = vadd.xlane.f32.xlu0 %v4590
    %v4654 = vpop.xlane.xlu0 %4653
    %4655 = vadd.xlane.f32.xlu0 %v4592
    %v4656 = vpop.xlane.xlu0 %4655
    %4657 = vadd.xlane.f32.xlu0 %v4594
    %v4658 = vpop.xlane.xlu0 %4657
    %4659 = vadd.xlane.f32.xlu0 %v4596
    %v4660 = vpop.xlane.xlu0 %4659
    %4661 = vadd.xlane.f32.xlu0 %v4598
    %v4662 = vpop.xlane.xlu0 %4661
    %4663 = vadd.xlane.f32.xlu0 %v4600
    %v4664 = vpop.xlane.xlu0 %4663
    %4665 = vadd.xlane.f32.xlu0 %v4602
    %v4666 = vpop.xlane.xlu0 %4665
    %4667 = vadd.xlane.f32.xlu0 %v4604
    %v4668 = vpop.xlane.xlu0 %4667
    %4669 = vadd.xlane.f32.xlu0 %v4606
    %v4670 = vpop.xlane.xlu0 %4669
    %4671 = vadd.xlane.f32.xlu0 %v4608
    %v4672 = vpop.xlane.xlu0 %4671
    %4673 = vadd.xlane.f32.xlu0 %v4610
    %v4674 = vpop.xlane.xlu0 %4673
    %4675 = vadd.xlane.f32.xlu0 %v4612
    %v4676 = vpop.xlane.xlu0 %4675
    %4677 = vadd.xlane.f32.xlu0 %v4614
    %v4678 = vpop.xlane.xlu0 %4677
    %4679 = vadd.xlane.f32.xlu0 %v4616
    %v4680 = vpop.xlane.xlu0 %4679
    %4681 = vadd.xlane.f32.xlu0 %v4618
    %v4682 = vpop.xlane.xlu0 %4681
    %4683 = vadd.xlane.f32.xlu0 %v4620
    %v4684 = vpop.xlane.xlu0 %4683
    %4685 = vadd.xlane.f32.xlu0 %v4622
    %v4686 = vpop.xlane.xlu0 %4685
    %v4687 = vpack.c.bf16 %v4562, %v4560
    %v4688 = vpack.c.bf16 %v4566, %v4564
    %v4689 = vpack.c.bf16 %v4570, %v4568
    %v4690 = vpack.c.bf16 %v4574, %v4572
    %v4691 = vpack.c.bf16 %v4578, %v4576
    %v4692 = vpack.c.bf16 %v4582, %v4580
    %v4693 = vpack.c.bf16 %v4586, %v4584
    %v4694 = vpack.c.bf16 %v4590, %v4588
    %v4695 = vpack.c.bf16 %v4594, %v4592
    %v4696 = vpack.c.bf16 %v4598, %v4596
    %v4697 = vpack.c.bf16 %v4602, %v4600
    %v4698 = vpack.c.bf16 %v4606, %v4604
    %v4699 = vpack.c.bf16 %v4610, %v4608
    %v4700 = vpack.c.bf16 %v4614, %v4612
    %v4701 = vpack.c.bf16 %v4618, %v4616
    %v4702 = vpack.c.bf16 %v4622, %v4620
    %4711 = vrot.lane.b32.xlu0 %v4061, 32
    %v4712 = vpop.permute.xlu0 %4711
    %4713 = vrot.lane.b32.xlu0 %v4062, 32
    %v4714 = vpop.permute.xlu0 %4713
    %4715 = vrot.lane.b32.xlu0 %v4063, 32
    %v4716 = vpop.permute.xlu0 %4715
    %4717 = vrot.lane.b32.xlu0 %v4064, 32
    %v4718 = vpop.permute.xlu0 %4717
    %4719 = vrot.lane.b32.xlu0 %v4065, 32
    %v4720 = vpop.permute.xlu0 %4719
    %4721 = vrot.lane.b32.xlu0 %v4066, 32
    %v4722 = vpop.permute.xlu0 %4721
    %4723 = vrot.lane.b32.xlu0 %v4067, 32
    %v4724 = vpop.permute.xlu0 %4723
    %4725 = vrot.lane.b32.xlu0 %v4068, 32
    %v4726 = vpop.permute.xlu0 %4725
    %4735 = vmatprep.subr.bf16.mxu0 0
    %4736 = vmatpush1.bf16.msra.mxu0 %v4712
    %4737 = vmatprep.subr.bf16.mxu0 0
    %4738 = vmatpush1.bf16.msra.mxu0 %v4714
    %4739 = vmatprep.subr.bf16.mxu0 0
    %4740 = vmatpush1.bf16.msra.mxu0 %v4716
    %4741 = vmatprep.subr.bf16.mxu0 0
    %4742 = vmatpush1.bf16.msra.mxu0 %v4718
    %4743 = vmatprep.subr.bf16.mxu0 0
    %4744 = vmatpush1.bf16.msra.mxu0 %v4720
    %4745 = vmatprep.subr.bf16.mxu0 0
    %4746 = vmatpush1.bf16.msra.mxu0 %v4722
    %4747 = vmatprep.subr.bf16.mxu0 0
    %4748 = vmatpush1.bf16.msra.mxu0 %v4724
    %4749 = vmatprep.subr.bf16.mxu0 0
    %4750 = vmatpush1.bf16.msra.mxu0 %v4726
    %4751 = vmatprep.subr.bf16.mxu0 0
    %4752 = vmatpush1.bf16.msra.mxu0 0
    %4753 = vmatprep.subr.bf16.mxu0 0
    %4754 = vmatpush1.bf16.msra.mxu0 0
    %4755 = vmatprep.subr.bf16.mxu0 0
    %4756 = vmatpush1.bf16.msra.mxu0 0
    %4757 = vmatprep.subr.bf16.mxu0 0
    %4758 = vmatpush1.bf16.msra.mxu0 0
    %4759 = vmatprep.subr.bf16.mxu0 0
    %4760 = vmatpush1.bf16.msra.mxu0 0
    %4761 = vmatprep.subr.bf16.mxu0 0
    %4762 = vmatpush1.bf16.msra.mxu0 0
    %4763 = vmatprep.subr.bf16.mxu0 0
    %4764 = vmatpush1.bf16.msra.mxu0 0
    %4765 = vmatprep.subr.bf16.mxu0 0
    %4766 = vmatpush1.bf16.msra.mxu0 0
    %4767 = vmatprep.mubr.bf16.mxu0 0
    %4768 = vmatmul.mubr.bf16.gmra.mrb[0].mxu0 %v4687
    %v4769 = vpop.f32.mrb[0].mxu0
    %v4770 = vadd.f32 0.0, %v4769
    %v4771 = vpop.f32.mrb[0].mxu0
    %v4772 = vpop.f32.mrb[0].mxu0
    %v4773 = vadd.f32 0.0, %v4772
    %v4774 = vpop.f32.mrb[0].mxu0
    %4775 = vmatprep.mubr.bf16.mxu0 0
    %4776 = vmatmul.mubr.bf16.gmra.mrb[0].mxu0 %v4688
    %v4777 = vpop.f32.mrb[0].mxu0
    %v4778 = vadd.f32 0.0, %v4777
    %v4779 = vpop.f32.mrb[0].mxu0
    %v4780 = vpop.f32.mrb[0].mxu0
    %v4781 = vadd.f32 0.0, %v4780
    %v4782 = vpop.f32.mrb[0].mxu0
    %4783 = vmatprep.mubr.bf16.mxu0 0
    %4784 = vmatmul.mubr.bf16.gmra.mrb[0].mxu0 %v4689
    %v4785 = vpop.f32.mrb[0].mxu0
    %v4786 = vadd.f32 0.0, %v4785
    %v4787 = vpop.f32.mrb[0].mxu0
    %v4788 = vpop.f32.mrb[0].mxu0
    %v4789 = vadd.f32 0.0, %v4788
    %v4790 = vpop.f32.mrb[0].mxu0
    %4791 = vmatprep.mubr.bf16.mxu0 0
    %4792 = vmatmul.mubr.bf16.gmra.mrb[0].mxu0 %v4690
    %v4793 = vpop.f32.mrb[0].mxu0
    %v4794 = vadd.f32 0.0, %v4793
    %v4795 = vpop.f32.mrb[0].mxu0
    %v4796 = vpop.f32.mrb[0].mxu0
    %v4797 = vadd.f32 0.0, %v4796
    %v4798 = vpop.f32.mrb[0].mxu0
    %4799 = vmatprep.mubr.bf16.mxu0 0
    %4800 = vmatmul.mubr.bf16.gmra.mrb[0].mxu0 %v4691
    %v4801 = vpop.f32.mrb[0].mxu0
    %v4802 = vadd.f32 0.0, %v4801
    %v4803 = vpop.f32.mrb[0].mxu0
    %v4804 = vpop.f32.mrb[0].mxu0
    %v4805 = vadd.f32 0.0, %v4804
    %v4806 = vpop.f32.mrb[0].mxu0
    %4807 = vmatprep.mubr.bf16.mxu0 0
    %4808 = vmatmul.mubr.bf16.gmra.mrb[0].mxu0 %v4692
    %v4809 = vpop.f32.mrb[0].mxu0
    %v4810 = vadd.f32 0.0, %v4809
    %v4811 = vpop.f32.mrb[0].mxu0
    %v4812 = vpop.f32.mrb[0].mxu0
    %v4813 = vadd.f32 0.0, %v4812
    %v4814 = vpop.f32.mrb[0].mxu0
    %4815 = vmatprep.mubr.bf16.mxu0 0
    %4816 = vmatmul.mubr.bf16.gmra.mrb[0].mxu0 %v4693
    %v4817 = vpop.f32.mrb[0].mxu0
    %v4818 = vadd.f32 0.0, %v4817
    %v4819 = vpop.f32.mrb[0].mxu0
    %v4820 = vpop.f32.mrb[0].mxu0
    %v4821 = vadd.f32 0.0, %v4820
    %v4822 = vpop.f32.mrb[0].mxu0
    %4823 = vmatprep.mubr.bf16.mxu0 0
    %4824 = vmatmul.mubr.bf16.gmra.mrb[0].mxu0 %v4694
    %v4825 = vpop.f32.mrb[0].mxu0
    %v4826 = vadd.f32 0.0, %v4825
    %v4827 = vpop.f32.mrb[0].mxu0
    %v4828 = vpop.f32.mrb[0].mxu0
    %v4829 = vadd.f32 0.0, %v4828
    %v4830 = vpop.f32.mrb[0].mxu0
    %4831 = vdwg.mxu0
    %4840 = vrot.lane.b32.xlu0 %v4069, 32
    %v4841 = vpop.permute.xlu0 %4840
    %4842 = vrot.lane.b32.xlu0 %v4070, 32
    %v4843 = vpop.permute.xlu0 %4842
    %4844 = vrot.lane.b32.xlu0 %v4071, 32
    %v4845 = vpop.permute.xlu0 %4844
    %4846 = vrot.lane.b32.xlu0 %v4072, 32
    %v4847 = vpop.permute.xlu0 %4846
    %4848 = vrot.lane.b32.xlu0 %v4073, 32
    %v4849 = vpop.permute.xlu0 %4848
    %4850 = vrot.lane.b32.xlu0 %v4074, 32
    %v4851 = vpop.permute.xlu0 %4850
    %4852 = vrot.lane.b32.xlu0 %v4075, 32
    %v4853 = vpop.permute.xlu0 %4852
    %4854 = vrot.lane.b32.xlu0 %v4076, 32
    %v4855 = vpop.permute.xlu0 %4854
    %4864 = vmatprep.subr.bf16.mxu0 0
    %4865 = vmatpush1.bf16.msra.mxu0 %v4841
    %4866 = vmatprep.subr.bf16.mxu0 0
    %4867 = vmatpush1.bf16.msra.mxu0 %v4843
    %4868 = vmatprep.subr.bf16.mxu0 0
    %4869 = vmatpush1.bf16.msra.mxu0 %v4845
    %4870 = vmatprep.subr.bf16.mxu0 0
    %4871 = vmatpush1.bf16.msra.mxu0 %v4847
    %4872 = vmatprep.subr.bf16.mxu0 0
    %4873 = vmatpush1.bf16.msra.mxu0 %v4849
    %4874 = vmatprep.subr.bf16.mxu0 0
    %4875 = vmatpush1.bf16.msra.mxu0 %v4851
    %4876 = vmatprep.subr.bf16.mxu0 0
    %4877 = vmatpush1.bf16.msra.mxu0 %v4853
    %4878 = vmatprep.subr.bf16.mxu0 0
    %4879 = vmatpush1.bf16.msra.mxu0 %v4855
    %4880 = vmatprep.subr.bf16.mxu0 0
    %4881 = vmatpush1.bf16.msra.mxu0 0
    %4882 = vmatprep.subr.bf16.mxu0 0
    %4883 = vmatpush1.bf16.msra.mxu0 0
    %4884 = vmatprep.subr.bf16.mxu0 0
    %4885 = vmatpush1.bf16.msra.mxu0 0
    %4886 = vmatprep.subr.bf16.mxu0 0
    %4887 = vmatpush1.bf16.msra.mxu0 0
    %4888 = vmatprep.subr.bf16.mxu0 0
    %4889 = vmatpush1.bf16.msra.mxu0 0
    %4890 = vmatprep.subr.bf16.mxu0 0
    %4891 = vmatpush1.bf16.msra.mxu0 0
    %4892 = vmatprep.subr.bf16.mxu0 0
    %4893 = vmatpush1.bf16.msra.mxu0 0
    %4894 = vmatprep.subr.bf16.mxu0 0
    %4895 = vmatpush1.bf16.msra.mxu0 0
    %4896 = vmatprep.mubr.bf16.mxu0 0
    %4897 = vmatmul.mubr.bf16.gmra.mrb[0].mxu0 %v4695
    %v4898 = vpop.f32.mrb[0].mxu0
    %v4899 = vadd.f32 0.0, %v4898
    %v4900 = vpop.f32.mrb[0].mxu0
    %v4901 = vpop.f32.mrb[0].mxu0
    %v4902 = vadd.f32 0.0, %v4901
    %v4903 = vpop.f32.mrb[0].mxu0
    %4904 = vmatprep.mubr.bf16.mxu0 0
    %4905 = vmatmul.mubr.bf16.gmra.mrb[0].mxu0 %v4696
    %v4906 = vpop.f32.mrb[0].mxu0
    %v4907 = vadd.f32 0.0, %v4906
    %v4908 = vpop.f32.mrb[0].mxu0
    %v4909 = vpop.f32.mrb[0].mxu0
    %v4910 = vadd.f32 0.0, %v4909
    %v4911 = vpop.f32.mrb[0].mxu0
    %4912 = vmatprep.mubr.bf16.mxu0 0
    %4913 = vmatmul.mubr.bf16.gmra.mrb[0].mxu0 %v4697
    %v4914 = vpop.f32.mrb[0].mxu0
    %v4915 = vadd.f32 0.0, %v4914
    %v4916 = vpop.f32.mrb[0].mxu0
    %v4917 = vpop.f32.mrb[0].mxu0
    %v4918 = vadd.f32 0.0, %v4917
    %v4919 = vpop.f32.mrb[0].mxu0
    %4920 = vmatprep.mubr.bf16.mxu0 0
    %4921 = vmatmul.mubr.bf16.gmra.mrb[0].mxu0 %v4698
    %v4922 = vpop.f32.mrb[0].mxu0
    %v4923 = vadd.f32 0.0, %v4922
    %v4924 = vpop.f32.mrb[0].mxu0
    %v4925 = vpop.f32.mrb[0].mxu0
    %v4926 = vadd.f32 0.0, %v4925
    %v4927 = vpop.f32.mrb[0].mxu0
    %4928 = vmatprep.mubr.bf16.mxu0 0
    %4929 = vmatmul.mubr.bf16.gmra.mrb[0].mxu0 %v4699
    %v4930 = vpop.f32.mrb[0].mxu0
    %v4931 = vadd.f32 0.0, %v4930
    %v4932 = vpop.f32.mrb[0].mxu0
    %v4933 = vpop.f32.mrb[0].mxu0
    %v4934 = vadd.f32 0.0, %v4933
    %v4935 = vpop.f32.mrb[0].mxu0
    %4936 = vmatprep.mubr.bf16.mxu0 0
    %4937 = vmatmul.mubr.bf16.gmra.mrb[0].mxu0 %v4700
    %v4938 = vpop.f32.mrb[0].mxu0
    %v4939 = vadd.f32 0.0, %v4938
    %v4940 = vpop.f32.mrb[0].mxu0
    %v4941 = vpop.f32.mrb[0].mxu0
    %v4942 = vadd.f32 0.0, %v4941
    %v4943 = vpop.f32.mrb[0].mxu0
    %4944 = vmatprep.mubr.bf16.mxu0 0
    %4945 = vmatmul.mubr.bf16.gmra.mrb[0].mxu0 %v4701
    %v4946 = vpop.f32.mrb[0].mxu0
    %v4947 = vadd.f32 0.0, %v4946
    %v4948 = vpop.f32.mrb[0].mxu0
    %v4949 = vpop.f32.mrb[0].mxu0
    %v4950 = vadd.f32 0.0, %v4949
    %v4951 = vpop.f32.mrb[0].mxu0
    %4952 = vmatprep.mubr.bf16.mxu0 0
    %4953 = vmatmul.mubr.bf16.gmra.mrb[0].mxu0 %v4702
    %v4954 = vpop.f32.mrb[0].mxu0
    %v4955 = vadd.f32 0.0, %v4954
    %v4956 = vpop.f32.mrb[0].mxu0
    %v4957 = vpop.f32.mrb[0].mxu0
    %v4958 = vadd.f32 0.0, %v4957
    %v4959 = vpop.f32.mrb[0].mxu0
    %4960 = vdwg.mxu0
    %v4961 = vrcp.pop %v4624
    %v4962 = vrcp.pop %v4626
    %v4963 = vrcp.pop %v4628
    %v4964 = vrcp.pop %v4630
    %v4965 = vrcp.pop %v4632
    %v4966 = vrcp.pop %v4634
    %v4967 = vrcp.pop %v4636
    %v4968 = vrcp.pop %v4638
    %v4969 = vrcp.pop %v4640
    %v4970 = vrcp.pop %v4642
    %v4971 = vrcp.pop %v4644
    %v4972 = vrcp.pop %v4646
    %v4973 = vrcp.pop %v4648
    %v4974 = vrcp.pop %v4650
    %v4975 = vrcp.pop %v4652
    %v4976 = vrcp.pop %v4654
    %v4977 = vrcp.pop %v4656
    %v4978 = vrcp.pop %v4658
    %v4979 = vrcp.pop %v4660
    %v4980 = vrcp.pop %v4662
    %v4981 = vrcp.pop %v4664
    %v4982 = vrcp.pop %v4666
    %v4983 = vrcp.pop %v4668
    %v4984 = vrcp.pop %v4670
    %v4985 = vrcp.pop %v4672
    %v4986 = vrcp.pop %v4674
    %v4987 = vrcp.pop %v4676
    %v4988 = vrcp.pop %v4678
    %v4989 = vrcp.pop %v4680
    %v4990 = vrcp.pop %v4682
    %v4991 = vrcp.pop %v4684
    %v4992 = vrcp.pop %v4686
    %v4993 = vmul.f32 %v4770, %v4961
    %v4994 = vmul.f32 %v4773, %v4962
    %v4995 = vmul.f32 %v4778, %v4963
    %v4996 = vmul.f32 %v4781, %v4964
    %v4997 = vmul.f32 %v4786, %v4965
    %v4998 = vmul.f32 %v4789, %v4966
    %v4999 = vmul.f32 %v4794, %v4967
    %v5000 = vmul.f32 %v4797, %v4968
    %v5001 = vmul.f32 %v4802, %v4969
    %v5002 = vmul.f32 %v4805, %v4970
    %v5003 = vmul.f32 %v4810, %v4971
    %v5004 = vmul.f32 %v4813, %v4972
    %v5005 = vmul.f32 %v4818, %v4973
    %v5006 = vmul.f32 %v4821, %v4974
    %v5007 = vmul.f32 %v4826, %v4975
    %v5008 = vmul.f32 %v4829, %v4976
    %v5009 = vmul.f32 %v4899, %v4977
    %v5010 = vmul.f32 %v4902, %v4978
    %v5011 = vmul.f32 %v4907, %v4979
    %v5012 = vmul.f32 %v4910, %v4980
    %v5013 = vmul.f32 %v4915, %v4981
    %v5014 = vmul.f32 %v4918, %v4982
    %v5015 = vmul.f32 %v4923, %v4983
    %v5016 = vmul.f32 %v4926, %v4984
    %v5017 = vmul.f32 %v4931, %v4985
    %v5018 = vmul.f32 %v4934, %v4986
    %v5019 = vmul.f32 %v4939, %v4987
    %v5020 = vmul.f32 %v4942, %v4988
    %v5021 = vmul.f32 %v4947, %v4989
    %v5022 = vmul.f32 %v4950, %v4990
    %v5023 = vmul.f32 %v4955, %v4991
    %v5024 = vmul.f32 %v4958, %v4992
    %v5025 = vpack.c.bf16 %v4994, %v4993
    %v5026 = vpack.c.bf16 %v4996, %v4995
    %v5027 = vpack.c.bf16 %v4998, %v4997
    %v5028 = vpack.c.bf16 %v5000, %v4999
    %v5029 = vpack.c.bf16 %v5002, %v5001
    %v5030 = vpack.c.bf16 %v5004, %v5003
    %v5031 = vpack.c.bf16 %v5006, %v5005
    %v5032 = vpack.c.bf16 %v5008, %v5007
    %v5033 = vpack.c.bf16 %v5010, %v5009
    %v5034 = vpack.c.bf16 %v5012, %v5011
    %v5035 = vpack.c.bf16 %v5014, %v5013
    %v5036 = vpack.c.bf16 %v5016, %v5015
    %v5037 = vpack.c.bf16 %v5018, %v5017
    %v5038 = vpack.c.bf16 %v5020, %v5019
    %v5039 = vpack.c.bf16 %v5022, %v5021
    %v5040 = vpack.c.bf16 %v5024, %v5023
    %5057 = vrot.lane.b32.xlu0 %v5025, 96
    %v5058 = vpop.permute.xlu0 %5057
    %5059 = vrot.lane.b32.xlu0 %v5026, 96
    %v5060 = vpop.permute.xlu0 %5059
    %5061 = vrot.lane.b32.xlu0 %v5027, 96
    %v5062 = vpop.permute.xlu0 %5061
    %5063 = vrot.lane.b32.xlu0 %v5028, 96
    %v5064 = vpop.permute.xlu0 %5063
    %5065 = vrot.lane.b32.xlu0 %v5029, 96
    %v5066 = vpop.permute.xlu0 %5065
    %5067 = vrot.lane.b32.xlu0 %v5030, 96
    %v5068 = vpop.permute.xlu0 %5067
    %5069 = vrot.lane.b32.xlu0 %v5031, 96
    %v5070 = vpop.permute.xlu0 %5069
    %5071 = vrot.lane.b32.xlu0 %v5032, 96
    %v5072 = vpop.permute.xlu0 %5071
    %5073 = vrot.lane.b32.xlu0 %v5033, 96
    %v5074 = vpop.permute.xlu0 %5073
    %5075 = vrot.lane.b32.xlu0 %v5034, 96
    %v5076 = vpop.permute.xlu0 %5075
    %5077 = vrot.lane.b32.xlu0 %v5035, 96
    %v5078 = vpop.permute.xlu0 %5077
    %5079 = vrot.lane.b32.xlu0 %v5036, 96
    %v5080 = vpop.permute.xlu0 %5079
    %5081 = vrot.lane.b32.xlu0 %v5037, 96
    %v5082 = vpop.permute.xlu0 %5081
    %5083 = vrot.lane.b32.xlu0 %v5038, 96
    %v5084 = vpop.permute.xlu0 %5083
    %5085 = vrot.lane.b32.xlu0 %v5039, 96
    %v5086 = vpop.permute.xlu0 %5085
    %5087 = vrot.lane.b32.xlu0 %v5040, 96
    %v5088 = vpop.permute.xlu0 %5087
    %vm5105 = vcmask 1048320
    %5106 = vst.msk [vmem:[#allocation5] sm:$0xff] %vm5105, %v5058
    %5107 = vst.msk [vmem:[#allocation5 + $0x8] sm:$0xff] %vm5105, %v5060
    %5108 = vst.msk [vmem:[#allocation5 + $0x10] sm:$0xff] %vm5105, %v5062
    %5109 = vst.msk [vmem:[#allocation5 + $0x18] sm:$0xff] %vm5105, %v5064
    %5110 = vst.msk [vmem:[#allocation5 + $0x20] sm:$0xff] %vm5105, %v5066
    %5111 = vst.msk [vmem:[#allocation5 + $0x28] sm:$0xff] %vm5105, %v5068
    %5112 = vst.msk [vmem:[#allocation5 + $0x30] sm:$0xff] %vm5105, %v5070
    %5113 = vst.msk [vmem:[#allocation5 + $0x38] sm:$0xff] %vm5105, %v5072
    %5114 = vst.msk [vmem:[#allocation5 + $0x40] sm:$0xff] %vm5105, %v5074
    %5115 = vst.msk [vmem:[#allocation5 + $0x48] sm:$0xff] %vm5105, %v5076
    %5116 = vst.msk [vmem:[#allocation5 + $0x50] sm:$0xff] %vm5105, %v5078
    %5117 = vst.msk [vmem:[#allocation5 + $0x58] sm:$0xff] %vm5105, %v5080
    %5118 = vst.msk [vmem:[#allocation5 + $0x60] sm:$0xff] %vm5105, %v5082
    %5119 = vst.msk [vmem:[#allocation5 + $0x68] sm:$0xff] %vm5105, %v5084
    %5120 = vst.msk [vmem:[#allocation5 + $0x70] sm:$0xff] %vm5105, %v5086
    %5121 = vst.msk [vmem:[#allocation5 + $0x78] sm:$0xff] %vm5105, %v5088
    %v5122 = vld [vmem:[#allocation5] sm:$0xff]
    %v5123 = vld [vmem:[#allocation5 + $0x8] sm:$0xff]
    %v5124 = vld [vmem:[#allocation5 + $0x10] sm:$0xff]
    %v5125 = vld [vmem:[#allocation5 + $0x18] sm:$0xff]
    %v5126 = vld [vmem:[#allocation5 + $0x20] sm:$0xff]
    %v5127 = vld [vmem:[#allocation5 + $0x28] sm:$0xff]
    %v5128 = vld [vmem:[#allocation5 + $0x30] sm:$0xff]
    %v5129 = vld [vmem:[#allocation5 + $0x38] sm:$0xff]
    %v5130 = vld [vmem:[#allocation5 + $0x40] sm:$0xff]
    %v5131 = vld [vmem:[#allocation5 + $0x48] sm:$0xff]
    %v5132 = vld [vmem:[#allocation5 + $0x50] sm:$0xff]
    %v5133 = vld [vmem:[#allocation5 + $0x58] sm:$0xff]
    %v5134 = vld [vmem:[#allocation5 + $0x60] sm:$0xff]
    %v5135 = vld [vmem:[#allocation5 + $0x68] sm:$0xff]
    %v5136 = vld [vmem:[#allocation5 + $0x70] sm:$0xff]
    %v5137 = vld [vmem:[#allocation5 + $0x78] sm:$0xff]
    %v5138 = vld [vmem:[#allocation14] sm:$0xf]
    %v5139 = vld [vmem:[#allocation14 + $0x4] sm:$0xf]
    %v5140 = vld [vmem:[#allocation14 + $0x8] sm:$0xf]
    %v5141 = vld [vmem:[#allocation14 + $0xc] sm:$0xf]
    %v5142 = vld [vmem:[#allocation14 + $0x10] sm:$0xf]
    %v5143 = vld [vmem:[#allocation14 + $0x14] sm:$0xf]
    %v5144 = vld [vmem:[#allocation14 + $0x18] sm:$0xf]
    %v5145 = vld [vmem:[#allocation14 + $0x1c] sm:$0xf]
    %v5146 = vld [vmem:[#allocation14 + $0x20] sm:$0xf]
    %v5147 = vld [vmem:[#allocation14 + $0x24] sm:$0xf]
    %v5148 = vld [vmem:[#allocation14 + $0x28] sm:$0xf]
    %v5149 = vld [vmem:[#allocation14 + $0x2c] sm:$0xf]
    %v5150 = vld [vmem:[#allocation14 + $0x30] sm:$0xf]
    %v5151 = vld [vmem:[#allocation14 + $0x34] sm:$0xf]
    %v5152 = vld [vmem:[#allocation14 + $0x38] sm:$0xf]
    %v5153 = vld [vmem:[#allocation14 + $0x3c] sm:$0xf]
    %v5154 = vld [vmem:[%s8] sm:$0x1]
    %v5156 = vlaneseq
    %v5157 = vshrl.u32 %v5156, 7
    %v5158 = vsub.s32 0, %v5157
    %v5159 = vrot.slane %v5154, %v5158
    %v5177 = vunpack.c.l.b16 %v5138
    %v5178 = vunpack.c.l.b16 %v5139
    %v5179 = vunpack.c.l.b16 %v5140
    %v5180 = vunpack.c.l.b16 %v5141
    %v5181 = vunpack.c.l.b16 %v5142
    %v5182 = vunpack.c.l.b16 %v5143
    %v5183 = vunpack.c.l.b16 %v5144
    %v5184 = vunpack.c.l.b16 %v5145
    %v5185 = vunpack.c.l.b16 %v5146
    %v5186 = vunpack.c.l.b16 %v5147
    %v5187 = vunpack.c.l.b16 %v5148
    %v5188 = vunpack.c.l.b16 %v5149
    %v5189 = vunpack.c.l.b16 %v5150
    %v5190 = vunpack.c.l.b16 %v5151
    %v5191 = vunpack.c.l.b16 %v5152
    %v5192 = vunpack.c.l.b16 %v5153
    %v5193 = vpack.c.b16 %v5178, %v5177
    %v5194 = vpack.c.b16 %v5180, %v5179
    %v5195 = vpack.c.b16 %v5182, %v5181
    %v5196 = vpack.c.b16 %v5184, %v5183
    %v5197 = vpack.c.b16 %v5186, %v5185
    %v5198 = vpack.c.b16 %v5188, %v5187
    %v5199 = vpack.c.b16 %v5190, %v5189
    %v5200 = vpack.c.b16 %v5192, %v5191
    %5209 = vmatprep.subr.bf16.mxu0 0
    %5210 = vmatpush1.bf16.msra.mxu0 %v5193
    %5211 = vmatprep.subr.bf16.mxu0 0
    %5212 = vmatpush1.bf16.msra.mxu0 %v5194
    %5213 = vmatprep.subr.bf16.mxu0 0
    %5214 = vmatpush1.bf16.msra.mxu0 %v5195
    %5215 = vmatprep.subr.bf16.mxu0 0
    %5216 = vmatpush1.bf16.msra.mxu0 %v5196
    %5217 = vmatprep.subr.bf16.mxu0 0
    %5218 = vmatpush1.bf16.msra.mxu0 %v5197
    %5219 = vmatprep.subr.bf16.mxu0 0
    %5220 = vmatpush1.bf16.msra.mxu0 %v5198
    %5221 = vmatprep.subr.bf16.mxu0 0
    %5222 = vmatpush1.bf16.msra.mxu0 %v5199
    %5223 = vmatprep.subr.bf16.mxu0 0
    %5224 = vmatpush1.bf16.msra.mxu0 %v5200
    %5225 = vmatprep.subr.bf16.mxu0 0
    %5226 = vmatpush1.bf16.msra.mxu0 0
    %5227 = vmatprep.subr.bf16.mxu0 0
    %5228 = vmatpush1.bf16.msra.mxu0 0
    %5229 = vmatprep.subr.bf16.mxu0 0
    %5230 = vmatpush1.bf16.msra.mxu0 0
    %5231 = vmatprep.subr.bf16.mxu0 0
    %5232 = vmatpush1.bf16.msra.mxu0 0
    %5233 = vmatprep.subr.bf16.mxu0 0
    %5234 = vmatpush1.bf16.msra.mxu0 0
    %5235 = vmatprep.subr.bf16.mxu0 0
    %5236 = vmatpush1.bf16.msra.mxu0 0
    %5237 = vmatprep.subr.bf16.mxu0 0
    %5238 = vmatpush1.bf16.msra.mxu0 0
    %5239 = vmatprep.subr.bf16.mxu0 0
    %5240 = vmatpush1.bf16.msra.mxu0 0
    %5241 = vmatprep.mubr.bf16.mxu0 0
    %5242 = vmatmul.mubr.bf16.gmra.mrb[0].mxu0 %v5122
    %v5243 = vpop.f32.mrb[0].mxu0
    %v5244 = vadd.f32 %v5159, %v5243
    %v5245 = vpop.f32.mrb[0].mxu0
    %v5246 = vpop.f32.mrb[0].mxu0
    %v5247 = vadd.f32 %v5159, %v5246
    %v5248 = vpop.f32.mrb[0].mxu0
    %5249 = vmatprep.mubr.bf16.mxu0 0
    %5250 = vmatmul.mubr.bf16.gmra.mrb[0].mxu0 %v5123
    %v5251 = vpop.f32.mrb[0].mxu0
    %v5252 = vadd.f32 %v5159, %v5251
    %v5253 = vpop.f32.mrb[0].mxu0
    %v5254 = vpop.f32.mrb[0].mxu0
    %v5255 = vadd.f32 %v5159, %v5254
    %v5256 = vpop.f32.mrb[0].mxu0
    %5257 = vmatprep.mubr.bf16.mxu0 0
    %5258 = vmatmul.mubr.bf16.gmra.mrb[0].mxu0 %v5124
    %v5259 = vpop.f32.mrb[0].mxu0
    %v5260 = vadd.f32 %v5159, %v5259
    %v5261 = vpop.f32.mrb[0].mxu0
    %v5262 = vpop.f32.mrb[0].mxu0
    %v5263 = vadd.f32 %v5159, %v5262
    %v5264 = vpop.f32.mrb[0].mxu0
    %5265 = vmatprep.mubr.bf16.mxu0 0
    %5266 = vmatmul.mubr.bf16.gmra.mrb[0].mxu0 %v5125
    %v5267 = vpop.f32.mrb[0].mxu0
    %v5268 = vadd.f32 %v5159, %v5267
    %v5269 = vpop.f32.mrb[0].mxu0
    %v5270 = vpop.f32.mrb[0].mxu0
    %v5271 = vadd.f32 %v5159, %v5270
    %v5272 = vpop.f32.mrb[0].mxu0
    %5273 = vmatprep.mubr.bf16.mxu0 0
    %5274 = vmatmul.mubr.bf16.gmra.mrb[0].mxu0 %v5126
    %v5275 = vpop.f32.mrb[0].mxu0
    %v5276 = vadd.f32 %v5159, %v5275
    %v5277 = vpop.f32.mrb[0].mxu0
    %v5278 = vpop.f32.mrb[0].mxu0
    %v5279 = vadd.f32 %v5159, %v5278
    %v5280 = vpop.f32.mrb[0].mxu0
    %5281 = vmatprep.mubr.bf16.mxu0 0
    %5282 = vmatmul.mubr.bf16.gmra.mrb[0].mxu0 %v5127
    %v5283 = vpop.f32.mrb[0].mxu0
    %v5284 = vadd.f32 %v5159, %v5283
    %v5285 = vpop.f32.mrb[0].mxu0
    %v5286 = vpop.f32.mrb[0].mxu0
    %v5287 = vadd.f32 %v5159, %v5286
    %v5288 = vpop.f32.mrb[0].mxu0
    %5289 = vmatprep.mubr.bf16.mxu0 0
    %5290 = vmatmul.mubr.bf16.gmra.mrb[0].mxu0 %v5128
    %v5291 = vpop.f32.mrb[0].mxu0
    %v5292 = vadd.f32 %v5159, %v5291
    %v5293 = vpop.f32.mrb[0].mxu0
    %v5294 = vpop.f32.mrb[0].mxu0
    %v5295 = vadd.f32 %v5159, %v5294
    %v5296 = vpop.f32.mrb[0].mxu0
    %5297 = vmatprep.mubr.bf16.mxu0 0
    %5298 = vmatmul.mubr.bf16.gmra.mrb[0].mxu0 %v5129
    %v5299 = vpop.f32.mrb[0].mxu0
    %v5300 = vadd.f32 %v5159, %v5299
    %v5301 = vpop.f32.mrb[0].mxu0
    %v5302 = vpop.f32.mrb[0].mxu0
    %v5303 = vadd.f32 %v5159, %v5302
    %v5304 = vpop.f32.mrb[0].mxu0
    %5305 = vmatprep.mubr.bf16.mxu0 0
    %5306 = vmatmul.mubr.bf16.gmra.mrb[0].mxu0 %v5130
    %v5307 = vpop.f32.mrb[0].mxu0
    %v5308 = vadd.f32 %v5159, %v5307
    %v5309 = vpop.f32.mrb[0].mxu0
    %v5310 = vpop.f32.mrb[0].mxu0
    %v5311 = vadd.f32 %v5159, %v5310
    %v5312 = vpop.f32.mrb[0].mxu0
    %5313 = vmatprep.mubr.bf16.mxu0 0
    %5314 = vmatmul.mubr.bf16.gmra.mrb[0].mxu0 %v5131
    %v5315 = vpop.f32.mrb[0].mxu0
    %v5316 = vadd.f32 %v5159, %v5315
    %v5317 = vpop.f32.mrb[0].mxu0
    %v5318 = vpop.f32.mrb[0].mxu0
    %v5319 = vadd.f32 %v5159, %v5318
    %v5320 = vpop.f32.mrb[0].mxu0
    %5321 = vmatprep.mubr.bf16.mxu0 0
    %5322 = vmatmul.mubr.bf16.gmra.mrb[0].mxu0 %v5132
    %v5323 = vpop.f32.mrb[0].mxu0
    %v5324 = vadd.f32 %v5159, %v5323
    %v5325 = vpop.f32.mrb[0].mxu0
    %v5326 = vpop.f32.mrb[0].mxu0
    %v5327 = vadd.f32 %v5159, %v5326
    %v5328 = vpop.f32.mrb[0].mxu0
    %5329 = vmatprep.mubr.bf16.mxu0 0
    %5330 = vmatmul.mubr.bf16.gmra.mrb[0].mxu0 %v5133
    %v5331 = vpop.f32.mrb[0].mxu0
    %v5332 = vadd.f32 %v5159, %v5331
    %v5333 = vpop.f32.mrb[0].mxu0
    %v5334 = vpop.f32.mrb[0].mxu0
    %v5335 = vadd.f32 %v5159, %v5334
    %v5336 = vpop.f32.mrb[0].mxu0
    %5337 = vmatprep.mubr.bf16.mxu0 0
    %5338 = vmatmul.mubr.bf16.gmra.mrb[0].mxu0 %v5134
    %v5339 = vpop.f32.mrb[0].mxu0
    %v5340 = vadd.f32 %v5159, %v5339
    %v5341 = vpop.f32.mrb[0].mxu0
    %v5342 = vpop.f32.mrb[0].mxu0
    %v5343 = vadd.f32 %v5159, %v5342
    %v5344 = vpop.f32.mrb[0].mxu0
    %5345 = vmatprep.mubr.bf16.mxu0 0
    %5346 = vmatmul.mubr.bf16.gmra.mrb[0].mxu0 %v5135
    %v5347 = vpop.f32.mrb[0].mxu0
    %v5348 = vadd.f32 %v5159, %v5347
    %v5349 = vpop.f32.mrb[0].mxu0
    %v5350 = vpop.f32.mrb[0].mxu0
    %v5351 = vadd.f32 %v5159, %v5350
    %v5352 = vpop.f32.mrb[0].mxu0
    %5353 = vmatprep.mubr.bf16.mxu0 0
    %5354 = vmatmul.mubr.bf16.gmra.mrb[0].mxu0 %v5136
    %v5355 = vpop.f32.mrb[0].mxu0
    %v5356 = vadd.f32 %v5159, %v5355
    %v5357 = vpop.f32.mrb[0].mxu0
    %v5358 = vpop.f32.mrb[0].mxu0
    %v5359 = vadd.f32 %v5159, %v5358
    %v5360 = vpop.f32.mrb[0].mxu0
    %5361 = vmatprep.mubr.bf16.mxu0 0
    %5362 = vmatmul.mubr.bf16.gmra.mrb[0].mxu0 %v5137
    %v5363 = vpop.f32.mrb[0].mxu0
    %v5364 = vadd.f32 %v5159, %v5363
    %v5365 = vpop.f32.mrb[0].mxu0
    %v5366 = vpop.f32.mrb[0].mxu0
    %v5367 = vadd.f32 %v5159, %v5366
    %v5368 = vpop.f32.mrb[0].mxu0
    %5369 = vdwg.mxu0
    %5370 = vst [vmem:[#allocation15] sm:$0xff] %v5244
    %5371 = vst [vmem:[#allocation15 + $0x8] sm:$0xff] %v5247
    %5372 = vst [vmem:[#allocation15 + $0x10] sm:$0xff] %v5252
    %5373 = vst [vmem:[#allocation15 + $0x18] sm:$0xff] %v5255
    %5374 = vst [vmem:[#allocation15 + $0x20] sm:$0xff] %v5260
    %5375 = vst [vmem:[#allocation15 + $0x28] sm:$0xff] %v5263
    %5376 = vst [vmem:[#allocation15 + $0x30] sm:$0xff] %v5268
    %5377 = vst [vmem:[#allocation15 + $0x38] sm:$0xff] %v5271
    %5378 = vst [vmem:[#allocation15 + $0x40] sm:$0xff] %v5276
    %5379 = vst [vmem:[#allocation15 + $0x48] sm:$0xff] %v5279
    %5380 = vst [vmem:[#allocation15 + $0x50] sm:$0xff] %v5284
    %5381 = vst [vmem:[#allocation15 + $0x58] sm:$0xff] %v5287
    %5382 = vst [vmem:[#allocation15 + $0x60] sm:$0xff] %v5292
    %5383 = vst [vmem:[#allocation15 + $0x68] sm:$0xff] %v5295
    %5384 = vst [vmem:[#allocation15 + $0x70] sm:$0xff] %v5300
    %5385 = vst [vmem:[#allocation15 + $0x78] sm:$0xff] %v5303
    %5386 = vst [vmem:[#allocation15 + $0x80] sm:$0xff] %v5308
    %5387 = vst [vmem:[#allocation15 + $0x88] sm:$0xff] %v5311
    %5388 = vst [vmem:[#allocation15 + $0x90] sm:$0xff] %v5316
    %5389 = vst [vmem:[#allocation15 + $0x98] sm:$0xff] %v5319
    %5390 = vst [vmem:[#allocation15 + $0xa0] sm:$0xff] %v5324
    %5391 = vst [vmem:[#allocation15 + $0xa8] sm:$0xff] %v5327
    %5392 = vst [vmem:[#allocation15 + $0xb0] sm:$0xff] %v5332
    %5393 = vst [vmem:[#allocation15 + $0xb8] sm:$0xff] %v5335
    %5394 = vst [vmem:[#allocation15 + $0xc0] sm:$0xff] %v5340
    %5395 = vst [vmem:[#allocation15 + $0xc8] sm:$0xff] %v5343
    %5396 = vst [vmem:[#allocation15 + $0xd0] sm:$0xff] %v5348
    %5397 = vst [vmem:[#allocation15 + $0xd8] sm:$0xff] %v5351
    %5398 = vst [vmem:[#allocation15 + $0xe0] sm:$0xff] %v5356
    %5399 = vst [vmem:[#allocation15 + $0xe8] sm:$0xff] %v5359
    %5400 = vst [vmem:[#allocation15 + $0xf0] sm:$0xff] %v5364
    %5401 = vst [vmem:[#allocation15 + $0xf8] sm:$0xff] %v5367
    // Predicated region
    $region58: #{tpu_custom_call.1} parent=1 // pred_check
      _
    $region59: #{tpu_custom_call.1} parent=1 // pred_check_branch
      %5403 = sbr.rel (0) target = $region61
    $region60: #{tpu_custom_call.1} parent=1 // pred_region
      %s5405 = ssub.s32 4096, 4096
      %5406 = vsyncadd [#allocation8], %s5405
      %s5407 = sshll.u32 [#allocation15], 4
      %s5408 = int_to_ptr.vmem [resolvable:$true] %s5407
      %5413 = dma.vmem_to_hbm [thread:$0]  %s5408, 4096, %s9, [#allocation8], 128, 128, 8
    $region61: #{tpu_custom_call.1} parent=1 // pred_fallthru
      _
    // Predicated region
    $region62: #{tpu_custom_call.1} parent=1 // pred_check
      _
    $region63: #{tpu_custom_call.1} parent=1 // pred_check_branch
      %5415 = sbr.rel (0) target = $region65
    $region64: #{tpu_custom_call.1} parent=1 // pred_region
      %5416 = dma.done [#allocation8], 4096
    $region65: #{tpu_custom_call.1} parent=1 // pred_fallthru
      _
    %5417 = vsyncpa [#allocation7], 1
    %5418 = vsyncpa [#allocation10], 1
    %5419 = vsyncpa [#allocation13], 1
    %5420 = vsyncpa [#allocation8], 1

</llo_original>
